<compile_context>
chip_gen: v7x
topology: tpu7x:2x2x1
jax: 0.10.0
libtpu: 0.0.40
codegen_flags: <defaults>
</compile_context>

<pallas_src>
import functools
import math

import jax
import jax.numpy as jnp
import numpy as np
from jax.experimental import pallas as pl
from jax.experimental.pallas import tpu as pltpu

SQRT2 = math.sqrt(2.0)
LRELU_SLOPE = 0.2
F32_EPS = float(jnp.finfo(jnp.float32).eps)


# ----------------------------------------------------------------------------
# Fused Pallas kernel: attention + fuse-FC + MLP for one chunk of windows
# ----------------------------------------------------------------------------
def fused_swin_block_kernel(x_ref, mask_ref,
                            wqk_ref, bqk_ref, wv_ref, bv_ref, wp_ref, bp_ref,
                            wf1_ref, wf2_ref, bf_ref,
                            w1_ref, b1_ref, w2_ref, b2_ref,
                            o_ref, *, num_heads, window_area, compute_dtype):
    f32 = jnp.float32
    cd = compute_dtype

    xw = x_ref[0].astype(f32)                    # (R, C), R = WPB * N, window-ordered rows
    R, C = xw.shape
    N = window_area
    Wn = R // N                                  # windows handled in this grid step
    nh = num_heads
    hd = C // nh

    # --- L2 row-normalize for the q/k path (rsqrt -> EUP slot) --------------
    ssq = jnp.sum(xw * xw, axis=-1, keepdims=True)
    norm_x = xw * jax.lax.rsqrt(jnp.maximum(ssq, F32_EPS * F32_EPS))  # == x / max(||x||, eps)

    # --- projections: fused q|k (scale pre-folded into wq/bq) and v ---------
    xw_cd = xw.astype(cd)
    qk = jnp.dot(norm_x.astype(cd), wqk_ref[...],
                 preferred_element_type=f32) + bqk_ref[...]           # (R, 2C)
    v = jnp.dot(xw_cd, wv_ref[...],
                preferred_element_type=f32) + bv_ref[...]             # (R, C)

    # --- head split: one reshape + one transpose (no per-head slice loops) --
    qk3 = qk.reshape(Wn, N, 2 * nh, hd).transpose(2, 0, 1, 3)         # (2nh, Wn, N, hd)
    qk3 = qk3.reshape(2 * nh * Wn, N, hd)
    q3 = qk3[:nh * Wn]                                                # (nh*Wn, N, hd)
    k3 = qk3[nh * Wn:]                                                # (nh*Wn, N, hd)
    v3 = v.reshape(Wn, N, nh, hd).transpose(2, 0, 1, 3).reshape(nh * Wn, N, hd)

    # Attention math stays f32 (tiny matmuls; v5e has no bf16 VPU/EUP).
    s = jnp.einsum("bqd,bkd->bqk", q3, k3,
                   preferred_element_type=f32)                        # (nh*Wn, N, N)
    # shifted-window mask added via broadcast over heads (leading reshape is free)
    s = (s.reshape(nh, Wn, N, N) + mask_ref[...]).reshape(nh * Wn, N, N)

    # softmax(dim=-1), numerically stable; divide goes to the EUP slot.
    s = s - jnp.max(s, axis=-1, keepdims=True)
    p = jnp.exp(s)
    p = p * pl.reciprocal(jnp.sum(p, axis=-1, keepdims=True), approx=True)

    o3 = jnp.einsum("bqk,bkd->bqd", p, v3,
                    preferred_element_type=f32)                       # (nh*Wn, N, hd)
    # inverse of the head split: one transpose + reshape back to (R, C)
    y = o3.reshape(nh, Wn, N, hd).transpose(1, 2, 0, 3).reshape(R, C)

    # output projection
    y = jnp.dot(y.astype(cd), wp_ref[...],
                preferred_element_type=f32) + bp_ref[...]             # (R, C)

    # --- fuse: FC(2C -> C, lrelu) on [shortcut | attn], split into 2 matmuls -
    h0 = (jnp.dot(xw_cd, wf1_ref[...], preferred_element_type=f32)
          + jnp.dot(y.astype(cd), wf2_ref[...], preferred_element_type=f32)
          + bf_ref[...])
    h0 = jnp.where(h0 >= 0, h0, LRELU_SLOPE * h0) * SQRT2

    # --- MLP: FC(C -> hidden, lrelu), FC(hidden -> C, linear) ---------------
    h1 = jnp.dot(h0.astype(cd), w1_ref[...],
                 preferred_element_type=f32) + b1_ref[...]
    h1 = jnp.where(h1 >= 0, h1, LRELU_SLOPE * h1) * SQRT2
    out = jnp.dot(h1.astype(cd), w2_ref[...],
                  preferred_element_type=f32) + b2_ref[...]

    o_ref[0] = out.astype(o_ref.dtype)


# ----------------------------------------------------------------------------
# Plain-JAX glue (reshapes / shifts / mask precompute)
# ----------------------------------------------------------------------------
def window_partition(x, ws):
    B, H, W, C = x.shape
    x = x.reshape(B, H // ws, ws, W // ws, ws, C)
    return x.transpose(0, 1, 3, 2, 4, 5).reshape(-1, ws, ws, C)


def window_reverse(windows, ws, H, W):
    B = windows.shape[0] // (H * W // ws // ws)
    x = windows.reshape(B, H // ws, W // ws, ws, ws, -1)
    return x.transpose(0, 1, 3, 2, 4, 5).reshape(B, H, W, -1)


def calculate_mask(H, W, window_size, shift_size):
    """Shifted-window attention mask, identical to the PyTorch calculate_mask."""
    img_mask = np.zeros((1, H, W, 1), np.float32)
    h_slices = (slice(0, -window_size),
                slice(-window_size, -shift_size),
                slice(-shift_size, None))
    cnt = 0
    for h in h_slices:
        for w in h_slices:
            img_mask[:, h, w, :] = cnt
            cnt += 1
    ws = window_size
    mw = img_mask.reshape(1, H // ws, ws, W // ws, ws, 1)
    mw = mw.transpose(0, 1, 3, 2, 4, 5).reshape(-1, ws * ws)          # (nW, N)
    diff = mw[:, None, :] - mw[:, :, None]                            # (nW, N, N)
    attn_mask = np.where(diff != 0, np.float32(-100.0), np.float32(0.0))
    return jnp.asarray(attn_mask)


# ----------------------------------------------------------------------------
# VMEM budgeting / window-chunk selection
# ----------------------------------------------------------------------------
def _step_vmem_bytes(wpb, N, C, hidden, num_heads):
    """Rough per-grid-step VMEM upper bound (double-buffered blocks + f32 temps)."""
    f32b = 4
    R = wpb * N
    io = 2 * 2 * R * C * f32b                                   # x + out, double-buffered
    mask = 2 * wpb * N * N * f32b
    weights = 2 * f32b * (2 * C * C + 3 * C * C + 2 * C * hidden
                          + 6 * C + hidden)                     # double-buffered worst case
    temps = f32b * (R * (4 * C + 2 * C + hidden)                # qk, v, y, h0, h1, out, ...
                    + 3 * num_heads * wpb * N * N               # s, p (+ slack)
                    + 3 * num_heads * R * (C // num_heads))     # q3/k3/v3/o3
    return io + mask + weights + temps


def _choose_windows_per_block(B, nW, N, C, hidden, num_heads, budget_bytes=20 << 20):
    divisors = [d for d in range(1, nW + 1) if nW % d == 0]
    wpb = 1
    for d in divisors:
        if _step_vmem_bytes(d, N, C, hidden, num_heads) <= budget_bytes:
            wpb = d
    # v7x megacore / pipeline overlap: prefer >= 2 grid steps per TensorCore.
    while wpb > 1 and B * (nW // wpb) < 4:
        wpb = max(d for d in divisors if d < wpb)
    return wpb


# ----------------------------------------------------------------------------
# Module wrapper
# ----------------------------------------------------------------------------
def make_fc_params(kw, kb, fin, fout):
    """FullyConnectedLayer params -> effective (fin, fout) weight + (1, fout) bias."""
    w = jax.random.normal(kw, (fout, fin), jnp.float32)       # torch.randn init
    b = jax.random.normal(kb, (fout,), jnp.float32) * 0.1
    w_eff = (w / math.sqrt(fin)).T                             # fold weight_gain, transpose
    return w_eff, b.reshape(1, fout)


def swin_transformer_block(x, params, *, B, H, W, C, num_heads, window_size,
                           shift_size, attn_mask, windows_per_block=None,
                           compute_dtype=jnp.bfloat16):
    L = H * W
    N = window_size * window_size
    assert H % window_size == 0 and W % window_size == 0, "H/W must tile into windows"
    assert C % num_heads == 0, "C must be divisible by num_heads"
    nW = (H // window_size) * (W // window_size)
    hidden = params["w1"].shape[1]
    if windows_per_block is None:
        windows_per_block = _choose_windows_per_block(B, nW, N, C, hidden, num_heads)
    WPB = windows_per_block
    assert nW % WPB == 0, "windows_per_block must divide the number of windows"
    assert (WPB * N) % 8 == 0 or WPB * N == L, "row block must be sublane-aligned"
    n_wblocks = nW // WPB
    cd = compute_dtype
    scale = (C // num_heads) ** (-0.5)

    # --- permute rows into window order (roll + partition): one XLA pass.
    # The fuse/MLP are position-wise, so the whole block is computed in this
    # row order and un-permuted once at the end.
    xr = x.reshape(B, H, W, C)
    if shift_size > 0:
        xr = jnp.roll(xr, shift=(-shift_size, -shift_size), axis=(1, 2))
    x_win = window_partition(xr, window_size).reshape(B, L, C)   # window-ordered rows

    # --- pack / pre-cast parameters (matmul weights in compute dtype; biases f32).
    # Attention scale folded into wq / bq (trace-time constant fold).
    wqk = jnp.concatenate([params["wq"] * scale, params["wk"]], axis=1).astype(cd)  # (C, 2C)
    bqk = jnp.concatenate([params["bq"] * scale, params["bk"]], axis=1)             # (1, 2C)
    wv, bv = params["wv"].astype(cd), params["bv"]
    wp, bp = params["wp"].astype(cd), params["bp"]
    wf1, wf2 = params["wf1"].astype(cd), params["wf2"].astype(cd)                   # (C, C) each
    bf = params["bf"]
    w1, b1 = params["w1"].astype(cd), params["b1"]
    w2, b2 = params["w2"].astype(cd), params["b2"]

    full = lambda shp: pl.BlockSpec(shp, lambda b, c, _n=len(shp): (0,) * _n)
    row_spec = pl.BlockSpec((1, WPB * N, C), lambda b, c: (b, c, 0))

    vmem_limit = int(min(max(2 * _step_vmem_bytes(WPB, N, C, hidden, num_heads),
                             32 * 1024 * 1024), 64 * 1024 * 1024))

    kernel = functools.partial(fused_swin_block_kernel, num_heads=num_heads,
                               window_area=N, compute_dtype=cd)
    out_win = pl.pallas_call(
        kernel,
        out_shape=jax.ShapeDtypeStruct((B, L, C), jnp.float32),
        grid=(B, n_wblocks),
        in_specs=[
            row_spec,                                              # x (window-ordered rows)
            pl.BlockSpec((WPB, N, N), lambda b, c: (c, 0, 0)),     # mask chunk (resident iff WPB == nW)
            full((C, 2 * C)), full((1, 2 * C)),                    # wqk, bqk
            full((C, C)), full((1, C)),                            # wv, bv
            full((C, C)), full((1, C)),                            # wp, bp
            full((C, C)), full((C, C)), full((1, C)),              # wf1, wf2, bf
            full((C, hidden)), full((1, hidden)),                  # w1, b1
            full((hidden, C)), full((1, C)),                       # w2, b2
        ],
        out_specs=row_spec,
        compiler_params=pltpu.CompilerParams(
            dimension_semantics=("parallel", "parallel"),
            vmem_limit_bytes=vmem_limit),
    )(x_win, attn_mask, wqk, bqk, wv, bv, wp, bp, wf1, wf2, bf, w1, b1, w2, b2)

    # --- un-permute rows back: window_reverse + roll (one XLA pass).
    ow = out_win.reshape(B * nW, window_size, window_size, C)
    o = window_reverse(ow, window_size, H, W)
    if shift_size > 0:
        o = jnp.roll(o, shift=(shift_size, shift_size), axis=(1, 2))
    return o.reshape(B, L, C)   # mask output is None (pixel mask not supplied)


# ----------------------------------------------------------------------------
# Pure-JAX reference (for correctness check)
# ----------------------------------------------------------------------------
def _fc(x, w, b, act):
    y = x @ w + b
    if act == "lrelu":
        y = jnp.where(y >= 0, y, LRELU_SLOPE * y) * SQRT2
    return y


def reference_block(x, p, *, B, H, W, C, num_heads, window_size, shift_size, attn_mask):
    L = H * W
    N = window_size * window_size
    nW = (H // window_size) * (W // window_size)
    B_ = B * nW
    hd = C // num_heads
    scale = hd ** (-0.5)

    shortcut = x
    xr = x.reshape(B, H, W, C)
    if shift_size > 0:
        xr = jnp.roll(xr, (-shift_size, -shift_size), (1, 2))
    xw = window_partition(xr, window_size).reshape(-1, N, C)

    nrm = jnp.sqrt(jnp.sum(xw * xw, -1, keepdims=True))
    nx = xw / jnp.maximum(nrm, F32_EPS)
    q = (_fc(nx, p["wq"], p["bq"], "linear")
         .reshape(B_, N, num_heads, hd).transpose(0, 2, 1, 3))
    k = (_fc(nx, p["wk"], p["bk"], "linear")
         .reshape(B_, N, num_heads, hd).transpose(0, 2, 1, 3))
    v = (_fc(xw, p["wv"], p["bv"], "linear")
         .reshape(B_, N, num_heads, hd).transpose(0, 2, 1, 3))
    attn = jnp.einsum("bhnd,bhmd->bhnm", q, k) * scale
    attn = attn + attn_mask[jnp.arange(B_) % nW][:, None, :, :]
    attn = jax.nn.softmax(attn, axis=-1)
    o = jnp.einsum("bhnm,bhmd->bhnd", attn, v).transpose(0, 2, 1, 3).reshape(B_, N, C)
    o = _fc(o, p["wp"], p["bp"], "linear")

    o = window_reverse(o.reshape(-1, window_size, window_size, C), window_size, H, W)
    if shift_size > 0:
        o = jnp.roll(o, (shift_size, shift_size), (1, 2))
    o = o.reshape(B, L, C)

    f = _fc(jnp.concatenate([shortcut, o], -1),
            jnp.concatenate([p["wf1"], p["wf2"]], 0), p["bf"], "lrelu")
    h1 = _fc(f, p["w1"], p["b1"], "lrelu")
    return _fc(h1, p["w2"], p["b2"], "linear")


# ----------------------------------------------------------------------------
if __name__ == "__main__":
    # Small config consistent with the module
    B, H, W = 2, 8, 8
    C = 32
    num_heads = 4
    window_size = 4
    shift_size = 2            # shifted-window branch (attn_mask path exercised)
    mlp_ratio = 4.0
    hidden = int(C * mlp_ratio)
    L = H * W

    key = jax.random.PRNGKey(0)
    ks = jax.random.split(key, 17)

    wq, bq = make_fc_params(ks[0], ks[1], C, C)
    wk, bk = make_fc_params(ks[2], ks[3], C, C)
    wv, bv = make_fc_params(ks[4], ks[5], C, C)
    wp, bp = make_fc_params(ks[6], ks[7], C, C)
    wf, bf = make_fc_params(ks[8], ks[9], 2 * C, C)       # (2C, C)
    w1, b1 = make_fc_params(ks[10], ks[11], C, hidden)
    w2, b2 = make_fc_params(ks[12], ks[13], hidden, C)

    params = dict(wq=wq, bq=bq, wk=wk, bk=bk, wv=wv, bv=bv, wp=wp, bp=bp,
                  wf1=wf[:C], wf2=wf[C:], bf=bf, w1=w1, b1=b1, w2=w2, b2=b2)

    x = jax.random.normal(ks[14], (B, L, C), jnp.float32)
    attn_mask = calculate_mask(H, W, window_size, shift_size)   # (nW, N, N)

    cfg = dict(B=B, H=H, W=W, C=C, num_heads=num_heads,
               window_size=window_size, shift_size=shift_size, attn_mask=attn_mask)

    ref = reference_block(x, params, **cfg)

    # f32 MXU-operand path (approx reciprocal only low-precision source)
    out_f32 = swin_transformer_block(x, params, **cfg, compute_dtype=jnp.float32)
    out_f32 = jax.block_until_ready(out_f32)
    np.testing.assert_allclose(np.asarray(out_f32), np.asarray(ref),
                               rtol=1e-2, atol=1e-2)

    # bf16 MXU-operand path (v6e / v7x default); f32 accumulation, f32 attention.
    out_bf16 = swin_transformer_block(x, params, **cfg, compute_dtype=jnp.bfloat16)
    out_bf16 = jax.block_until_ready(out_bf16)
    np.testing.assert_allclose(np.asarray(out_bf16), np.asarray(ref),
                               rtol=1e-1, atol=1e-1)

    print("KERNEL_OK")
</pallas_src>

<mosaic_0001>
module attributes {stable_mosaic.version = 11 : i64} {
  func.func @fused_swin_block_kernel(%arg0: i32, %arg1: i32, %arg2: memref<1x32x32xf32, #tpu.memory_space<vmem>>, %arg3: memref<2x16x16xf32, #tpu.memory_space<vmem>>, %arg4: memref<32x64xf32, #tpu.memory_space<vmem>>, %arg5: memref<1x64xf32, #tpu.memory_space<vmem>>, %arg6: memref<32x32xf32, #tpu.memory_space<vmem>>, %arg7: memref<1x32xf32, #tpu.memory_space<vmem>>, %arg8: memref<32x32xf32, #tpu.memory_space<vmem>>, %arg9: memref<1x32xf32, #tpu.memory_space<vmem>>, %arg10: memref<32x32xf32, #tpu.memory_space<vmem>>, %arg11: memref<32x32xf32, #tpu.memory_space<vmem>>, %arg12: memref<1x32xf32, #tpu.memory_space<vmem>>, %arg13: memref<32x128xf32, #tpu.memory_space<vmem>>, %arg14: memref<1x128xf32, #tpu.memory_space<vmem>>, %arg15: memref<128x32xf32, #tpu.memory_space<vmem>>, %arg16: memref<1x32xf32, #tpu.memory_space<vmem>>, %arg17: memref<1x32x32xf32, #tpu.memory_space<vmem>>) attributes {dimension_semantics = [#tpu.dimension_semantics<parallel>, #tpu.dimension_semantics<parallel>], iteration_bounds = array<i64: 2, 2>, scalar_prefetch = 0 : i64, scratch_operands = 0 : i64, tpu.core_type = #tpu.core_type<tc>, window_params = [{transform_indices = @transform_0, window_bounds = array<i64: 1, 32, 32>}, {transform_indices = @transform_1, window_bounds = array<i64: 2, 16, 16>}, {pipeline_mode = #tpu.pipeline_mode<synchronous>, transform_indices = @transform_2, window_bounds = array<i64: 32, 64>}, {pipeline_mode = #tpu.pipeline_mode<synchronous>, transform_indices = @transform_3, window_bounds = array<i64: 1, 64>}, {pipeline_mode = #tpu.pipeline_mode<synchronous>, transform_indices = @transform_4, window_bounds = array<i64: 32, 32>}, {pipeline_mode = #tpu.pipeline_mode<synchronous>, transform_indices = @transform_5, window_bounds = array<i64: 1, 32>}, {pipeline_mode = #tpu.pipeline_mode<synchronous>, transform_indices = @transform_6, window_bounds = array<i64: 32, 32>}, {pipeline_mode = #tpu.pipeline_mode<synchronous>, transform_indices = @transform_7, window_bounds = array<i64: 1, 32>}, {pipeline_mode = #tpu.pipeline_mode<synchronous>, transform_indices = @transform_8, window_bounds = array<i64: 32, 32>}, {pipeline_mode = #tpu.pipeline_mode<synchronous>, transform_indices = @transform_9, window_bounds = array<i64: 32, 32>}, {pipeline_mode = #tpu.pipeline_mode<synchronous>, transform_indices = @transform_10, window_bounds = array<i64: 1, 32>}, {pipeline_mode = #tpu.pipeline_mode<synchronous>, transform_indices = @transform_11, window_bounds = array<i64: 32, 128>}, {pipeline_mode = #tpu.pipeline_mode<synchronous>, transform_indices = @transform_12, window_bounds = array<i64: 1, 128>}, {pipeline_mode = #tpu.pipeline_mode<synchronous>, transform_indices = @transform_13, window_bounds = array<i64: 128, 32>}, {pipeline_mode = #tpu.pipeline_mode<synchronous>, transform_indices = @transform_14, window_bounds = array<i64: 1, 32>}, {transform_indices = @transform_15, window_bounds = array<i64: 1, 32, 32>}]} {
    %c0 = arith.constant 0 : index
    %c0_0 = arith.constant 0 : index
    %c0_1 = arith.constant 0 : index
    %0 = vector.load %arg2[%c0, %c0_0, %c0_1] : memref<1x32x32xf32, #tpu.memory_space<vmem>>, vector<1x32x32xf32>
    %1 = vector.shape_cast %0 : vector<1x32x32xf32> to vector<32x32xf32>
    %2 = arith.mulf %1, %1 : vector<32x32xf32>
    %cst = arith.constant dense<0.000000e+00> : vector<32xf32>
    %3 = vector.multi_reduction <add>, %2, %cst [1] : vector<32x32xf32> to vector<32xf32>
    %4 = vector.shape_cast %3 : vector<32xf32> to vector<32x1xf32>
    %cst_2 = arith.constant 1.42108547E-14 : f32
    %5 = vector.broadcast %cst_2 : f32 to vector<32x1xf32>
    %6 = arith.maximumf %4, %5 : vector<32x1xf32>
    %7 = math.rsqrt %6 : vector<32x1xf32>
    %8 = vector.broadcast %7 : vector<32x1xf32> to vector<32x32xf32>
    %9 = arith.mulf %1, %8 : vector<32x32xf32>
    %c0_3 = arith.constant 0 : index
    %c0_4 = arith.constant 0 : index
    %10 = vector.load %arg4[%c0_3, %c0_4] : memref<32x64xf32, #tpu.memory_space<vmem>>, vector<32x64xf32>
    %cst_5 = arith.constant dense<0.000000e+00> : vector<32x64xf32>
    %11 = tpu.matmul %9, %10, %cst_5 {dimension_numbers = #tpu.dot_dimension_numbers<[1], [0], [0], [1], [0, 0, 1, 1], [], []>} : vector<32x32xf32>, vector<32x64xf32>, vector<32x64xf32> -> vector<32x64xf32>
    %c0_6 = arith.constant 0 : index
    %c0_7 = arith.constant 0 : index
    %12 = vector.load %arg5[%c0_6, %c0_7] : memref<1x64xf32, #tpu.memory_space<vmem>>, vector<1x64xf32>
    %13 = vector.broadcast %12 : vector<1x64xf32> to vector<32x64xf32>
    %14 = arith.addf %11, %13 : vector<32x64xf32>
    %c0_8 = arith.constant 0 : index
    %c0_9 = arith.constant 0 : index
    %15 = vector.load %arg6[%c0_8, %c0_9] : memref<32x32xf32, #tpu.memory_space<vmem>>, vector<32x32xf32>
    %cst_10 = arith.constant dense<0.000000e+00> : vector<32x32xf32>
    %16 = tpu.matmul %1, %15, %cst_10 {dimension_numbers = #tpu.dot_dimension_numbers<[1], [0], [0], [1], [0, 0, 1, 1], [], []>} : vector<32x32xf32>, vector<32x32xf32>, vector<32x32xf32> -> vector<32x32xf32>
    %c0_11 = arith.constant 0 : index
    %c0_12 = arith.constant 0 : index
    %17 = vector.load %arg7[%c0_11, %c0_12] : memref<1x32xf32, #tpu.memory_space<vmem>>, vector<1x32xf32>
    %18 = vector.broadcast %17 : vector<1x32xf32> to vector<32x32xf32>
    %19 = arith.addf %16, %18 : vector<32x32xf32>
    %20 = vector.shape_cast %14 : vector<32x64xf32> to vector<2x16x8x8xf32>
    %21 = tpu.transpose %20, [2, 0, 1, 3] : vector<2x16x8x8xf32> -> vector<8x2x16x8xf32>
    %22 = vector.shape_cast %21 : vector<8x2x16x8xf32> to vector<16x16x8xf32>
    %23 = vector.extract_strided_slice %22 {offsets = [0, 0, 0], sizes = [8, 16, 8], strides = [1, 1, 1]} : vector<16x16x8xf32> to vector<8x16x8xf32>
    %24 = vector.extract_strided_slice %22 {offsets = [8, 0, 0], sizes = [8, 16, 8], strides = [1, 1, 1]} : vector<16x16x8xf32> to vector<8x16x8xf32>
    %25 = vector.shape_cast %19 : vector<32x32xf32> to vector<2x16x4x8xf32>
    %26 = tpu.transpose %25, [2, 0, 1, 3] : vector<2x16x4x8xf32> -> vector<4x2x16x8xf32>
    %27 = vector.shape_cast %26 : vector<4x2x16x8xf32> to vector<8x16x8xf32>
    "tpu.trace_start"() <{level = 10 : i32, message = "bqd,bkd->bqk"}> : () -> ()
    %cst_13 = arith.constant dense<0.000000e+00> : vector<8x16x16xf32>
    %28 = tpu.matmul %23, %24, %cst_13 {dimension_numbers = #tpu.dot_dimension_numbers<[2], [2], [1], [1], [0, 0, 0, 1, 1, 1], [0], [0]>} : vector<8x16x8xf32>, vector<8x16x8xf32>, vector<8x16x16xf32> -> vector<8x16x16xf32>
    "tpu.trace_stop"() : () -> ()
    %29 = vector.shape_cast %28 : vector<8x16x16xf32> to vector<4x2x16x16xf32>
    %c0_14 = arith.constant 0 : index
    %c0_15 = arith.constant 0 : index
    %c0_16 = arith.constant 0 : index
    %30 = vector.load %arg3[%c0_14, %c0_15, %c0_16] : memref<2x16x16xf32, #tpu.memory_space<vmem>>, vector<2x16x16xf32>
    %31 = vector.shape_cast %30 : vector<2x16x16xf32> to vector<1x2x16x16xf32>
    %32 = vector.broadcast %31 : vector<1x2x16x16xf32> to vector<4x2x16x16xf32>
    %33 = arith.addf %29, %32 : vector<4x2x16x16xf32>
    %34 = vector.shape_cast %33 : vector<4x2x16x16xf32> to vector<8x16x16xf32>
    %cst_17 = arith.constant dense<0xFF800000> : vector<8x16xf32>
    %35 = vector.multi_reduction <maximumf>, %34, %cst_17 [2] : vector<8x16x16xf32> to vector<8x16xf32>
    %36 = vector.shape_cast %35 : vector<8x16xf32> to vector<8x16x1xf32>
    %37 = vector.broadcast %36 : vector<8x16x1xf32> to vector<8x16x16xf32>
    %38 = arith.subf %34, %37 : vector<8x16x16xf32>
    %39 = math.exp %38 : vector<8x16x16xf32>
    %cst_18 = arith.constant dense<0.000000e+00> : vector<8x16xf32>
    %40 = vector.multi_reduction <add>, %39, %cst_18 [2] : vector<8x16x16xf32> to vector<8x16xf32>
    %41 = vector.shape_cast %40 : vector<8x16xf32> to vector<8x16x1xf32>
    %42 = tpu.reciprocal %41 {approx = true} : vector<8x16x1xf32> -> vector<8x16x1xf32>
    %43 = vector.broadcast %42 : vector<8x16x1xf32> to vector<8x16x16xf32>
    %44 = arith.mulf %39, %43 : vector<8x16x16xf32>
    "tpu.trace_start"() <{level = 10 : i32, message = "bqk,bkd->bqd"}> : () -> ()
    %cst_19 = arith.constant dense<0.000000e+00> : vector<8x16x8xf32>
    %45 = tpu.matmul %44, %27, %cst_19 {dimension_numbers = #tpu.dot_dimension_numbers<[2], [1], [1], [2], [0, 0, 0, 1, 1, 2], [0], [0]>} : vector<8x16x16xf32>, vector<8x16x8xf32>, vector<8x16x8xf32> -> vector<8x16x8xf32>
    "tpu.trace_stop"() : () -> ()
    %46 = vector.shape_cast %45 : vector<8x16x8xf32> to vector<4x2x16x8xf32>
    %47 = tpu.transpose %46, [1, 2, 0, 3] : vector<4x2x16x8xf32> -> vector<2x16x4x8xf32>
    %48 = vector.shape_cast %47 : vector<2x16x4x8xf32> to vector<32x32xf32>
    %c0_20 = arith.constant 0 : index
    %c0_21 = arith.constant 0 : index
    %49 = vector.load %arg8[%c0_20, %c0_21] : memref<32x32xf32, #tpu.memory_space<vmem>>, vector<32x32xf32>
    %cst_22 = arith.constant dense<0.000000e+00> : vector<32x32xf32>
    %50 = tpu.matmul %48, %49, %cst_22 {dimension_numbers = #tpu.dot_dimension_numbers<[1], [0], [0], [1], [0, 0, 1, 1], [], []>} : vector<32x32xf32>, vector<32x32xf32>, vector<32x32xf32> -> vector<32x32xf32>
    %c0_23 = arith.constant 0 : index
    %c0_24 = arith.constant 0 : index
    %51 = vector.load %arg9[%c0_23, %c0_24] : memref<1x32xf32, #tpu.memory_space<vmem>>, vector<1x32xf32>
    %52 = vector.broadcast %51 : vector<1x32xf32> to vector<32x32xf32>
    %53 = arith.addf %50, %52 : vector<32x32xf32>
    %c0_25 = arith.constant 0 : index
    %c0_26 = arith.constant 0 : index
    %54 = vector.load %arg10[%c0_25, %c0_26] : memref<32x32xf32, #tpu.memory_space<vmem>>, vector<32x32xf32>
    %cst_27 = arith.constant dense<0.000000e+00> : vector<32x32xf32>
    %55 = tpu.matmul %1, %54, %cst_27 {dimension_numbers = #tpu.dot_dimension_numbers<[1], [0], [0], [1], [0, 0, 1, 1], [], []>} : vector<32x32xf32>, vector<32x32xf32>, vector<32x32xf32> -> vector<32x32xf32>
    %c0_28 = arith.constant 0 : index
    %c0_29 = arith.constant 0 : index
    %56 = vector.load %arg11[%c0_28, %c0_29] : memref<32x32xf32, #tpu.memory_space<vmem>>, vector<32x32xf32>
    %cst_30 = arith.constant dense<0.000000e+00> : vector<32x32xf32>
    %57 = tpu.matmul %53, %56, %cst_30 {dimension_numbers = #tpu.dot_dimension_numbers<[1], [0], [0], [1], [0, 0, 1, 1], [], []>} : vector<32x32xf32>, vector<32x32xf32>, vector<32x32xf32> -> vector<32x32xf32>
    %58 = arith.addf %55, %57 : vector<32x32xf32>
    %c0_31 = arith.constant 0 : index
    %c0_32 = arith.constant 0 : index
    %59 = vector.load %arg12[%c0_31, %c0_32] : memref<1x32xf32, #tpu.memory_space<vmem>>, vector<1x32xf32>
    %60 = vector.broadcast %59 : vector<1x32xf32> to vector<32x32xf32>
    %61 = arith.addf %58, %60 : vector<32x32xf32>
    %cst_33 = arith.constant 0.000000e+00 : f32
    %62 = vector.broadcast %cst_33 : f32 to vector<32x32xf32>
    %63 = arith.cmpf oge, %61, %62 : vector<32x32xf32>
    %cst_34 = arith.constant 2.000000e-01 : f32
    %64 = vector.broadcast %cst_34 : f32 to vector<32x32xf32>
    %65 = arith.mulf %64, %61 : vector<32x32xf32>
    %66 = arith.select %63, %61, %65 : vector<32x32xi1>, vector<32x32xf32>
    %cst_35 = arith.constant 1.41421354 : f32
    %67 = vector.broadcast %cst_35 : f32 to vector<32x32xf32>
    %68 = arith.mulf %66, %67 : vector<32x32xf32>
    %c0_36 = arith.constant 0 : index
    %c0_37 = arith.constant 0 : index
    %69 = vector.load %arg13[%c0_36, %c0_37] : memref<32x128xf32, #tpu.memory_space<vmem>>, vector<32x128xf32>
    %cst_38 = arith.constant dense<0.000000e+00> : vector<32x128xf32>
    %70 = tpu.matmul %68, %69, %cst_38 {dimension_numbers = #tpu.dot_dimension_numbers<[1], [0], [0], [1], [0, 0, 1, 1], [], []>} : vector<32x32xf32>, vector<32x128xf32>, vector<32x128xf32> -> vector<32x128xf32>
    %c0_39 = arith.constant 0 : index
    %c0_40 = arith.constant 0 : index
    %71 = vector.load %arg14[%c0_39, %c0_40] : memref<1x128xf32, #tpu.memory_space<vmem>>, vector<1x128xf32>
    %72 = vector.broadcast %71 : vector<1x128xf32> to vector<32x128xf32>
    %73 = arith.addf %70, %72 : vector<32x128xf32>
    %cst_41 = arith.constant 0.000000e+00 : f32
    %74 = vector.broadcast %cst_41 : f32 to vector<32x128xf32>
    %75 = arith.cmpf oge, %73, %74 : vector<32x128xf32>
    %cst_42 = arith.constant 2.000000e-01 : f32
    %76 = vector.broadcast %cst_42 : f32 to vector<32x128xf32>
    %77 = arith.mulf %76, %73 : vector<32x128xf32>
    %78 = arith.select %75, %73, %77 : vector<32x128xi1>, vector<32x128xf32>
    %cst_43 = arith.constant 1.41421354 : f32
    %79 = vector.broadcast %cst_43 : f32 to vector<32x128xf32>
    %80 = arith.mulf %78, %79 : vector<32x128xf32>
    %c0_44 = arith.constant 0 : index
    %c0_45 = arith.constant 0 : index
    %81 = vector.load %arg15[%c0_44, %c0_45] : memref<128x32xf32, #tpu.memory_space<vmem>>, vector<128x32xf32>
    %cst_46 = arith.constant dense<0.000000e+00> : vector<32x32xf32>
    %82 = tpu.matmul %80, %81, %cst_46 {dimension_numbers = #tpu.dot_dimension_numbers<[1], [0], [0], [1], [0, 0, 1, 1], [], []>} : vector<32x128xf32>, vector<128x32xf32>, vector<32x32xf32> -> vector<32x32xf32>
    %c0_47 = arith.constant 0 : index
    %c0_48 = arith.constant 0 : index
    %83 = vector.load %arg16[%c0_47, %c0_48] : memref<1x32xf32, #tpu.memory_space<vmem>>, vector<1x32xf32>
    %84 = vector.broadcast %83 : vector<1x32xf32> to vector<32x32xf32>
    %85 = arith.addf %82, %84 : vector<32x32xf32>
    %c0_49 = arith.constant 0 : index
    %c0_50 = arith.constant 0 : index
    %c0_51 = arith.constant 0 : index
    %86 = vector.load %arg17[%c0_49, %c0_50, %c0_51] : memref<1x32x32xf32, #tpu.memory_space<vmem>>, vector<1x32x32xf32>
    %87 = vector.shape_cast %86 : vector<1x32x32xf32> to vector<32x32xf32>
    %88 = vector.shape_cast %85 : vector<32x32xf32> to vector<1x32x32xf32>
    tpu.vector_store %arg17[%c0_49, %c0_50, %c0_51], %88 {strides = array<i32>} : memref<1x32x32xf32, #tpu.memory_space<vmem>>, vector<1x32x32xf32>,
    return
  }
  func.func @transform_0(%arg0: i32, %arg1: i32) -> (i32, i32, i32) {
    %c0_i32 = arith.constant 0 : i32
    %c0_i32_0 = arith.constant 0 : i32
    return %arg0, %arg1, %c0_i32 : i32, i32, i32
  }
  func.func @transform_1(%arg0: i32, %arg1: i32) -> (i32, i32, i32) {
    %c0_i32 = arith.constant 0 : i32
    %c0_i32_0 = arith.constant 0 : i32
    %c0_i32_1 = arith.constant 0 : i32
    return %arg1, %c0_i32, %c0_i32_0 : i32, i32, i32
  }
  func.func @transform_2(%arg0: i32, %arg1: i32) -> (i32, i32) {
    %c0_i32 = arith.constant 0 : i32
    %c0_i32_0 = arith.constant 0 : i32
    %c0_i32_1 = arith.constant 0 : i32
    return %c0_i32, %c0_i32_0 : i32, i32
  }
  func.func @transform_3(%arg0: i32, %arg1: i32) -> (i32, i32) {
    %c0_i32 = arith.constant 0 : i32
    %c0_i32_0 = arith.constant 0 : i32
    %c0_i32_1 = arith.constant 0 : i32
    return %c0_i32, %c0_i32_0 : i32, i32
  }
  func.func @transform_4(%arg0: i32, %arg1: i32) -> (i32, i32) {
    %c0_i32 = arith.constant 0 : i32
    %c0_i32_0 = arith.constant 0 : i32
    %c0_i32_1 = arith.constant 0 : i32
    return %c0_i32, %c0_i32_0 : i32, i32
  }
  func.func @transform_5(%arg0: i32, %arg1: i32) -> (i32, i32) {
    %c0_i32 = arith.constant 0 : i32
    %c0_i32_0 = arith.constant 0 : i32
    %c0_i32_1 = arith.constant 0 : i32
    return %c0_i32, %c0_i32_0 : i32, i32
  }
  func.func @transform_6(%arg0: i32, %arg1: i32) -> (i32, i32) {
    %c0_i32 = arith.constant 0 : i32
    %c0_i32_0 = arith.constant 0 : i32
    %c0_i32_1 = arith.constant 0 : i32
    return %c0_i32, %c0_i32_0 : i32, i32
  }
  func.func @transform_7(%arg0: i32, %arg1: i32) -> (i32, i32) {
    %c0_i32 = arith.constant 0 : i32
    %c0_i32_0 = arith.constant 0 : i32
    %c0_i32_1 = arith.constant 0 : i32
    return %c0_i32, %c0_i32_0 : i32, i32
  }
  func.func @transform_8(%arg0: i32, %arg1: i32) -> (i32, i32) {
    %c0_i32 = arith.constant 0 : i32
    %c0_i32_0 = arith.constant 0 : i32
    %c0_i32_1 = arith.constant 0 : i32
    return %c0_i32, %c0_i32_0 : i32, i32
  }
  func.func @transform_9(%arg0: i32, %arg1: i32) -> (i32, i32) {
    %c0_i32 = arith.constant 0 : i32
    %c0_i32_0 = arith.constant 0 : i32
    %c0_i32_1 = arith.constant 0 : i32
    return %c0_i32, %c0_i32_0 : i32, i32
  }
  func.func @transform_10(%arg0: i32, %arg1: i32) -> (i32, i32) {
    %c0_i32 = arith.constant 0 : i32
    %c0_i32_0 = arith.constant 0 : i32
    %c0_i32_1 = arith.constant 0 : i32
    return %c0_i32, %c0_i32_0 : i32, i32
  }
  func.func @transform_11(%arg0: i32, %arg1: i32) -> (i32, i32) {
    %c0_i32 = arith.constant 0 : i32
    %c0_i32_0 = arith.constant 0 : i32
    %c0_i32_1 = arith.constant 0 : i32
    return %c0_i32, %c0_i32_0 : i32, i32
  }
  func.func @transform_12(%arg0: i32, %arg1: i32) -> (i32, i32) {
    %c0_i32 = arith.constant 0 : i32
    %c0_i32_0 = arith.constant 0 : i32
    %c0_i32_1 = arith.constant 0 : i32
    return %c0_i32, %c0_i32_0 : i32, i32
  }
  func.func @transform_13(%arg0: i32, %arg1: i32) -> (i32, i32) {
    %c0_i32 = arith.constant 0 : i32
    %c0_i32_0 = arith.constant 0 : i32
    %c0_i32_1 = arith.constant 0 : i32
    return %c0_i32, %c0_i32_0 : i32, i32
  }
  func.func @transform_14(%arg0: i32, %arg1: i32) -> (i32, i32) {
    %c0_i32 = arith.constant 0 : i32
    %c0_i32_0 = arith.constant 0 : i32
    %c0_i32_1 = arith.constant 0 : i32
    return %c0_i32, %c0_i32_0 : i32, i32
  }
  func.func @transform_15(%arg0: i32, %arg1: i32) -> (i32, i32, i32) {
    %c0_i32 = arith.constant 0 : i32
    %c0_i32_0 = arith.constant 0 : i32
    return %arg0, %arg1, %c0_i32 : i32, i32, i32
  }
}

</mosaic_0001>

<llo_original>
// kernel: tpu_custom_call.1
$region0: #{tpu_custom_call.1}
  #allocation0 [shape = 'u32[]', space=smem, size = 0x4, offset = 0x4, fixed_abs, tag = 'smem constant byte address 0x4 - core index']
  #allocation1 [shape = 'u32[144,128]{1,0:T(1,128)}', space=vmem, size = 0x12000, scoped, tag = 'internal scratch']
  %s0 = inlined_call_operand.vmem [shape: f32[2,64,32], index: 0, kind: input, shape index: {}]
  %s1 = inlined_call_operand.vmem [shape: f32[4,16,16], index: 1, kind: input, shape index: {}]
  %s2 = inlined_call_operand.vmem [shape: f32[32,64], index: 2, kind: input, shape index: {}]
  %s3 = inlined_call_operand.vmem [shape: f32[1,64], index: 3, kind: input, shape index: {}]
  %s4 = inlined_call_operand.vmem [shape: f32[32,32], index: 4, kind: input, shape index: {}]
  %s5 = inlined_call_operand.vmem [shape: f32[1,32], index: 5, kind: input, shape index: {}]
  %s6 = inlined_call_operand.vmem [shape: f32[32,32], index: 6, kind: input, shape index: {}]
  %s7 = inlined_call_operand.vmem [shape: f32[1,32], index: 7, kind: input, shape index: {}]
  %s8 = inlined_call_operand.vmem [shape: f32[32,32], index: 8, kind: input, shape index: {}]
  %s9 = inlined_call_operand.vmem [shape: f32[32,32], index: 9, kind: input, shape index: {}]
  %s10 = inlined_call_operand.vmem [shape: f32[1,32], index: 10, kind: input, shape index: {}]
  %s11 = inlined_call_operand.vmem [shape: f32[32,128], index: 11, kind: input, shape index: {}]
  %s12 = inlined_call_operand.vmem [shape: f32[1,128], index: 12, kind: input, shape index: {}]
  %s13 = inlined_call_operand.vmem [shape: f32[128,32], index: 13, kind: input, shape index: {}]
  %s14 = inlined_call_operand.vmem [shape: f32[1,32], index: 14, kind: input, shape index: {}]
  %s15 = inlined_call_operand.vmem [shape: f32[2,64,32], index: 15, kind: output, shape index: {}]
  %s16 = sld [smem:[#allocation0]]
  $region93: #{tpu_custom_call.1} parent=0
    _
  %s18 = ssub.s32 1, %s16
  %s19 = scalar_select 0, %s18, %s16
  loop: start=0, step=1, limit=6
  $region2: #{tpu_custom_call.1} parent=0 // loop_pre_header
    _
  $region3: #{tpu_custom_call.1} parent=0 // loop_header
    %s21 = sphi 0, %s25
    %p22 = scmp.ge.s32.totalorder %s21, 6
    %s28 = sphi 0, %s40
    %s29 = sphi 0, %s36
    %s30 = sphi 0, %s28
    %s31 = sphi 0, %s29
    %s32 = sphi 0, %s30
    %s33 = sphi 0, %s31
    %s45 = sphi 0, %s47
    %s48 = sphi 0, %s45
    %s49 = sphi 0, %s48
    %s65 = sphi 0, %s49
    %s71 = sphi 0, %s73
    %s74 = sphi 0, %s71
    %s75 = sphi 0, %s74
    %s91 = sphi 0, %s75
    %s95 = sphi 0, %s95
    %s97 = sphi 0, %s95
    %s98 = sphi 0, %s97
    %s112 = sphi 0, %s98
    %s116 = sphi 0, %s116
    %s118 = sphi 0, %s116
    %s119 = sphi 0, %s118
    %s133 = sphi 0, %s119
    %s137 = sphi 0, %s137
    %s139 = sphi 0, %s137
    %s140 = sphi 0, %s139
    %s154 = sphi 0, %s140
    %s158 = sphi 0, %s158
    %s160 = sphi 0, %s158
    %s161 = sphi 0, %s160
    %s175 = sphi 0, %s161
    %s179 = sphi 0, %s179
    %s181 = sphi 0, %s179
    %s182 = sphi 0, %s181
    %s196 = sphi 0, %s182
    %s200 = sphi 0, %s200
    %s202 = sphi 0, %s200
    %s203 = sphi 0, %s202
    %s217 = sphi 0, %s203
    %s221 = sphi 0, %s221
    %s223 = sphi 0, %s221
    %s224 = sphi 0, %s223
    %s238 = sphi 0, %s224
    %s242 = sphi 0, %s242
    %s244 = sphi 0, %s242
    %s245 = sphi 0, %s244
    %s259 = sphi 0, %s245
    %s263 = sphi 0, %s263
    %s265 = sphi 0, %s263
    %s266 = sphi 0, %s265
    %s280 = sphi 0, %s266
    %s284 = sphi 0, %s284
    %s286 = sphi 0, %s284
    %s287 = sphi 0, %s286
    %s301 = sphi 0, %s287
    %s305 = sphi 0, %s305
    %s307 = sphi 0, %s305
    %s308 = sphi 0, %s307
    %s322 = sphi 0, %s308
    %s326 = sphi 0, %s326
    %s328 = sphi 0, %s326
    %s329 = sphi 0, %s328
    %s343 = sphi 0, %s329
    %s347 = sphi 0, %s347
    %s349 = sphi 0, %s347
    %s350 = sphi 0, %s349
    %s364 = sphi 0, %s350
    %s372 = sphi 0, %s374
    %s375 = sphi 0, %s372
    %s376 = sphi 0, %s375
    %s392 = sphi 0, %s376
  $region4: #{tpu_custom_call.1} parent=0 // loop_header_branch
    %24 = sbr.rel (%p22) target = $region8
  $region5: #{tpu_custom_call.1} parent=0 // loop_body
    %s26 = ssub.s32 %s21, 1
    %s27 = ssub.s32 %s21, 2
    %s34 = sadd.s32 1, %s29
    %p35 = scmp.ge.s32.totalorder %s34, 2
    %s36 = scalar_select %p35, 0, %s34
    %s37 = sadd.s32 1, %s28
    %s38 = scalar_select %p35, %s37, %s28
    %p39 = scmp.ge.s32.totalorder %s38, 2
    %s40 = scalar_select %p39, 0, %s38
    %s41 = ssub.s32 %s28, %s40
    %s42 = ssub.s32 %s29, %s36
    %s43 = sor.u32 %s41, %s42
    %p44 = scmp.eq.s32.totalorder %s43, 0
    %s46 = sadd.s32 %s45, 1
    %s47 = scalar_select %p44, %s45, %s46
    %p50 = pneg %p44
    %p51 = scmp.eq.s32.totalorder %s21, 3
    %p52 = por %p50, %p51
    %p53 = scmp.ne.s32.totalorder %s45, %s48
    %p54 = scmp.eq.s32.totalorder %s21, 0
    %p55 = por %p53, %p54
    %p56 = scmp.ne.s32.totalorder %s45, %s48
    %p57 = scmp.eq.s32.totalorder %s26, 3
    %p58 = por %p56, %p57
    %p59 = scmp.ne.s32.totalorder %s48, %s49
    %p60 = scmp.eq.s32.totalorder %s26, 0
    %p61 = por %p59, %p60
    %p62 = scmp.ne.s32.totalorder %s48, %s49
    %p63 = scmp.eq.s32.totalorder %s27, 3
    %p64 = por %p62, %p63
    %p66 = scmp.ne.s32.totalorder %s49, %s65
    %p67 = scmp.eq.s32.totalorder %s27, 0
    %p68 = por %p66, %p67
    %s69 = ssub.s32 %s29, %s36
    %p70 = scmp.eq.s32.totalorder %s69, 0
    %s72 = sadd.s32 %s71, 1
    %s73 = scalar_select %p70, %s71, %s72
    %p76 = pneg %p70
    %p77 = scmp.eq.s32.totalorder %s21, 3
    %p78 = por %p76, %p77
    %p79 = scmp.ne.s32.totalorder %s71, %s74
    %p80 = scmp.eq.s32.totalorder %s21, 0
    %p81 = por %p79, %p80
    %p82 = scmp.ne.s32.totalorder %s71, %s74
    %p83 = scmp.eq.s32.totalorder %s26, 3
    %p84 = por %p82, %p83
    %p85 = scmp.ne.s32.totalorder %s74, %s75
    %p86 = scmp.eq.s32.totalorder %s26, 0
    %p87 = por %p85, %p86
    %p88 = scmp.ne.s32.totalorder %s74, %s75
    %p89 = scmp.eq.s32.totalorder %s27, 3
    %p90 = por %p88, %p89
    %p92 = scmp.ne.s32.totalorder %s75, %s91
    %p93 = scmp.eq.s32.totalorder %s27, 0
    %p94 = por %p92, %p93
    %s96 = sadd.s32 %s95, 1
    %p99 = scmp.eq.s32.totalorder %s21, 3
    %p100 = scmp.ne.s32.totalorder %s95, %s97
    %p101 = scmp.eq.s32.totalorder %s21, 0
    %p102 = por %p100, %p101
    %p103 = scmp.ne.s32.totalorder %s95, %s97
    %p104 = scmp.eq.s32.totalorder %s26, 3
    %p105 = por %p103, %p104
    %p106 = scmp.ne.s32.totalorder %s97, %s98
    %p107 = scmp.eq.s32.totalorder %s26, 0
    %p108 = por %p106, %p107
    %p109 = scmp.ne.s32.totalorder %s97, %s98
    %p110 = scmp.eq.s32.totalorder %s27, 3
    %p111 = por %p109, %p110
    %p113 = scmp.ne.s32.totalorder %s98, %s112
    %p114 = scmp.eq.s32.totalorder %s27, 0
    %p115 = por %p113, %p114
    %s117 = sadd.s32 %s116, 1
    %p120 = scmp.eq.s32.totalorder %s21, 3
    %p121 = scmp.ne.s32.totalorder %s116, %s118
    %p122 = scmp.eq.s32.totalorder %s21, 0
    %p123 = por %p121, %p122
    %p124 = scmp.ne.s32.totalorder %s116, %s118
    %p125 = scmp.eq.s32.totalorder %s26, 3
    %p126 = por %p124, %p125
    %p127 = scmp.ne.s32.totalorder %s118, %s119
    %p128 = scmp.eq.s32.totalorder %s26, 0
    %p129 = por %p127, %p128
    %p130 = scmp.ne.s32.totalorder %s118, %s119
    %p131 = scmp.eq.s32.totalorder %s27, 3
    %p132 = por %p130, %p131
    %p134 = scmp.ne.s32.totalorder %s119, %s133
    %p135 = scmp.eq.s32.totalorder %s27, 0
    %p136 = por %p134, %p135
    %s138 = sadd.s32 %s137, 1
    %p141 = scmp.eq.s32.totalorder %s21, 3
    %p142 = scmp.ne.s32.totalorder %s137, %s139
    %p143 = scmp.eq.s32.totalorder %s21, 0
    %p144 = por %p142, %p143
    %p145 = scmp.ne.s32.totalorder %s137, %s139
    %p146 = scmp.eq.s32.totalorder %s26, 3
    %p147 = por %p145, %p146
    %p148 = scmp.ne.s32.totalorder %s139, %s140
    %p149 = scmp.eq.s32.totalorder %s26, 0
    %p150 = por %p148, %p149
    %p151 = scmp.ne.s32.totalorder %s139, %s140
    %p152 = scmp.eq.s32.totalorder %s27, 3
    %p153 = por %p151, %p152
    %p155 = scmp.ne.s32.totalorder %s140, %s154
    %p156 = scmp.eq.s32.totalorder %s27, 0
    %p157 = por %p155, %p156
    %s159 = sadd.s32 %s158, 1
    %p162 = scmp.eq.s32.totalorder %s21, 3
    %p163 = scmp.ne.s32.totalorder %s158, %s160
    %p164 = scmp.eq.s32.totalorder %s21, 0
    %p165 = por %p163, %p164
    %p166 = scmp.ne.s32.totalorder %s158, %s160
    %p167 = scmp.eq.s32.totalorder %s26, 3
    %p168 = por %p166, %p167
    %p169 = scmp.ne.s32.totalorder %s160, %s161
    %p170 = scmp.eq.s32.totalorder %s26, 0
    %p171 = por %p169, %p170
    %p172 = scmp.ne.s32.totalorder %s160, %s161
    %p173 = scmp.eq.s32.totalorder %s27, 3
    %p174 = por %p172, %p173
    %p176 = scmp.ne.s32.totalorder %s161, %s175
    %p177 = scmp.eq.s32.totalorder %s27, 0
    %p178 = por %p176, %p177
    %s180 = sadd.s32 %s179, 1
    %p183 = scmp.eq.s32.totalorder %s21, 3
    %p184 = scmp.ne.s32.totalorder %s179, %s181
    %p185 = scmp.eq.s32.totalorder %s21, 0
    %p186 = por %p184, %p185
    %p187 = scmp.ne.s32.totalorder %s179, %s181
    %p188 = scmp.eq.s32.totalorder %s26, 3
    %p189 = por %p187, %p188
    %p190 = scmp.ne.s32.totalorder %s181, %s182
    %p191 = scmp.eq.s32.totalorder %s26, 0
    %p192 = por %p190, %p191
    %p193 = scmp.ne.s32.totalorder %s181, %s182
    %p194 = scmp.eq.s32.totalorder %s27, 3
    %p195 = por %p193, %p194
    %p197 = scmp.ne.s32.totalorder %s182, %s196
    %p198 = scmp.eq.s32.totalorder %s27, 0
    %p199 = por %p197, %p198
    %s201 = sadd.s32 %s200, 1
    %p204 = scmp.eq.s32.totalorder %s21, 3
    %p205 = scmp.ne.s32.totalorder %s200, %s202
    %p206 = scmp.eq.s32.totalorder %s21, 0
    %p207 = por %p205, %p206
    %p208 = scmp.ne.s32.totalorder %s200, %s202
    %p209 = scmp.eq.s32.totalorder %s26, 3
    %p210 = por %p208, %p209
    %p211 = scmp.ne.s32.totalorder %s202, %s203
    %p212 = scmp.eq.s32.totalorder %s26, 0
    %p213 = por %p211, %p212
    %p214 = scmp.ne.s32.totalorder %s202, %s203
    %p215 = scmp.eq.s32.totalorder %s27, 3
    %p216 = por %p214, %p215
    %p218 = scmp.ne.s32.totalorder %s203, %s217
    %p219 = scmp.eq.s32.totalorder %s27, 0
    %p220 = por %p218, %p219
    %s222 = sadd.s32 %s221, 1
    %p225 = scmp.eq.s32.totalorder %s21, 3
    %p226 = scmp.ne.s32.totalorder %s221, %s223
    %p227 = scmp.eq.s32.totalorder %s21, 0
    %p228 = por %p226, %p227
    %p229 = scmp.ne.s32.totalorder %s221, %s223
    %p230 = scmp.eq.s32.totalorder %s26, 3
    %p231 = por %p229, %p230
    %p232 = scmp.ne.s32.totalorder %s223, %s224
    %p233 = scmp.eq.s32.totalorder %s26, 0
    %p234 = por %p232, %p233
    %p235 = scmp.ne.s32.totalorder %s223, %s224
    %p236 = scmp.eq.s32.totalorder %s27, 3
    %p237 = por %p235, %p236
    %p239 = scmp.ne.s32.totalorder %s224, %s238
    %p240 = scmp.eq.s32.totalorder %s27, 0
    %p241 = por %p239, %p240
    %s243 = sadd.s32 %s242, 1
    %p246 = scmp.eq.s32.totalorder %s21, 3
    %p247 = scmp.ne.s32.totalorder %s242, %s244
    %p248 = scmp.eq.s32.totalorder %s21, 0
    %p249 = por %p247, %p248
    %p250 = scmp.ne.s32.totalorder %s242, %s244
    %p251 = scmp.eq.s32.totalorder %s26, 3
    %p252 = por %p250, %p251
    %p253 = scmp.ne.s32.totalorder %s244, %s245
    %p254 = scmp.eq.s32.totalorder %s26, 0
    %p255 = por %p253, %p254
    %p256 = scmp.ne.s32.totalorder %s244, %s245
    %p257 = scmp.eq.s32.totalorder %s27, 3
    %p258 = por %p256, %p257
    %p260 = scmp.ne.s32.totalorder %s245, %s259
    %p261 = scmp.eq.s32.totalorder %s27, 0
    %p262 = por %p260, %p261
    %s264 = sadd.s32 %s263, 1
    %p267 = scmp.eq.s32.totalorder %s21, 3
    %p268 = scmp.ne.s32.totalorder %s263, %s265
    %p269 = scmp.eq.s32.totalorder %s21, 0
    %p270 = por %p268, %p269
    %p271 = scmp.ne.s32.totalorder %s263, %s265
    %p272 = scmp.eq.s32.totalorder %s26, 3
    %p273 = por %p271, %p272
    %p274 = scmp.ne.s32.totalorder %s265, %s266
    %p275 = scmp.eq.s32.totalorder %s26, 0
    %p276 = por %p274, %p275
    %p277 = scmp.ne.s32.totalorder %s265, %s266
    %p278 = scmp.eq.s32.totalorder %s27, 3
    %p279 = por %p277, %p278
    %p281 = scmp.ne.s32.totalorder %s266, %s280
    %p282 = scmp.eq.s32.totalorder %s27, 0
    %p283 = por %p281, %p282
    %s285 = sadd.s32 %s284, 1
    %p288 = scmp.eq.s32.totalorder %s21, 3
    %p289 = scmp.ne.s32.totalorder %s284, %s286
    %p290 = scmp.eq.s32.totalorder %s21, 0
    %p291 = por %p289, %p290
    %p292 = scmp.ne.s32.totalorder %s284, %s286
    %p293 = scmp.eq.s32.totalorder %s26, 3
    %p294 = por %p292, %p293
    %p295 = scmp.ne.s32.totalorder %s286, %s287
    %p296 = scmp.eq.s32.totalorder %s26, 0
    %p297 = por %p295, %p296
    %p298 = scmp.ne.s32.totalorder %s286, %s287
    %p299 = scmp.eq.s32.totalorder %s27, 3
    %p300 = por %p298, %p299
    %p302 = scmp.ne.s32.totalorder %s287, %s301
    %p303 = scmp.eq.s32.totalorder %s27, 0
    %p304 = por %p302, %p303
    %s306 = sadd.s32 %s305, 1
    %p309 = scmp.eq.s32.totalorder %s21, 3
    %p310 = scmp.ne.s32.totalorder %s305, %s307
    %p311 = scmp.eq.s32.totalorder %s21, 0
    %p312 = por %p310, %p311
    %p313 = scmp.ne.s32.totalorder %s305, %s307
    %p314 = scmp.eq.s32.totalorder %s26, 3
    %p315 = por %p313, %p314
    %p316 = scmp.ne.s32.totalorder %s307, %s308
    %p317 = scmp.eq.s32.totalorder %s26, 0
    %p318 = por %p316, %p317
    %p319 = scmp.ne.s32.totalorder %s307, %s308
    %p320 = scmp.eq.s32.totalorder %s27, 3
    %p321 = por %p319, %p320
    %p323 = scmp.ne.s32.totalorder %s308, %s322
    %p324 = scmp.eq.s32.totalorder %s27, 0
    %p325 = por %p323, %p324
    %s327 = sadd.s32 %s326, 1
    %p330 = scmp.eq.s32.totalorder %s21, 3
    %p331 = scmp.ne.s32.totalorder %s326, %s328
    %p332 = scmp.eq.s32.totalorder %s21, 0
    %p333 = por %p331, %p332
    %p334 = scmp.ne.s32.totalorder %s326, %s328
    %p335 = scmp.eq.s32.totalorder %s26, 3
    %p336 = por %p334, %p335
    %p337 = scmp.ne.s32.totalorder %s328, %s329
    %p338 = scmp.eq.s32.totalorder %s26, 0
    %p339 = por %p337, %p338
    %p340 = scmp.ne.s32.totalorder %s328, %s329
    %p341 = scmp.eq.s32.totalorder %s27, 3
    %p342 = por %p340, %p341
    %p344 = scmp.ne.s32.totalorder %s329, %s343
    %p345 = scmp.eq.s32.totalorder %s27, 0
    %p346 = por %p344, %p345
    %s348 = sadd.s32 %s347, 1
    %p351 = scmp.eq.s32.totalorder %s21, 3
    %p352 = scmp.ne.s32.totalorder %s347, %s349
    %p353 = scmp.eq.s32.totalorder %s21, 0
    %p354 = por %p352, %p353
    %p355 = scmp.ne.s32.totalorder %s347, %s349
    %p356 = scmp.eq.s32.totalorder %s26, 3
    %p357 = por %p355, %p356
    %p358 = scmp.ne.s32.totalorder %s349, %s350
    %p359 = scmp.eq.s32.totalorder %s26, 0
    %p360 = por %p358, %p359
    %p361 = scmp.ne.s32.totalorder %s349, %s350
    %p362 = scmp.eq.s32.totalorder %s27, 3
    %p363 = por %p361, %p362
    %p365 = scmp.ne.s32.totalorder %s350, %s364
    %p366 = scmp.eq.s32.totalorder %s27, 0
    %p367 = por %p365, %p366
    %s368 = ssub.s32 %s28, %s40
    %s369 = ssub.s32 %s29, %s36
    %s370 = sor.u32 %s368, %s369
    %p371 = scmp.eq.s32.totalorder %s370, 0
    %s373 = sadd.s32 %s372, 1
    %s374 = scalar_select %p371, %s372, %s373
    %p377 = pneg %p371
    %p378 = scmp.eq.s32.totalorder %s21, 3
    %p379 = por %p377, %p378
    %p380 = scmp.ne.s32.totalorder %s372, %s375
    %p381 = scmp.eq.s32.totalorder %s21, 0
    %p382 = por %p380, %p381
    %p383 = scmp.ne.s32.totalorder %s372, %s375
    %p384 = scmp.eq.s32.totalorder %s26, 3
    %p385 = por %p383, %p384
    %p386 = scmp.ne.s32.totalorder %s375, %s376
    %p387 = scmp.eq.s32.totalorder %s26, 0
    %p388 = por %p386, %p387
    %p389 = scmp.ne.s32.totalorder %s375, %s376
    %p390 = scmp.eq.s32.totalorder %s27, 3
    %p391 = por %p389, %p390
    %p393 = scmp.ne.s32.totalorder %s376, %s392
    %p394 = scmp.eq.s32.totalorder %s27, 0
    %p395 = por %p393, %p394
    %p396 = scmp.le.s32.totalorder 1, %s21
    %p397 = scmp.lt.s32.totalorder %s21, 5
    %p398 = pnand %p396, %p397
    %p399 = pneg %p398
    // Predicated region
    $region9: #{tpu_custom_call.1} parent=5 // pred_check
      _
    $region10: #{tpu_custom_call.1} parent=5 // pred_check_branch
      %401 = sbr.rel (%p398) target = $region12
    $region11: #{tpu_custom_call.1} parent=5 // pred_region
      %s402 = ssub.s32 %s21, 1
      // Predicated region
      $region13: #{tpu_custom_call.1} parent=11 // pred_check
        %p403 = pneg %p108
      $region14: #{tpu_custom_call.1} parent=11 // pred_check_branch
        %405 = sbr.rel (%p403) target = $region16
      $region15: #{tpu_custom_call.1} parent=11 // pred_region
        _
      $region16: #{tpu_custom_call.1} parent=11 // pred_fallthru
        _
      // Predicated region
      $region17: #{tpu_custom_call.1} parent=11 // pred_check
        %p406 = pneg %p129
      $region18: #{tpu_custom_call.1} parent=11 // pred_check_branch
        %408 = sbr.rel (%p406) target = $region20
      $region19: #{tpu_custom_call.1} parent=11 // pred_region
        _
      $region20: #{tpu_custom_call.1} parent=11 // pred_fallthru
        _
      // Predicated region
      $region21: #{tpu_custom_call.1} parent=11 // pred_check
        %p409 = pneg %p150
      $region22: #{tpu_custom_call.1} parent=11 // pred_check_branch
        %411 = sbr.rel (%p409) target = $region24
      $region23: #{tpu_custom_call.1} parent=11 // pred_region
        _
      $region24: #{tpu_custom_call.1} parent=11 // pred_fallthru
        _
      // Predicated region
      $region25: #{tpu_custom_call.1} parent=11 // pred_check
        %p412 = pneg %p171
      $region26: #{tpu_custom_call.1} parent=11 // pred_check_branch
        %414 = sbr.rel (%p412) target = $region28
      $region27: #{tpu_custom_call.1} parent=11 // pred_region
        _
      $region28: #{tpu_custom_call.1} parent=11 // pred_fallthru
        _
      // Predicated region
      $region29: #{tpu_custom_call.1} parent=11 // pred_check
        %p415 = pneg %p192
      $region30: #{tpu_custom_call.1} parent=11 // pred_check_branch
        %417 = sbr.rel (%p415) target = $region32
      $region31: #{tpu_custom_call.1} parent=11 // pred_region
        _
      $region32: #{tpu_custom_call.1} parent=11 // pred_fallthru
        _
      // Predicated region
      $region33: #{tpu_custom_call.1} parent=11 // pred_check
        %p418 = pneg %p213
      $region34: #{tpu_custom_call.1} parent=11 // pred_check_branch
        %420 = sbr.rel (%p418) target = $region36
      $region35: #{tpu_custom_call.1} parent=11 // pred_region
        _
      $region36: #{tpu_custom_call.1} parent=11 // pred_fallthru
        _
      // Predicated region
      $region37: #{tpu_custom_call.1} parent=11 // pred_check
        %p421 = pneg %p234
      $region38: #{tpu_custom_call.1} parent=11 // pred_check_branch
        %423 = sbr.rel (%p421) target = $region40
      $region39: #{tpu_custom_call.1} parent=11 // pred_region
        _
      $region40: #{tpu_custom_call.1} parent=11 // pred_fallthru
        _
      // Predicated region
      $region41: #{tpu_custom_call.1} parent=11 // pred_check
        %p424 = pneg %p255
      $region42: #{tpu_custom_call.1} parent=11 // pred_check_branch
        %426 = sbr.rel (%p424) target = $region44
      $region43: #{tpu_custom_call.1} parent=11 // pred_region
        _
      $region44: #{tpu_custom_call.1} parent=11 // pred_fallthru
        _
      // Predicated region
      $region45: #{tpu_custom_call.1} parent=11 // pred_check
        %p427 = pneg %p276
      $region46: #{tpu_custom_call.1} parent=11 // pred_check_branch
        %429 = sbr.rel (%p427) target = $region48
      $region47: #{tpu_custom_call.1} parent=11 // pred_region
        _
      $region48: #{tpu_custom_call.1} parent=11 // pred_fallthru
        _
      // Predicated region
      $region49: #{tpu_custom_call.1} parent=11 // pred_check
        %p430 = pneg %p297
      $region50: #{tpu_custom_call.1} parent=11 // pred_check_branch
        %432 = sbr.rel (%p430) target = $region52
      $region51: #{tpu_custom_call.1} parent=11 // pred_region
        _
      $region52: #{tpu_custom_call.1} parent=11 // pred_fallthru
        _
      // Predicated region
      $region53: #{tpu_custom_call.1} parent=11 // pred_check
        %p433 = pneg %p318
      $region54: #{tpu_custom_call.1} parent=11 // pred_check_branch
        %435 = sbr.rel (%p433) target = $region56
      $region55: #{tpu_custom_call.1} parent=11 // pred_region
        _
      $region56: #{tpu_custom_call.1} parent=11 // pred_fallthru
        _
      // Predicated region
      $region57: #{tpu_custom_call.1} parent=11 // pred_check
        %p436 = pneg %p339
      $region58: #{tpu_custom_call.1} parent=11 // pred_check_branch
        %438 = sbr.rel (%p436) target = $region60
      $region59: #{tpu_custom_call.1} parent=11 // pred_region
        _
      $region60: #{tpu_custom_call.1} parent=11 // pred_fallthru
        _
      // Predicated region
      $region61: #{tpu_custom_call.1} parent=11 // pred_check
        %p439 = pneg %p360
      $region62: #{tpu_custom_call.1} parent=11 // pred_check_branch
        %441 = sbr.rel (%p439) target = $region64
      $region63: #{tpu_custom_call.1} parent=11 // pred_region
        _
      $region64: #{tpu_custom_call.1} parent=11 // pred_fallthru
        _
    $region12: #{tpu_custom_call.1} parent=5 // pred_fallthru
      _
    %p442 = scmp.lt.s32.totalorder %s21, 4
    // Predicated region
    $region65: #{tpu_custom_call.1} parent=5 // pred_check
      %p443 = pneg %p442
    $region66: #{tpu_custom_call.1} parent=5 // pred_check_branch
      %445 = sbr.rel (%p443) target = $region68
    $region67: #{tpu_custom_call.1} parent=5 // pred_region
      // Predicated region
      $region69: #{tpu_custom_call.1} parent=67 // pred_check
        %p446 = pneg %p55
      $region70: #{tpu_custom_call.1} parent=67 // pred_check_branch
        %448 = sbr.rel (%p446) target = $region72
      $region71: #{tpu_custom_call.1} parent=67 // pred_region
        %s449 = smul.u32 4, %s29
        %p450 = scmp.lt.s32.totalorder %s28, 1
        %s451 = scalar_select %p450, %s28, 1
        %p452 = scmp.lt.s32.totalorder %s449, 7
        %s453 = scalar_select %p452, %s449, 7
        %s454 = smul.addr %s451, 8
        %s455 = sadd.s32 %s453, %s454
        %s456 = smul.addr %s455, 8
        %s457 = scalar_lea.vmem %s0, %s456
        %s458 = smul.u32 4, %s29
      $region72: #{tpu_custom_call.1} parent=67 // pred_fallthru
        _
      // Predicated region
      $region73: #{tpu_custom_call.1} parent=67 // pred_check
        %p459 = pneg %p81
      $region74: #{tpu_custom_call.1} parent=67 // pred_check_branch
        %461 = sbr.rel (%p459) target = $region76
      $region75: #{tpu_custom_call.1} parent=67 // pred_region
        %s462 = smul.u32 2, %s29
        %p463 = scmp.lt.s32.totalorder %s462, 3
        %s464 = scalar_select %p463, %s462, 3
        %s465 = smul.addr %s464, 2
        %s466 = smul.addr %s465, 8
        %s467 = scalar_lea.vmem %s1, %s466
        %s468 = smul.u32 2, %s29
      $region76: #{tpu_custom_call.1} parent=67 // pred_fallthru
        _
    $region68: #{tpu_custom_call.1} parent=5 // pred_fallthru
      _
    %p469 = scmp.le.s32.totalorder 1, %s21
    %p470 = scmp.lt.s32.totalorder %s21, 5
    %p471 = pnand %p469, %p470
    %p472 = pneg %p471
    // Predicated region
    $region77: #{tpu_custom_call.1} parent=5 // pred_check
      _
    $region78: #{tpu_custom_call.1} parent=5 // pred_check_branch
      %474 = sbr.rel (%p471) target = $region80
    $region79: #{tpu_custom_call.1} parent=5 // pred_region
      %s475 = ssub.s32 %s21, 1
      %s476 = smul.u32 4, %s31
      %p477 = scmp.lt.s32.totalorder %s30, 1
      %s478 = scalar_select %p477, %s30, 1
      %p479 = scmp.lt.s32.totalorder %s476, 7
      %s480 = scalar_select %p479, %s476, 7
      %s481 = smul.addr %s478, 8
      %s482 = sadd.s32 %s480, %s481
      %s483 = smul.addr %s482, 8
      %s484 = scalar_lea.vmem %s0, %s483
      %p485 = pneg %p61
      %p486 = pneg %p58
      %s487 = smul.u32 2, %s31
      %p488 = scmp.lt.s32.totalorder %s487, 3
      %s489 = scalar_select %p488, %s487, 3
      %s490 = smul.addr %s489, 2
      %s491 = smul.addr %s490, 8
      %s492 = scalar_lea.vmem %s1, %s491
      %p493 = pneg %p87
      %p494 = pneg %p84
      %p495 = pneg %p108
      %p496 = pneg %p105
      %p497 = pneg %p129
      %p498 = pneg %p126
      %p499 = pneg %p150
      %p500 = pneg %p147
      %p501 = pneg %p171
      %p502 = pneg %p168
      %p503 = pneg %p192
      %p504 = pneg %p189
      %p505 = pneg %p213
      %p506 = pneg %p210
      %p507 = pneg %p234
      %p508 = pneg %p231
      %p509 = pneg %p255
      %p510 = pneg %p252
      %p511 = pneg %p276
      %p512 = pneg %p273
      %p513 = pneg %p297
      %p514 = pneg %p294
      %p515 = pneg %p318
      %p516 = pneg %p315
      %p517 = pneg %p339
      %p518 = pneg %p336
      %p519 = pneg %p360
      %p520 = pneg %p357
      %p521 = pneg %p388
      %p522 = pneg %p385
      %s523 = smul.u32 4, %s31
      %p524 = scmp.lt.s32.totalorder %s30, 1
      %s525 = scalar_select %p524, %s30, 1
      %p526 = scmp.lt.s32.totalorder %s523, 7
      %s527 = scalar_select %p526, %s523, 7
      %s528 = smul.addr %s525, 8
      %s529 = sadd.s32 %s527, %s528
      %s530 = smul.addr %s529, 8
      %s531 = scalar_lea.vmem %s15, %s530
      %s532 = smul.u32 4, %s31
      %p533 = scmp.lt.s32.totalorder %s30, 1
      %s534 = scalar_select %p533, %s30, 1
      %p535 = scmp.lt.s32.totalorder %s532, 7
      %s536 = scalar_select %p535, %s532, 7
      %s537 = smul.addr %s534, 8
      %s538 = sadd.s32 %s536, %s537
      %s539 = smul.addr %s538, 8
      %s540 = scalar_lea.vmem %s0, %s539
      %s541 = smul.u32 4, %s31
      %s542 = smul.u32 2, %s31
      %p543 = scmp.lt.s32.totalorder %s542, 3
      %s544 = scalar_select %p543, %s542, 3
      %s545 = smul.addr %s544, 2
      %s546 = smul.addr %s545, 8
      %s547 = scalar_lea.vmem %s1, %s546
      %s548 = smul.u32 2, %s31
      %s549 = smul.u32 4, %s31
      %p550 = scmp.lt.s32.totalorder %s30, 1
      %s551 = scalar_select %p550, %s30, 1
      %p552 = scmp.lt.s32.totalorder %s549, 7
      %s553 = scalar_select %p552, %s549, 7
      %s554 = smul.addr %s551, 8
      %s555 = sadd.s32 %s553, %s554
      %s556 = smul.addr %s555, 8
      %s557 = scalar_lea.vmem %s15, %s556
      %s558 = smul.u32 4, %s31
      %v559 = vld [vmem:[%s540] sm:$0xff]
      %v560 = vld [vmem:[%s540 + $0x8] sm:$0xff]
      %v561 = vld [vmem:[%s540 + $0x10] sm:$0xff]
      %v562 = vld [vmem:[%s540 + $0x18] sm:$0xff]
      %v563 = vmul.f32 %v559, %v559
      %v564 = vmul.f32 %v560, %v560
      %v565 = vmul.f32 %v561, %v561
      %v566 = vmul.f32 %v562, %v562
      %vm567 = vcmask 261120
      %v568 = vsel %vm567, %v563, 0.0
      %569 = vadd.xlane.f32.xlu0 %v568
      %v570 = vpop.xlane.xlu0 %569
      %v571 = vsel %vm567, %v564, 0.0
      %572 = vadd.xlane.f32.xlu0 %v571
      %v573 = vpop.xlane.xlu0 %572
      %v574 = vsel %vm567, %v565, 0.0
      %575 = vadd.xlane.f32.xlu0 %v574
      %v576 = vpop.xlane.xlu0 %575
      %v577 = vsel %vm567, %v566, 0.0
      %578 = vadd.xlane.f32.xlu0 %v577
      %v579 = vpop.xlane.xlu0 %578
      %v580 = vmax.f32 %v570, 1.4210855e-14
      %v581 = vmax.f32 %v573, 1.4210855e-14
      %v582 = vmax.f32 %v576, 1.4210855e-14
      %v583 = vmax.f32 %v579, 1.4210855e-14
      %v584 = vrsqrt.pop %v580
      %v585 = vrsqrt.pop %v581
      %v586 = vrsqrt.pop %v582
      %v587 = vrsqrt.pop %v583
      %v588 = vmul.f32 %v559, %v584
      %v589 = vmul.f32 %v560, %v585
      %v590 = vmul.f32 %v561, %v586
      %v591 = vmul.f32 %v562, %v587
      %v592 = vld [vmem:[%s2] sm:$0xff]
      %v593 = vld [vmem:[%s2 + $0x8] sm:$0xff]
      %v594 = vld [vmem:[%s2 + $0x10] sm:$0xff]
      %v595 = vld [vmem:[%s2 + $0x18] sm:$0xff]
      %v596 = vld [vmem:[%s3] sm:$0x1]
      %v598 = vlaneseq
      %v599 = vshrl.u32 %v598, 7
      %v600 = vsub.s32 0, %v599
      %v601 = vrot.slane %v596, %v600
      %v604 = vsel %vm567, %v588, 0
      %v607 = vsel %vm567, %v589, 0
      %v610 = vsel %vm567, %v590, 0
      %v613 = vsel %vm567, %v591, 0
      %615 = vmatprep.subr.mxu0 0.0
      %616 = vmatpush1.msra.mxu0 %v592
      %617 = vmatprep.subr.mxu0 0.0
      %618 = vmatpush1.msra.mxu0 %v593
      %619 = vmatprep.subr.mxu0 0.0
      %620 = vmatpush1.msra.mxu0 %v594
      %621 = vmatprep.subr.mxu0 0.0
      %622 = vmatpush1.msra.mxu0 %v595
      %623 = vmatprep.subr.mxu0 0.0
      %624 = vmatpush1.msra.mxu0 0.0
      %625 = vmatprep.subr.mxu0 0.0
      %626 = vmatpush1.msra.mxu0 0.0
      %627 = vmatprep.subr.mxu0 0.0
      %628 = vmatpush1.msra.mxu0 0.0
      %629 = vmatprep.subr.mxu0 0.0
      %630 = vmatpush1.msra.mxu0 0.0
      %631 = vmatprep.subr.mxu0 0.0
      %632 = vmatpush1.msra.mxu0 0.0
      %633 = vmatprep.subr.mxu0 0.0
      %634 = vmatpush1.msra.mxu0 0.0
      %635 = vmatprep.subr.mxu0 0.0
      %636 = vmatpush1.msra.mxu0 0.0
      %637 = vmatprep.subr.mxu0 0.0
      %638 = vmatpush1.msra.mxu0 0.0
      %639 = vmatprep.subr.mxu0 0.0
      %640 = vmatpush1.msra.mxu0 0.0
      %641 = vmatprep.subr.mxu0 0.0
      %642 = vmatpush1.msra.mxu0 0.0
      %643 = vmatprep.subr.mxu0 0.0
      %644 = vmatpush1.msra.mxu0 0.0
      %645 = vmatprep.subr.mxu0 0.0
      %646 = vmatpush1.msra.mxu0 0.0
      %647 = vmatprep.subr.mxu0 0.0
      %648 = vmatpush1.msra.mxu0 0.0
      %649 = vmatprep.subr.mxu0 0.0
      %650 = vmatpush1.msra.mxu0 0.0
      %651 = vmatprep.subr.mxu0 0.0
      %652 = vmatpush1.msra.mxu0 0.0
      %653 = vmatprep.subr.mxu0 0.0
      %654 = vmatpush1.msra.mxu0 0.0
      %655 = vmatprep.subr.mxu0 0.0
      %656 = vmatpush1.msra.mxu0 0.0
      %657 = vmatprep.subr.mxu0 0.0
      %658 = vmatpush1.msra.mxu0 0.0
      %659 = vmatprep.subr.mxu0 0.0
      %660 = vmatpush1.msra.mxu0 0.0
      %661 = vmatprep.subr.mxu0 0.0
      %662 = vmatpush1.msra.mxu0 0.0
      %663 = vmatprep.subr.mxu0 0.0
      %664 = vmatpush1.msra.mxu0 0.0
      %665 = vmatprep.subr.mxu0 0.0
      %666 = vmatpush1.msra.mxu0 0.0
      %667 = vmatprep.subr.mxu0 0.0
      %668 = vmatpush1.msra.mxu0 0.0
      %669 = vmatprep.subr.mxu0 0.0
      %670 = vmatpush1.msra.mxu0 0.0
      %671 = vmatprep.subr.mxu0 0.0
      %672 = vmatpush1.msra.mxu0 0.0
      %673 = vmatprep.subr.mxu0 0.0
      %674 = vmatpush1.msra.mxu0 0.0
      %675 = vmatprep.subr.mxu0 0.0
      %676 = vmatpush1.msra.mxu0 0.0
      %677 = vmatprep.subr.mxu0 0.0
      %678 = vmatpush1.msra.mxu0 0.0
      %679 = vmatprep.mubr.f32.mxu0 0.0
      %680 = vmatmul.mubr.f32.gmra.mrb[0].mxu0 %v604
      %v681 = vpop.f32.mrb[0].mxu0
      %v682 = vadd.f32 %v601, %v681
      %v683 = vpop.f32.mrb[0].mxu0
      %684 = vmatprep.mubr.f32.mxu0 0.0
      %685 = vmatmul.mubr.f32.gmra.mrb[0].mxu0 %v607
      %v686 = vpop.f32.mrb[0].mxu0
      %v687 = vadd.f32 %v601, %v686
      %v688 = vpop.f32.mrb[0].mxu0
      %689 = vmatprep.mubr.f32.mxu0 0.0
      %690 = vmatmul.mubr.f32.gmra.mrb[0].mxu0 %v610
      %v691 = vpop.f32.mrb[0].mxu0
      %v692 = vadd.f32 %v601, %v691
      %v693 = vpop.f32.mrb[0].mxu0
      %694 = vmatprep.mubr.f32.mxu0 0.0
      %695 = vmatmul.mubr.f32.gmra.mrb[0].mxu0 %v613
      %v696 = vpop.f32.mrb[0].mxu0
      %v697 = vadd.f32 %v601, %v696
      %v698 = vpop.f32.mrb[0].mxu0
      %699 = vdwg.mxu0
      %v700 = vld [vmem:[%s4] sm:$0xff]
      %v701 = vld [vmem:[%s4 + $0x8] sm:$0xff]
      %v702 = vld [vmem:[%s4 + $0x10] sm:$0xff]
      %v703 = vld [vmem:[%s4 + $0x18] sm:$0xff]
      %v704 = vld [vmem:[%s5] sm:$0x1]
      %v706 = vlaneseq
      %v707 = vshrl.u32 %v706, 7
      %v708 = vsub.s32 0, %v707
      %v709 = vrot.slane %v704, %v708
      %v712 = vsel %vm567, %v559, 0
      %v715 = vsel %vm567, %v560, 0
      %v718 = vsel %vm567, %v561, 0
      %v721 = vsel %vm567, %v562, 0
      %723 = vmatprep.subr.mxu0 0.0
      %724 = vmatpush1.msra.mxu0 %v700
      %725 = vmatprep.subr.mxu0 0.0
      %726 = vmatpush1.msra.mxu0 %v701
      %727 = vmatprep.subr.mxu0 0.0
      %728 = vmatpush1.msra.mxu0 %v702
      %729 = vmatprep.subr.mxu0 0.0
      %730 = vmatpush1.msra.mxu0 %v703
      %731 = vmatprep.subr.mxu0 0.0
      %732 = vmatpush1.msra.mxu0 0.0
      %733 = vmatprep.subr.mxu0 0.0
      %734 = vmatpush1.msra.mxu0 0.0
      %735 = vmatprep.subr.mxu0 0.0
      %736 = vmatpush1.msra.mxu0 0.0
      %737 = vmatprep.subr.mxu0 0.0
      %738 = vmatpush1.msra.mxu0 0.0
      %739 = vmatprep.subr.mxu0 0.0
      %740 = vmatpush1.msra.mxu0 0.0
      %741 = vmatprep.subr.mxu0 0.0
      %742 = vmatpush1.msra.mxu0 0.0
      %743 = vmatprep.subr.mxu0 0.0
      %744 = vmatpush1.msra.mxu0 0.0
      %745 = vmatprep.subr.mxu0 0.0
      %746 = vmatpush1.msra.mxu0 0.0
      %747 = vmatprep.subr.mxu0 0.0
      %748 = vmatpush1.msra.mxu0 0.0
      %749 = vmatprep.subr.mxu0 0.0
      %750 = vmatpush1.msra.mxu0 0.0
      %751 = vmatprep.subr.mxu0 0.0
      %752 = vmatpush1.msra.mxu0 0.0
      %753 = vmatprep.subr.mxu0 0.0
      %754 = vmatpush1.msra.mxu0 0.0
      %755 = vmatprep.subr.mxu0 0.0
      %756 = vmatpush1.msra.mxu0 0.0
      %757 = vmatprep.subr.mxu0 0.0
      %758 = vmatpush1.msra.mxu0 0.0
      %759 = vmatprep.subr.mxu0 0.0
      %760 = vmatpush1.msra.mxu0 0.0
      %761 = vmatprep.subr.mxu0 0.0
      %762 = vmatpush1.msra.mxu0 0.0
      %763 = vmatprep.subr.mxu0 0.0
      %764 = vmatpush1.msra.mxu0 0.0
      %765 = vmatprep.subr.mxu0 0.0
      %766 = vmatpush1.msra.mxu0 0.0
      %767 = vmatprep.subr.mxu0 0.0
      %768 = vmatpush1.msra.mxu0 0.0
      %769 = vmatprep.subr.mxu0 0.0
      %770 = vmatpush1.msra.mxu0 0.0
      %771 = vmatprep.subr.mxu0 0.0
      %772 = vmatpush1.msra.mxu0 0.0
      %773 = vmatprep.subr.mxu0 0.0
      %774 = vmatpush1.msra.mxu0 0.0
      %775 = vmatprep.subr.mxu0 0.0
      %776 = vmatpush1.msra.mxu0 0.0
      %777 = vmatprep.subr.mxu0 0.0
      %778 = vmatpush1.msra.mxu0 0.0
      %779 = vmatprep.subr.mxu0 0.0
      %780 = vmatpush1.msra.mxu0 0.0
      %781 = vmatprep.subr.mxu0 0.0
      %782 = vmatpush1.msra.mxu0 0.0
      %783 = vmatprep.subr.mxu0 0.0
      %784 = vmatpush1.msra.mxu0 0.0
      %785 = vmatprep.subr.mxu0 0.0
      %786 = vmatpush1.msra.mxu0 0.0
      %787 = vmatprep.mubr.f32.mxu0 0.0
      %788 = vmatmul.mubr.f32.gmra.mrb[0].mxu0 %v712
      %v789 = vpop.f32.mrb[0].mxu0
      %v790 = vadd.f32 %v709, %v789
      %v791 = vpop.f32.mrb[0].mxu0
      %792 = vmatprep.mubr.f32.mxu0 0.0
      %793 = vmatmul.mubr.f32.gmra.mrb[0].mxu0 %v715
      %v794 = vpop.f32.mrb[0].mxu0
      %v795 = vadd.f32 %v709, %v794
      %v796 = vpop.f32.mrb[0].mxu0
      %797 = vmatprep.mubr.f32.mxu0 0.0
      %798 = vmatmul.mubr.f32.gmra.mrb[0].mxu0 %v718
      %v799 = vpop.f32.mrb[0].mxu0
      %v800 = vadd.f32 %v709, %v799
      %v801 = vpop.f32.mrb[0].mxu0
      %802 = vmatprep.mubr.f32.mxu0 0.0
      %803 = vmatmul.mubr.f32.gmra.mrb[0].mxu0 %v721
      %v804 = vpop.f32.mrb[0].mxu0
      %v805 = vadd.f32 %v709, %v804
      %v806 = vpop.f32.mrb[0].mxu0
      %807 = vdwg.mxu0
      %812 = vrot.lane.b32.xlu0 %v682, 120
      %v813 = vpop.permute.xlu0 %812
      %814 = vrot.lane.b32.xlu0 %v687, 120
      %v815 = vpop.permute.xlu0 %814
      %816 = vrot.lane.b32.xlu0 %v692, 120
      %v817 = vpop.permute.xlu0 %816
      %818 = vrot.lane.b32.xlu0 %v697, 120
      %v819 = vpop.permute.xlu0 %818
      %824 = vrot.lane.b32.xlu0 %v682, 112
      %v825 = vpop.permute.xlu0 %824
      %826 = vrot.lane.b32.xlu0 %v687, 112
      %v827 = vpop.permute.xlu0 %826
      %828 = vrot.lane.b32.xlu0 %v692, 112
      %v829 = vpop.permute.xlu0 %828
      %830 = vrot.lane.b32.xlu0 %v697, 112
      %v831 = vpop.permute.xlu0 %830
      %836 = vrot.lane.b32.xlu0 %v682, 104
      %v837 = vpop.permute.xlu0 %836
      %838 = vrot.lane.b32.xlu0 %v687, 104
      %v839 = vpop.permute.xlu0 %838
      %840 = vrot.lane.b32.xlu0 %v692, 104
      %v841 = vpop.permute.xlu0 %840
      %842 = vrot.lane.b32.xlu0 %v697, 104
      %v843 = vpop.permute.xlu0 %842
      %848 = vrot.lane.b32.xlu0 %v682, 96
      %v849 = vpop.permute.xlu0 %848
      %850 = vrot.lane.b32.xlu0 %v687, 96
      %v851 = vpop.permute.xlu0 %850
      %852 = vrot.lane.b32.xlu0 %v692, 96
      %v853 = vpop.permute.xlu0 %852
      %854 = vrot.lane.b32.xlu0 %v697, 96
      %v855 = vpop.permute.xlu0 %854
      %860 = vrot.lane.b32.xlu0 %v682, 88
      %v861 = vpop.permute.xlu0 %860
      %862 = vrot.lane.b32.xlu0 %v687, 88
      %v863 = vpop.permute.xlu0 %862
      %864 = vrot.lane.b32.xlu0 %v692, 88
      %v865 = vpop.permute.xlu0 %864
      %866 = vrot.lane.b32.xlu0 %v697, 88
      %v867 = vpop.permute.xlu0 %866
      %872 = vrot.lane.b32.xlu0 %v682, 80
      %v873 = vpop.permute.xlu0 %872
      %874 = vrot.lane.b32.xlu0 %v687, 80
      %v875 = vpop.permute.xlu0 %874
      %876 = vrot.lane.b32.xlu0 %v692, 80
      %v877 = vpop.permute.xlu0 %876
      %878 = vrot.lane.b32.xlu0 %v697, 80
      %v879 = vpop.permute.xlu0 %878
      %884 = vrot.lane.b32.xlu0 %v682, 72
      %v885 = vpop.permute.xlu0 %884
      %886 = vrot.lane.b32.xlu0 %v687, 72
      %v887 = vpop.permute.xlu0 %886
      %888 = vrot.lane.b32.xlu0 %v692, 72
      %v889 = vpop.permute.xlu0 %888
      %890 = vrot.lane.b32.xlu0 %v697, 72
      %v891 = vpop.permute.xlu0 %890
      %v896 = vcombine.low %v682, %v825
      %v897 = vcombine.high %v682, %v825
      %v899 = vunpack.c.l.s4 1983009808
      %v900 = vunpack.c.0.s8 %v899
      %v901 = vlaneseq
      %v902 = vshrl.u32 %v901, 7
      %v903 = vsub.s32 %v900, %v902
      %v904 = vrot.slane %v896, %v903
      %v906 = vunpack.c.l.s4 1983009808
      %v907 = vunpack.c.0.s8 %v906
      %v908 = vlaneseq
      %v909 = vshrl.u32 %v908, 7
      %v910 = vsub.s32 %v907, %v909
      %v911 = vrot.slane %v897, %v910
      %v912 = vcombine.low %v813, %v837
      %v913 = vcombine.high %v813, %v837
      %v915 = vunpack.c.l.s4 1983009808
      %v916 = vunpack.c.0.s8 %v915
      %v917 = vlaneseq
      %v918 = vshrl.u32 %v917, 7
      %v919 = vsub.s32 %v916, %v918
      %v920 = vrot.slane %v912, %v919
      %v922 = vunpack.c.l.s4 1983009808
      %v923 = vunpack.c.0.s8 %v922
      %v924 = vlaneseq
      %v925 = vshrl.u32 %v924, 7
      %v926 = vsub.s32 %v923, %v925
      %v927 = vrot.slane %v913, %v926
      %v928 = vcombine.low %v849, %v873
      %v929 = vcombine.high %v849, %v873
      %v931 = vunpack.c.l.s4 1983009808
      %v932 = vunpack.c.0.s8 %v931
      %v933 = vlaneseq
      %v934 = vshrl.u32 %v933, 7
      %v935 = vsub.s32 %v932, %v934
      %v936 = vrot.slane %v928, %v935
      %v938 = vunpack.c.l.s4 1983009808
      %v939 = vunpack.c.0.s8 %v938
      %v940 = vlaneseq
      %v941 = vshrl.u32 %v940, 7
      %v942 = vsub.s32 %v939, %v941
      %v943 = vrot.slane %v929, %v942
      %v944 = vcombine.low %v861, %v885
      %v945 = vcombine.high %v861, %v885
      %v947 = vunpack.c.l.s4 1983009808
      %v948 = vunpack.c.0.s8 %v947
      %v949 = vlaneseq
      %v950 = vshrl.u32 %v949, 7
      %v951 = vsub.s32 %v948, %v950
      %v952 = vrot.slane %v944, %v951
      %v954 = vunpack.c.l.s4 1983009808
      %v955 = vunpack.c.0.s8 %v954
      %v956 = vlaneseq
      %v957 = vshrl.u32 %v956, 7
      %v958 = vsub.s32 %v955, %v957
      %v959 = vrot.slane %v945, %v958
      %v960 = vcombine.low %v904, %v920
      %v961 = vcombine.high %v904, %v920
      %v963 = vunpack.c.l.s4 1934713408
      %v964 = vunpack.c.0.s8 %v963
      %v965 = vlaneseq
      %v966 = vshrl.u32 %v965, 7
      %v967 = vsub.s32 %v964, %v966
      %v968 = vrot.slane %v960, %v967
      %v970 = vunpack.c.l.s4 1934713408
      %v971 = vunpack.c.0.s8 %v970
      %v972 = vlaneseq
      %v973 = vshrl.u32 %v972, 7
      %v974 = vsub.s32 %v971, %v973
      %v975 = vrot.slane %v961, %v974
      %v976 = vcombine.low %v911, %v927
      %v977 = vcombine.high %v911, %v927
      %v979 = vunpack.c.l.s4 1934713408
      %v980 = vunpack.c.0.s8 %v979
      %v981 = vlaneseq
      %v982 = vshrl.u32 %v981, 7
      %v983 = vsub.s32 %v980, %v982
      %v984 = vrot.slane %v976, %v983
      %v986 = vunpack.c.l.s4 1934713408
      %v987 = vunpack.c.0.s8 %v986
      %v988 = vlaneseq
      %v989 = vshrl.u32 %v988, 7
      %v990 = vsub.s32 %v987, %v989
      %v991 = vrot.slane %v977, %v990
      %v992 = vcombine.low %v936, %v952
      %v993 = vcombine.high %v936, %v952
      %v995 = vunpack.c.l.s4 1934713408
      %v996 = vunpack.c.0.s8 %v995
      %v997 = vlaneseq
      %v998 = vshrl.u32 %v997, 7
      %v999 = vsub.s32 %v996, %v998
      %v1000 = vrot.slane %v992, %v999
      %v1002 = vunpack.c.l.s4 1934713408
      %v1003 = vunpack.c.0.s8 %v1002
      %v1004 = vlaneseq
      %v1005 = vshrl.u32 %v1004, 7
      %v1006 = vsub.s32 %v1003, %v1005
      %v1007 = vrot.slane %v993, %v1006
      %v1008 = vcombine.low %v943, %v959
      %v1009 = vcombine.high %v943, %v959
      %v1011 = vunpack.c.l.s4 1934713408
      %v1012 = vunpack.c.0.s8 %v1011
      %v1013 = vlaneseq
      %v1014 = vshrl.u32 %v1013, 7
      %v1015 = vsub.s32 %v1012, %v1014
      %v1016 = vrot.slane %v1008, %v1015
      %v1018 = vunpack.c.l.s4 1934713408
      %v1019 = vunpack.c.0.s8 %v1018
      %v1020 = vlaneseq
      %v1021 = vshrl.u32 %v1020, 7
      %v1022 = vsub.s32 %v1019, %v1021
      %v1023 = vrot.slane %v1009, %v1022
      %v1024 = vcombine.low %v968, %v1000
      %v1025 = vcombine.high %v968, %v1000
      %v1026 = vcombine.low %v975, %v1007
      %v1027 = vcombine.high %v975, %v1007
      %v1028 = vcombine.low %v984, %v1016
      %v1029 = vcombine.high %v984, %v1016
      %v1030 = vcombine.low %v991, %v1023
      %v1031 = vcombine.high %v991, %v1023
      %v1032 = vcombine.low %v687, %v827
      %v1033 = vcombine.high %v687, %v827
      %v1035 = vunpack.c.l.s4 1983009808
      %v1036 = vunpack.c.0.s8 %v1035
      %v1037 = vlaneseq
      %v1038 = vshrl.u32 %v1037, 7
      %v1039 = vsub.s32 %v1036, %v1038
      %v1040 = vrot.slane %v1032, %v1039
      %v1042 = vunpack.c.l.s4 1983009808
      %v1043 = vunpack.c.0.s8 %v1042
      %v1044 = vlaneseq
      %v1045 = vshrl.u32 %v1044, 7
      %v1046 = vsub.s32 %v1043, %v1045
      %v1047 = vrot.slane %v1033, %v1046
      %v1048 = vcombine.low %v815, %v839
      %v1049 = vcombine.high %v815, %v839
      %v1051 = vunpack.c.l.s4 1983009808
      %v1052 = vunpack.c.0.s8 %v1051
      %v1053 = vlaneseq
      %v1054 = vshrl.u32 %v1053, 7
      %v1055 = vsub.s32 %v1052, %v1054
      %v1056 = vrot.slane %v1048, %v1055
      %v1058 = vunpack.c.l.s4 1983009808
      %v1059 = vunpack.c.0.s8 %v1058
      %v1060 = vlaneseq
      %v1061 = vshrl.u32 %v1060, 7
      %v1062 = vsub.s32 %v1059, %v1061
      %v1063 = vrot.slane %v1049, %v1062
      %v1064 = vcombine.low %v851, %v875
      %v1065 = vcombine.high %v851, %v875
      %v1067 = vunpack.c.l.s4 1983009808
      %v1068 = vunpack.c.0.s8 %v1067
      %v1069 = vlaneseq
      %v1070 = vshrl.u32 %v1069, 7
      %v1071 = vsub.s32 %v1068, %v1070
      %v1072 = vrot.slane %v1064, %v1071
      %v1074 = vunpack.c.l.s4 1983009808
      %v1075 = vunpack.c.0.s8 %v1074
      %v1076 = vlaneseq
      %v1077 = vshrl.u32 %v1076, 7
      %v1078 = vsub.s32 %v1075, %v1077
      %v1079 = vrot.slane %v1065, %v1078
      %v1080 = vcombine.low %v863, %v887
      %v1081 = vcombine.high %v863, %v887
      %v1083 = vunpack.c.l.s4 1983009808
      %v1084 = vunpack.c.0.s8 %v1083
      %v1085 = vlaneseq
      %v1086 = vshrl.u32 %v1085, 7
      %v1087 = vsub.s32 %v1084, %v1086
      %v1088 = vrot.slane %v1080, %v1087
      %v1090 = vunpack.c.l.s4 1983009808
      %v1091 = vunpack.c.0.s8 %v1090
      %v1092 = vlaneseq
      %v1093 = vshrl.u32 %v1092, 7
      %v1094 = vsub.s32 %v1091, %v1093
      %v1095 = vrot.slane %v1081, %v1094
      %v1096 = vcombine.low %v1040, %v1056
      %v1097 = vcombine.high %v1040, %v1056
      %v1099 = vunpack.c.l.s4 1934713408
      %v1100 = vunpack.c.0.s8 %v1099
      %v1101 = vlaneseq
      %v1102 = vshrl.u32 %v1101, 7
      %v1103 = vsub.s32 %v1100, %v1102
      %v1104 = vrot.slane %v1096, %v1103
      %v1106 = vunpack.c.l.s4 1934713408
      %v1107 = vunpack.c.0.s8 %v1106
      %v1108 = vlaneseq
      %v1109 = vshrl.u32 %v1108, 7
      %v1110 = vsub.s32 %v1107, %v1109
      %v1111 = vrot.slane %v1097, %v1110
      %v1112 = vcombine.low %v1047, %v1063
      %v1113 = vcombine.high %v1047, %v1063
      %v1115 = vunpack.c.l.s4 1934713408
      %v1116 = vunpack.c.0.s8 %v1115
      %v1117 = vlaneseq
      %v1118 = vshrl.u32 %v1117, 7
      %v1119 = vsub.s32 %v1116, %v1118
      %v1120 = vrot.slane %v1112, %v1119
      %v1122 = vunpack.c.l.s4 1934713408
      %v1123 = vunpack.c.0.s8 %v1122
      %v1124 = vlaneseq
      %v1125 = vshrl.u32 %v1124, 7
      %v1126 = vsub.s32 %v1123, %v1125
      %v1127 = vrot.slane %v1113, %v1126
      %v1128 = vcombine.low %v1072, %v1088
      %v1129 = vcombine.high %v1072, %v1088
      %v1131 = vunpack.c.l.s4 1934713408
      %v1132 = vunpack.c.0.s8 %v1131
      %v1133 = vlaneseq
      %v1134 = vshrl.u32 %v1133, 7
      %v1135 = vsub.s32 %v1132, %v1134
      %v1136 = vrot.slane %v1128, %v1135
      %v1138 = vunpack.c.l.s4 1934713408
      %v1139 = vunpack.c.0.s8 %v1138
      %v1140 = vlaneseq
      %v1141 = vshrl.u32 %v1140, 7
      %v1142 = vsub.s32 %v1139, %v1141
      %v1143 = vrot.slane %v1129, %v1142
      %v1144 = vcombine.low %v1079, %v1095
      %v1145 = vcombine.high %v1079, %v1095
      %v1147 = vunpack.c.l.s4 1934713408
      %v1148 = vunpack.c.0.s8 %v1147
      %v1149 = vlaneseq
      %v1150 = vshrl.u32 %v1149, 7
      %v1151 = vsub.s32 %v1148, %v1150
      %v1152 = vrot.slane %v1144, %v1151
      %v1154 = vunpack.c.l.s4 1934713408
      %v1155 = vunpack.c.0.s8 %v1154
      %v1156 = vlaneseq
      %v1157 = vshrl.u32 %v1156, 7
      %v1158 = vsub.s32 %v1155, %v1157
      %v1159 = vrot.slane %v1145, %v1158
      %v1160 = vcombine.low %v1104, %v1136
      %v1161 = vcombine.high %v1104, %v1136
      %v1162 = vcombine.low %v1111, %v1143
      %v1163 = vcombine.high %v1111, %v1143
      %v1164 = vcombine.low %v1120, %v1152
      %v1165 = vcombine.high %v1120, %v1152
      %v1166 = vcombine.low %v1127, %v1159
      %v1167 = vcombine.high %v1127, %v1159
      %v1168 = vcombine.low %v692, %v829
      %v1169 = vcombine.high %v692, %v829
      %v1171 = vunpack.c.l.s4 1983009808
      %v1172 = vunpack.c.0.s8 %v1171
      %v1173 = vlaneseq
      %v1174 = vshrl.u32 %v1173, 7
      %v1175 = vsub.s32 %v1172, %v1174
      %v1176 = vrot.slane %v1168, %v1175
      %v1178 = vunpack.c.l.s4 1983009808
      %v1179 = vunpack.c.0.s8 %v1178
      %v1180 = vlaneseq
      %v1181 = vshrl.u32 %v1180, 7
      %v1182 = vsub.s32 %v1179, %v1181
      %v1183 = vrot.slane %v1169, %v1182
      %v1184 = vcombine.low %v817, %v841
      %v1185 = vcombine.high %v817, %v841
      %v1187 = vunpack.c.l.s4 1983009808
      %v1188 = vunpack.c.0.s8 %v1187
      %v1189 = vlaneseq
      %v1190 = vshrl.u32 %v1189, 7
      %v1191 = vsub.s32 %v1188, %v1190
      %v1192 = vrot.slane %v1184, %v1191
      %v1194 = vunpack.c.l.s4 1983009808
      %v1195 = vunpack.c.0.s8 %v1194
      %v1196 = vlaneseq
      %v1197 = vshrl.u32 %v1196, 7
      %v1198 = vsub.s32 %v1195, %v1197
      %v1199 = vrot.slane %v1185, %v1198
      %v1200 = vcombine.low %v853, %v877
      %v1201 = vcombine.high %v853, %v877
      %v1203 = vunpack.c.l.s4 1983009808
      %v1204 = vunpack.c.0.s8 %v1203
      %v1205 = vlaneseq
      %v1206 = vshrl.u32 %v1205, 7
      %v1207 = vsub.s32 %v1204, %v1206
      %v1208 = vrot.slane %v1200, %v1207
      %v1210 = vunpack.c.l.s4 1983009808
      %v1211 = vunpack.c.0.s8 %v1210
      %v1212 = vlaneseq
      %v1213 = vshrl.u32 %v1212, 7
      %v1214 = vsub.s32 %v1211, %v1213
      %v1215 = vrot.slane %v1201, %v1214
      %v1216 = vcombine.low %v865, %v889
      %v1217 = vcombine.high %v865, %v889
      %v1219 = vunpack.c.l.s4 1983009808
      %v1220 = vunpack.c.0.s8 %v1219
      %v1221 = vlaneseq
      %v1222 = vshrl.u32 %v1221, 7
      %v1223 = vsub.s32 %v1220, %v1222
      %v1224 = vrot.slane %v1216, %v1223
      %v1226 = vunpack.c.l.s4 1983009808
      %v1227 = vunpack.c.0.s8 %v1226
      %v1228 = vlaneseq
      %v1229 = vshrl.u32 %v1228, 7
      %v1230 = vsub.s32 %v1227, %v1229
      %v1231 = vrot.slane %v1217, %v1230
      %v1232 = vcombine.low %v1176, %v1192
      %v1233 = vcombine.high %v1176, %v1192
      %v1235 = vunpack.c.l.s4 1934713408
      %v1236 = vunpack.c.0.s8 %v1235
      %v1237 = vlaneseq
      %v1238 = vshrl.u32 %v1237, 7
      %v1239 = vsub.s32 %v1236, %v1238
      %v1240 = vrot.slane %v1232, %v1239
      %v1242 = vunpack.c.l.s4 1934713408
      %v1243 = vunpack.c.0.s8 %v1242
      %v1244 = vlaneseq
      %v1245 = vshrl.u32 %v1244, 7
      %v1246 = vsub.s32 %v1243, %v1245
      %v1247 = vrot.slane %v1233, %v1246
      %v1248 = vcombine.low %v1183, %v1199
      %v1249 = vcombine.high %v1183, %v1199
      %v1251 = vunpack.c.l.s4 1934713408
      %v1252 = vunpack.c.0.s8 %v1251
      %v1253 = vlaneseq
      %v1254 = vshrl.u32 %v1253, 7
      %v1255 = vsub.s32 %v1252, %v1254
      %v1256 = vrot.slane %v1248, %v1255
      %v1258 = vunpack.c.l.s4 1934713408
      %v1259 = vunpack.c.0.s8 %v1258
      %v1260 = vlaneseq
      %v1261 = vshrl.u32 %v1260, 7
      %v1262 = vsub.s32 %v1259, %v1261
      %v1263 = vrot.slane %v1249, %v1262
      %v1264 = vcombine.low %v1208, %v1224
      %v1265 = vcombine.high %v1208, %v1224
      %v1267 = vunpack.c.l.s4 1934713408
      %v1268 = vunpack.c.0.s8 %v1267
      %v1269 = vlaneseq
      %v1270 = vshrl.u32 %v1269, 7
      %v1271 = vsub.s32 %v1268, %v1270
      %v1272 = vrot.slane %v1264, %v1271
      %v1274 = vunpack.c.l.s4 1934713408
      %v1275 = vunpack.c.0.s8 %v1274
      %v1276 = vlaneseq
      %v1277 = vshrl.u32 %v1276, 7
      %v1278 = vsub.s32 %v1275, %v1277
      %v1279 = vrot.slane %v1265, %v1278
      %v1280 = vcombine.low %v1215, %v1231
      %v1281 = vcombine.high %v1215, %v1231
      %v1283 = vunpack.c.l.s4 1934713408
      %v1284 = vunpack.c.0.s8 %v1283
      %v1285 = vlaneseq
      %v1286 = vshrl.u32 %v1285, 7
      %v1287 = vsub.s32 %v1284, %v1286
      %v1288 = vrot.slane %v1280, %v1287
      %v1290 = vunpack.c.l.s4 1934713408
      %v1291 = vunpack.c.0.s8 %v1290
      %v1292 = vlaneseq
      %v1293 = vshrl.u32 %v1292, 7
      %v1294 = vsub.s32 %v1291, %v1293
      %v1295 = vrot.slane %v1281, %v1294
      %v1296 = vcombine.low %v1240, %v1272
      %v1297 = vcombine.high %v1240, %v1272
      %v1298 = vcombine.low %v1247, %v1279
      %v1299 = vcombine.high %v1247, %v1279
      %v1300 = vcombine.low %v1256, %v1288
      %v1301 = vcombine.high %v1256, %v1288
      %v1302 = vcombine.low %v1263, %v1295
      %v1303 = vcombine.high %v1263, %v1295
      %v1304 = vcombine.low %v697, %v831
      %v1305 = vcombine.high %v697, %v831
      %v1307 = vunpack.c.l.s4 1983009808
      %v1308 = vunpack.c.0.s8 %v1307
      %v1309 = vlaneseq
      %v1310 = vshrl.u32 %v1309, 7
      %v1311 = vsub.s32 %v1308, %v1310
      %v1312 = vrot.slane %v1304, %v1311
      %v1314 = vunpack.c.l.s4 1983009808
      %v1315 = vunpack.c.0.s8 %v1314
      %v1316 = vlaneseq
      %v1317 = vshrl.u32 %v1316, 7
      %v1318 = vsub.s32 %v1315, %v1317
      %v1319 = vrot.slane %v1305, %v1318
      %v1320 = vcombine.low %v819, %v843
      %v1321 = vcombine.high %v819, %v843
      %v1323 = vunpack.c.l.s4 1983009808
      %v1324 = vunpack.c.0.s8 %v1323
      %v1325 = vlaneseq
      %v1326 = vshrl.u32 %v1325, 7
      %v1327 = vsub.s32 %v1324, %v1326
      %v1328 = vrot.slane %v1320, %v1327
      %v1330 = vunpack.c.l.s4 1983009808
      %v1331 = vunpack.c.0.s8 %v1330
      %v1332 = vlaneseq
      %v1333 = vshrl.u32 %v1332, 7
      %v1334 = vsub.s32 %v1331, %v1333
      %v1335 = vrot.slane %v1321, %v1334
      %v1336 = vcombine.low %v855, %v879
      %v1337 = vcombine.high %v855, %v879
      %v1339 = vunpack.c.l.s4 1983009808
      %v1340 = vunpack.c.0.s8 %v1339
      %v1341 = vlaneseq
      %v1342 = vshrl.u32 %v1341, 7
      %v1343 = vsub.s32 %v1340, %v1342
      %v1344 = vrot.slane %v1336, %v1343
      %v1346 = vunpack.c.l.s4 1983009808
      %v1347 = vunpack.c.0.s8 %v1346
      %v1348 = vlaneseq
      %v1349 = vshrl.u32 %v1348, 7
      %v1350 = vsub.s32 %v1347, %v1349
      %v1351 = vrot.slane %v1337, %v1350
      %v1352 = vcombine.low %v867, %v891
      %v1353 = vcombine.high %v867, %v891
      %v1355 = vunpack.c.l.s4 1983009808
      %v1356 = vunpack.c.0.s8 %v1355
      %v1357 = vlaneseq
      %v1358 = vshrl.u32 %v1357, 7
      %v1359 = vsub.s32 %v1356, %v1358
      %v1360 = vrot.slane %v1352, %v1359
      %v1362 = vunpack.c.l.s4 1983009808
      %v1363 = vunpack.c.0.s8 %v1362
      %v1364 = vlaneseq
      %v1365 = vshrl.u32 %v1364, 7
      %v1366 = vsub.s32 %v1363, %v1365
      %v1367 = vrot.slane %v1353, %v1366
      %v1368 = vcombine.low %v1312, %v1328
      %v1369 = vcombine.high %v1312, %v1328
      %v1371 = vunpack.c.l.s4 1934713408
      %v1372 = vunpack.c.0.s8 %v1371
      %v1373 = vlaneseq
      %v1374 = vshrl.u32 %v1373, 7
      %v1375 = vsub.s32 %v1372, %v1374
      %v1376 = vrot.slane %v1368, %v1375
      %v1378 = vunpack.c.l.s4 1934713408
      %v1379 = vunpack.c.0.s8 %v1378
      %v1380 = vlaneseq
      %v1381 = vshrl.u32 %v1380, 7
      %v1382 = vsub.s32 %v1379, %v1381
      %v1383 = vrot.slane %v1369, %v1382
      %v1384 = vcombine.low %v1319, %v1335
      %v1385 = vcombine.high %v1319, %v1335
      %v1387 = vunpack.c.l.s4 1934713408
      %v1388 = vunpack.c.0.s8 %v1387
      %v1389 = vlaneseq
      %v1390 = vshrl.u32 %v1389, 7
      %v1391 = vsub.s32 %v1388, %v1390
      %v1392 = vrot.slane %v1384, %v1391
      %v1394 = vunpack.c.l.s4 1934713408
      %v1395 = vunpack.c.0.s8 %v1394
      %v1396 = vlaneseq
      %v1397 = vshrl.u32 %v1396, 7
      %v1398 = vsub.s32 %v1395, %v1397
      %v1399 = vrot.slane %v1385, %v1398
      %v1400 = vcombine.low %v1344, %v1360
      %v1401 = vcombine.high %v1344, %v1360
      %v1403 = vunpack.c.l.s4 1934713408
      %v1404 = vunpack.c.0.s8 %v1403
      %v1405 = vlaneseq
      %v1406 = vshrl.u32 %v1405, 7
      %v1407 = vsub.s32 %v1404, %v1406
      %v1408 = vrot.slane %v1400, %v1407
      %v1410 = vunpack.c.l.s4 1934713408
      %v1411 = vunpack.c.0.s8 %v1410
      %v1412 = vlaneseq
      %v1413 = vshrl.u32 %v1412, 7
      %v1414 = vsub.s32 %v1411, %v1413
      %v1415 = vrot.slane %v1401, %v1414
      %v1416 = vcombine.low %v1351, %v1367
      %v1417 = vcombine.high %v1351, %v1367
      %v1419 = vunpack.c.l.s4 1934713408
      %v1420 = vunpack.c.0.s8 %v1419
      %v1421 = vlaneseq
      %v1422 = vshrl.u32 %v1421, 7
      %v1423 = vsub.s32 %v1420, %v1422
      %v1424 = vrot.slane %v1416, %v1423
      %v1426 = vunpack.c.l.s4 1934713408
      %v1427 = vunpack.c.0.s8 %v1426
      %v1428 = vlaneseq
      %v1429 = vshrl.u32 %v1428, 7
      %v1430 = vsub.s32 %v1427, %v1429
      %v1431 = vrot.slane %v1417, %v1430
      %v1432 = vcombine.low %v1376, %v1408
      %v1433 = vcombine.high %v1376, %v1408
      %v1434 = vcombine.low %v1383, %v1415
      %v1435 = vcombine.high %v1383, %v1415
      %v1436 = vcombine.low %v1392, %v1424
      %v1437 = vcombine.high %v1392, %v1424
      %v1438 = vcombine.low %v1399, %v1431
      %v1439 = vcombine.high %v1399, %v1431
      %v1440 = vcombine.low %v1024, %v1026
      %v1441 = vcombine.high %v1024, %v1026
      %v1443 = vunpack.c.l.s4 1983009808
      %v1444 = vunpack.c.0.s8 %v1443
      %v1445 = vlaneseq
      %v1446 = vshrl.u32 %v1445, 7
      %v1447 = vsub.s32 %v1444, %v1446
      %v1448 = vrot.slane %v1440, %v1447
      %v1450 = vunpack.c.l.s4 1983009808
      %v1451 = vunpack.c.0.s8 %v1450
      %v1452 = vlaneseq
      %v1453 = vshrl.u32 %v1452, 7
      %v1454 = vsub.s32 %v1451, %v1453
      %v1455 = vrot.slane %v1441, %v1454
      %v1456 = vcombine.low %v1025, %v1027
      %v1457 = vcombine.high %v1025, %v1027
      %v1459 = vunpack.c.l.s4 1983009808
      %v1460 = vunpack.c.0.s8 %v1459
      %v1461 = vlaneseq
      %v1462 = vshrl.u32 %v1461, 7
      %v1463 = vsub.s32 %v1460, %v1462
      %v1464 = vrot.slane %v1456, %v1463
      %v1466 = vunpack.c.l.s4 1983009808
      %v1467 = vunpack.c.0.s8 %v1466
      %v1468 = vlaneseq
      %v1469 = vshrl.u32 %v1468, 7
      %v1470 = vsub.s32 %v1467, %v1469
      %v1471 = vrot.slane %v1457, %v1470
      %v1472 = vcombine.low %v1028, %v1030
      %v1473 = vcombine.high %v1028, %v1030
      %v1475 = vunpack.c.l.s4 1983009808
      %v1476 = vunpack.c.0.s8 %v1475
      %v1477 = vlaneseq
      %v1478 = vshrl.u32 %v1477, 7
      %v1479 = vsub.s32 %v1476, %v1478
      %v1480 = vrot.slane %v1472, %v1479
      %v1482 = vunpack.c.l.s4 1983009808
      %v1483 = vunpack.c.0.s8 %v1482
      %v1484 = vlaneseq
      %v1485 = vshrl.u32 %v1484, 7
      %v1486 = vsub.s32 %v1483, %v1485
      %v1487 = vrot.slane %v1473, %v1486
      %v1488 = vcombine.low %v1029, %v1031
      %v1489 = vcombine.high %v1029, %v1031
      %v1491 = vunpack.c.l.s4 1983009808
      %v1492 = vunpack.c.0.s8 %v1491
      %v1493 = vlaneseq
      %v1494 = vshrl.u32 %v1493, 7
      %v1495 = vsub.s32 %v1492, %v1494
      %v1496 = vrot.slane %v1488, %v1495
      %v1498 = vunpack.c.l.s4 1983009808
      %v1499 = vunpack.c.0.s8 %v1498
      %v1500 = vlaneseq
      %v1501 = vshrl.u32 %v1500, 7
      %v1502 = vsub.s32 %v1499, %v1501
      %v1503 = vrot.slane %v1489, %v1502
      %v1504 = vcombine.low %v1448, %v1464
      %v1505 = vcombine.high %v1448, %v1464
      %v1507 = vunpack.c.l.s4 1934713408
      %v1508 = vunpack.c.0.s8 %v1507
      %v1509 = vlaneseq
      %v1510 = vshrl.u32 %v1509, 7
      %v1511 = vsub.s32 %v1508, %v1510
      %v1512 = vrot.slane %v1504, %v1511
      %v1514 = vunpack.c.l.s4 1934713408
      %v1515 = vunpack.c.0.s8 %v1514
      %v1516 = vlaneseq
      %v1517 = vshrl.u32 %v1516, 7
      %v1518 = vsub.s32 %v1515, %v1517
      %v1519 = vrot.slane %v1505, %v1518
      %v1520 = vcombine.low %v1455, %v1471
      %v1521 = vcombine.high %v1455, %v1471
      %v1523 = vunpack.c.l.s4 1934713408
      %v1524 = vunpack.c.0.s8 %v1523
      %v1525 = vlaneseq
      %v1526 = vshrl.u32 %v1525, 7
      %v1527 = vsub.s32 %v1524, %v1526
      %v1528 = vrot.slane %v1520, %v1527
      %v1530 = vunpack.c.l.s4 1934713408
      %v1531 = vunpack.c.0.s8 %v1530
      %v1532 = vlaneseq
      %v1533 = vshrl.u32 %v1532, 7
      %v1534 = vsub.s32 %v1531, %v1533
      %v1535 = vrot.slane %v1521, %v1534
      %v1536 = vcombine.low %v1480, %v1496
      %v1537 = vcombine.high %v1480, %v1496
      %v1539 = vunpack.c.l.s4 1934713408
      %v1540 = vunpack.c.0.s8 %v1539
      %v1541 = vlaneseq
      %v1542 = vshrl.u32 %v1541, 7
      %v1543 = vsub.s32 %v1540, %v1542
      %v1544 = vrot.slane %v1536, %v1543
      %v1546 = vunpack.c.l.s4 1934713408
      %v1547 = vunpack.c.0.s8 %v1546
      %v1548 = vlaneseq
      %v1549 = vshrl.u32 %v1548, 7
      %v1550 = vsub.s32 %v1547, %v1549
      %v1551 = vrot.slane %v1537, %v1550
      %v1552 = vcombine.low %v1487, %v1503
      %v1553 = vcombine.high %v1487, %v1503
      %v1555 = vunpack.c.l.s4 1934713408
      %v1556 = vunpack.c.0.s8 %v1555
      %v1557 = vlaneseq
      %v1558 = vshrl.u32 %v1557, 7
      %v1559 = vsub.s32 %v1556, %v1558
      %v1560 = vrot.slane %v1552, %v1559
      %v1562 = vunpack.c.l.s4 1934713408
      %v1563 = vunpack.c.0.s8 %v1562
      %v1564 = vlaneseq
      %v1565 = vshrl.u32 %v1564, 7
      %v1566 = vsub.s32 %v1563, %v1565
      %v1567 = vrot.slane %v1553, %v1566
      %v1568 = vcombine.low %v1512, %v1544
      %v1569 = vcombine.high %v1512, %v1544
      %v1570 = vcombine.low %v1519, %v1551
      %v1571 = vcombine.high %v1519, %v1551
      %v1572 = vcombine.low %v1528, %v1560
      %v1573 = vcombine.high %v1528, %v1560
      %v1574 = vcombine.low %v1535, %v1567
      %v1575 = vcombine.high %v1535, %v1567
      %v1576 = vcombine.low %v1160, %v1162
      %v1577 = vcombine.high %v1160, %v1162
      %v1579 = vunpack.c.l.s4 1983009808
      %v1580 = vunpack.c.0.s8 %v1579
      %v1581 = vlaneseq
      %v1582 = vshrl.u32 %v1581, 7
      %v1583 = vsub.s32 %v1580, %v1582
      %v1584 = vrot.slane %v1576, %v1583
      %v1586 = vunpack.c.l.s4 1983009808
      %v1587 = vunpack.c.0.s8 %v1586
      %v1588 = vlaneseq
      %v1589 = vshrl.u32 %v1588, 7
      %v1590 = vsub.s32 %v1587, %v1589
      %v1591 = vrot.slane %v1577, %v1590
      %v1592 = vcombine.low %v1161, %v1163
      %v1593 = vcombine.high %v1161, %v1163
      %v1595 = vunpack.c.l.s4 1983009808
      %v1596 = vunpack.c.0.s8 %v1595
      %v1597 = vlaneseq
      %v1598 = vshrl.u32 %v1597, 7
      %v1599 = vsub.s32 %v1596, %v1598
      %v1600 = vrot.slane %v1592, %v1599
      %v1602 = vunpack.c.l.s4 1983009808
      %v1603 = vunpack.c.0.s8 %v1602
      %v1604 = vlaneseq
      %v1605 = vshrl.u32 %v1604, 7
      %v1606 = vsub.s32 %v1603, %v1605
      %v1607 = vrot.slane %v1593, %v1606
      %v1608 = vcombine.low %v1164, %v1166
      %v1609 = vcombine.high %v1164, %v1166
      %v1611 = vunpack.c.l.s4 1983009808
      %v1612 = vunpack.c.0.s8 %v1611
      %v1613 = vlaneseq
      %v1614 = vshrl.u32 %v1613, 7
      %v1615 = vsub.s32 %v1612, %v1614
      %v1616 = vrot.slane %v1608, %v1615
      %v1618 = vunpack.c.l.s4 1983009808
      %v1619 = vunpack.c.0.s8 %v1618
      %v1620 = vlaneseq
      %v1621 = vshrl.u32 %v1620, 7
      %v1622 = vsub.s32 %v1619, %v1621
      %v1623 = vrot.slane %v1609, %v1622
      %v1624 = vcombine.low %v1165, %v1167
      %v1625 = vcombine.high %v1165, %v1167
      %v1627 = vunpack.c.l.s4 1983009808
      %v1628 = vunpack.c.0.s8 %v1627
      %v1629 = vlaneseq
      %v1630 = vshrl.u32 %v1629, 7
      %v1631 = vsub.s32 %v1628, %v1630
      %v1632 = vrot.slane %v1624, %v1631
      %v1634 = vunpack.c.l.s4 1983009808
      %v1635 = vunpack.c.0.s8 %v1634
      %v1636 = vlaneseq
      %v1637 = vshrl.u32 %v1636, 7
      %v1638 = vsub.s32 %v1635, %v1637
      %v1639 = vrot.slane %v1625, %v1638
      %v1640 = vcombine.low %v1584, %v1600
      %v1641 = vcombine.high %v1584, %v1600
      %v1643 = vunpack.c.l.s4 1934713408
      %v1644 = vunpack.c.0.s8 %v1643
      %v1645 = vlaneseq
      %v1646 = vshrl.u32 %v1645, 7
      %v1647 = vsub.s32 %v1644, %v1646
      %v1648 = vrot.slane %v1640, %v1647
      %v1650 = vunpack.c.l.s4 1934713408
      %v1651 = vunpack.c.0.s8 %v1650
      %v1652 = vlaneseq
      %v1653 = vshrl.u32 %v1652, 7
      %v1654 = vsub.s32 %v1651, %v1653
      %v1655 = vrot.slane %v1641, %v1654
      %v1656 = vcombine.low %v1591, %v1607
      %v1657 = vcombine.high %v1591, %v1607
      %v1659 = vunpack.c.l.s4 1934713408
      %v1660 = vunpack.c.0.s8 %v1659
      %v1661 = vlaneseq
      %v1662 = vshrl.u32 %v1661, 7
      %v1663 = vsub.s32 %v1660, %v1662
      %v1664 = vrot.slane %v1656, %v1663
      %v1666 = vunpack.c.l.s4 1934713408
      %v1667 = vunpack.c.0.s8 %v1666
      %v1668 = vlaneseq
      %v1669 = vshrl.u32 %v1668, 7
      %v1670 = vsub.s32 %v1667, %v1669
      %v1671 = vrot.slane %v1657, %v1670
      %v1672 = vcombine.low %v1616, %v1632
      %v1673 = vcombine.high %v1616, %v1632
      %v1675 = vunpack.c.l.s4 1934713408
      %v1676 = vunpack.c.0.s8 %v1675
      %v1677 = vlaneseq
      %v1678 = vshrl.u32 %v1677, 7
      %v1679 = vsub.s32 %v1676, %v1678
      %v1680 = vrot.slane %v1672, %v1679
      %v1682 = vunpack.c.l.s4 1934713408
      %v1683 = vunpack.c.0.s8 %v1682
      %v1684 = vlaneseq
      %v1685 = vshrl.u32 %v1684, 7
      %v1686 = vsub.s32 %v1683, %v1685
      %v1687 = vrot.slane %v1673, %v1686
      %v1688 = vcombine.low %v1623, %v1639
      %v1689 = vcombine.high %v1623, %v1639
      %v1691 = vunpack.c.l.s4 1934713408
      %v1692 = vunpack.c.0.s8 %v1691
      %v1693 = vlaneseq
      %v1694 = vshrl.u32 %v1693, 7
      %v1695 = vsub.s32 %v1692, %v1694
      %v1696 = vrot.slane %v1688, %v1695
      %v1698 = vunpack.c.l.s4 1934713408
      %v1699 = vunpack.c.0.s8 %v1698
      %v1700 = vlaneseq
      %v1701 = vshrl.u32 %v1700, 7
      %v1702 = vsub.s32 %v1699, %v1701
      %v1703 = vrot.slane %v1689, %v1702
      %v1704 = vcombine.low %v1648, %v1680
      %v1705 = vcombine.high %v1648, %v1680
      %v1706 = vcombine.low %v1655, %v1687
      %v1707 = vcombine.high %v1655, %v1687
      %v1708 = vcombine.low %v1664, %v1696
      %v1709 = vcombine.high %v1664, %v1696
      %v1710 = vcombine.low %v1671, %v1703
      %v1711 = vcombine.high %v1671, %v1703
      %v1712 = vcombine.low %v1296, %v1298
      %v1713 = vcombine.high %v1296, %v1298
      %v1715 = vunpack.c.l.s4 1983009808
      %v1716 = vunpack.c.0.s8 %v1715
      %v1717 = vlaneseq
      %v1718 = vshrl.u32 %v1717, 7
      %v1719 = vsub.s32 %v1716, %v1718
      %v1720 = vrot.slane %v1712, %v1719
      %v1722 = vunpack.c.l.s4 1983009808
      %v1723 = vunpack.c.0.s8 %v1722
      %v1724 = vlaneseq
      %v1725 = vshrl.u32 %v1724, 7
      %v1726 = vsub.s32 %v1723, %v1725
      %v1727 = vrot.slane %v1713, %v1726
      %v1728 = vcombine.low %v1297, %v1299
      %v1729 = vcombine.high %v1297, %v1299
      %v1731 = vunpack.c.l.s4 1983009808
      %v1732 = vunpack.c.0.s8 %v1731
      %v1733 = vlaneseq
      %v1734 = vshrl.u32 %v1733, 7
      %v1735 = vsub.s32 %v1732, %v1734
      %v1736 = vrot.slane %v1728, %v1735
      %v1738 = vunpack.c.l.s4 1983009808
      %v1739 = vunpack.c.0.s8 %v1738
      %v1740 = vlaneseq
      %v1741 = vshrl.u32 %v1740, 7
      %v1742 = vsub.s32 %v1739, %v1741
      %v1743 = vrot.slane %v1729, %v1742
      %v1744 = vcombine.low %v1300, %v1302
      %v1745 = vcombine.high %v1300, %v1302
      %v1747 = vunpack.c.l.s4 1983009808
      %v1748 = vunpack.c.0.s8 %v1747
      %v1749 = vlaneseq
      %v1750 = vshrl.u32 %v1749, 7
      %v1751 = vsub.s32 %v1748, %v1750
      %v1752 = vrot.slane %v1744, %v1751
      %v1754 = vunpack.c.l.s4 1983009808
      %v1755 = vunpack.c.0.s8 %v1754
      %v1756 = vlaneseq
      %v1757 = vshrl.u32 %v1756, 7
      %v1758 = vsub.s32 %v1755, %v1757
      %v1759 = vrot.slane %v1745, %v1758
      %v1760 = vcombine.low %v1301, %v1303
      %v1761 = vcombine.high %v1301, %v1303
      %v1763 = vunpack.c.l.s4 1983009808
      %v1764 = vunpack.c.0.s8 %v1763
      %v1765 = vlaneseq
      %v1766 = vshrl.u32 %v1765, 7
      %v1767 = vsub.s32 %v1764, %v1766
      %v1768 = vrot.slane %v1760, %v1767
      %v1770 = vunpack.c.l.s4 1983009808
      %v1771 = vunpack.c.0.s8 %v1770
      %v1772 = vlaneseq
      %v1773 = vshrl.u32 %v1772, 7
      %v1774 = vsub.s32 %v1771, %v1773
      %v1775 = vrot.slane %v1761, %v1774
      %v1776 = vcombine.low %v1720, %v1736
      %v1777 = vcombine.high %v1720, %v1736
      %v1779 = vunpack.c.l.s4 1934713408
      %v1780 = vunpack.c.0.s8 %v1779
      %v1781 = vlaneseq
      %v1782 = vshrl.u32 %v1781, 7
      %v1783 = vsub.s32 %v1780, %v1782
      %v1784 = vrot.slane %v1776, %v1783
      %v1786 = vunpack.c.l.s4 1934713408
      %v1787 = vunpack.c.0.s8 %v1786
      %v1788 = vlaneseq
      %v1789 = vshrl.u32 %v1788, 7
      %v1790 = vsub.s32 %v1787, %v1789
      %v1791 = vrot.slane %v1777, %v1790
      %v1792 = vcombine.low %v1727, %v1743
      %v1793 = vcombine.high %v1727, %v1743
      %v1795 = vunpack.c.l.s4 1934713408
      %v1796 = vunpack.c.0.s8 %v1795
      %v1797 = vlaneseq
      %v1798 = vshrl.u32 %v1797, 7
      %v1799 = vsub.s32 %v1796, %v1798
      %v1800 = vrot.slane %v1792, %v1799
      %v1802 = vunpack.c.l.s4 1934713408
      %v1803 = vunpack.c.0.s8 %v1802
      %v1804 = vlaneseq
      %v1805 = vshrl.u32 %v1804, 7
      %v1806 = vsub.s32 %v1803, %v1805
      %v1807 = vrot.slane %v1793, %v1806
      %v1808 = vcombine.low %v1752, %v1768
      %v1809 = vcombine.high %v1752, %v1768
      %v1811 = vunpack.c.l.s4 1934713408
      %v1812 = vunpack.c.0.s8 %v1811
      %v1813 = vlaneseq
      %v1814 = vshrl.u32 %v1813, 7
      %v1815 = vsub.s32 %v1812, %v1814
      %v1816 = vrot.slane %v1808, %v1815
      %v1818 = vunpack.c.l.s4 1934713408
      %v1819 = vunpack.c.0.s8 %v1818
      %v1820 = vlaneseq
      %v1821 = vshrl.u32 %v1820, 7
      %v1822 = vsub.s32 %v1819, %v1821
      %v1823 = vrot.slane %v1809, %v1822
      %v1824 = vcombine.low %v1759, %v1775
      %v1825 = vcombine.high %v1759, %v1775
      %v1827 = vunpack.c.l.s4 1934713408
      %v1828 = vunpack.c.0.s8 %v1827
      %v1829 = vlaneseq
      %v1830 = vshrl.u32 %v1829, 7
      %v1831 = vsub.s32 %v1828, %v1830
      %v1832 = vrot.slane %v1824, %v1831
      %v1834 = vunpack.c.l.s4 1934713408
      %v1835 = vunpack.c.0.s8 %v1834
      %v1836 = vlaneseq
      %v1837 = vshrl.u32 %v1836, 7
      %v1838 = vsub.s32 %v1835, %v1837
      %v1839 = vrot.slane %v1825, %v1838
      %v1840 = vcombine.low %v1784, %v1816
      %v1841 = vcombine.high %v1784, %v1816
      %v1842 = vcombine.low %v1791, %v1823
      %v1843 = vcombine.high %v1791, %v1823
      %v1844 = vcombine.low %v1800, %v1832
      %v1845 = vcombine.high %v1800, %v1832
      %v1846 = vcombine.low %v1807, %v1839
      %v1847 = vcombine.high %v1807, %v1839
      %v1848 = vcombine.low %v1432, %v1434
      %v1849 = vcombine.high %v1432, %v1434
      %v1851 = vunpack.c.l.s4 1983009808
      %v1852 = vunpack.c.0.s8 %v1851
      %v1853 = vlaneseq
      %v1854 = vshrl.u32 %v1853, 7
      %v1855 = vsub.s32 %v1852, %v1854
      %v1856 = vrot.slane %v1848, %v1855
      %v1858 = vunpack.c.l.s4 1983009808
      %v1859 = vunpack.c.0.s8 %v1858
      %v1860 = vlaneseq
      %v1861 = vshrl.u32 %v1860, 7
      %v1862 = vsub.s32 %v1859, %v1861
      %v1863 = vrot.slane %v1849, %v1862
      %v1864 = vcombine.low %v1433, %v1435
      %v1865 = vcombine.high %v1433, %v1435
      %v1867 = vunpack.c.l.s4 1983009808
      %v1868 = vunpack.c.0.s8 %v1867
      %v1869 = vlaneseq
      %v1870 = vshrl.u32 %v1869, 7
      %v1871 = vsub.s32 %v1868, %v1870
      %v1872 = vrot.slane %v1864, %v1871
      %v1874 = vunpack.c.l.s4 1983009808
      %v1875 = vunpack.c.0.s8 %v1874
      %v1876 = vlaneseq
      %v1877 = vshrl.u32 %v1876, 7
      %v1878 = vsub.s32 %v1875, %v1877
      %v1879 = vrot.slane %v1865, %v1878
      %v1880 = vcombine.low %v1436, %v1438
      %v1881 = vcombine.high %v1436, %v1438
      %v1883 = vunpack.c.l.s4 1983009808
      %v1884 = vunpack.c.0.s8 %v1883
      %v1885 = vlaneseq
      %v1886 = vshrl.u32 %v1885, 7
      %v1887 = vsub.s32 %v1884, %v1886
      %v1888 = vrot.slane %v1880, %v1887
      %v1890 = vunpack.c.l.s4 1983009808
      %v1891 = vunpack.c.0.s8 %v1890
      %v1892 = vlaneseq
      %v1893 = vshrl.u32 %v1892, 7
      %v1894 = vsub.s32 %v1891, %v1893
      %v1895 = vrot.slane %v1881, %v1894
      %v1896 = vcombine.low %v1437, %v1439
      %v1897 = vcombine.high %v1437, %v1439
      %v1899 = vunpack.c.l.s4 1983009808
      %v1900 = vunpack.c.0.s8 %v1899
      %v1901 = vlaneseq
      %v1902 = vshrl.u32 %v1901, 7
      %v1903 = vsub.s32 %v1900, %v1902
      %v1904 = vrot.slane %v1896, %v1903
      %v1906 = vunpack.c.l.s4 1983009808
      %v1907 = vunpack.c.0.s8 %v1906
      %v1908 = vlaneseq
      %v1909 = vshrl.u32 %v1908, 7
      %v1910 = vsub.s32 %v1907, %v1909
      %v1911 = vrot.slane %v1897, %v1910
      %v1912 = vcombine.low %v1856, %v1872
      %v1913 = vcombine.high %v1856, %v1872
      %v1915 = vunpack.c.l.s4 1934713408
      %v1916 = vunpack.c.0.s8 %v1915
      %v1917 = vlaneseq
      %v1918 = vshrl.u32 %v1917, 7
      %v1919 = vsub.s32 %v1916, %v1918
      %v1920 = vrot.slane %v1912, %v1919
      %v1922 = vunpack.c.l.s4 1934713408
      %v1923 = vunpack.c.0.s8 %v1922
      %v1924 = vlaneseq
      %v1925 = vshrl.u32 %v1924, 7
      %v1926 = vsub.s32 %v1923, %v1925
      %v1927 = vrot.slane %v1913, %v1926
      %v1928 = vcombine.low %v1863, %v1879
      %v1929 = vcombine.high %v1863, %v1879
      %v1931 = vunpack.c.l.s4 1934713408
      %v1932 = vunpack.c.0.s8 %v1931
      %v1933 = vlaneseq
      %v1934 = vshrl.u32 %v1933, 7
      %v1935 = vsub.s32 %v1932, %v1934
      %v1936 = vrot.slane %v1928, %v1935
      %v1938 = vunpack.c.l.s4 1934713408
      %v1939 = vunpack.c.0.s8 %v1938
      %v1940 = vlaneseq
      %v1941 = vshrl.u32 %v1940, 7
      %v1942 = vsub.s32 %v1939, %v1941
      %v1943 = vrot.slane %v1929, %v1942
      %v1944 = vcombine.low %v1888, %v1904
      %v1945 = vcombine.high %v1888, %v1904
      %v1947 = vunpack.c.l.s4 1934713408
      %v1948 = vunpack.c.0.s8 %v1947
      %v1949 = vlaneseq
      %v1950 = vshrl.u32 %v1949, 7
      %v1951 = vsub.s32 %v1948, %v1950
      %v1952 = vrot.slane %v1944, %v1951
      %v1954 = vunpack.c.l.s4 1934713408
      %v1955 = vunpack.c.0.s8 %v1954
      %v1956 = vlaneseq
      %v1957 = vshrl.u32 %v1956, 7
      %v1958 = vsub.s32 %v1955, %v1957
      %v1959 = vrot.slane %v1945, %v1958
      %v1960 = vcombine.low %v1895, %v1911
      %v1961 = vcombine.high %v1895, %v1911
      %v1963 = vunpack.c.l.s4 1934713408
      %v1964 = vunpack.c.0.s8 %v1963
      %v1965 = vlaneseq
      %v1966 = vshrl.u32 %v1965, 7
      %v1967 = vsub.s32 %v1964, %v1966
      %v1968 = vrot.slane %v1960, %v1967
      %v1970 = vunpack.c.l.s4 1934713408
      %v1971 = vunpack.c.0.s8 %v1970
      %v1972 = vlaneseq
      %v1973 = vshrl.u32 %v1972, 7
      %v1974 = vsub.s32 %v1971, %v1973
      %v1975 = vrot.slane %v1961, %v1974
      %v1976 = vcombine.low %v1920, %v1952
      %v1977 = vcombine.high %v1920, %v1952
      %v1978 = vcombine.low %v1927, %v1959
      %v1979 = vcombine.high %v1927, %v1959
      %v1980 = vcombine.low %v1936, %v1968
      %v1981 = vcombine.high %v1936, %v1968
      %v1982 = vcombine.low %v1943, %v1975
      %v1983 = vcombine.high %v1943, %v1975
      %1988 = vrot.lane.b32.xlu0 %v790, 120
      %v1989 = vpop.permute.xlu0 %1988
      %1990 = vrot.lane.b32.xlu0 %v795, 120
      %v1991 = vpop.permute.xlu0 %1990
      %1992 = vrot.lane.b32.xlu0 %v800, 120
      %v1993 = vpop.permute.xlu0 %1992
      %1994 = vrot.lane.b32.xlu0 %v805, 120
      %v1995 = vpop.permute.xlu0 %1994
      %2000 = vrot.lane.b32.xlu0 %v790, 112
      %v2001 = vpop.permute.xlu0 %2000
      %2002 = vrot.lane.b32.xlu0 %v795, 112
      %v2003 = vpop.permute.xlu0 %2002
      %2004 = vrot.lane.b32.xlu0 %v800, 112
      %v2005 = vpop.permute.xlu0 %2004
      %2006 = vrot.lane.b32.xlu0 %v805, 112
      %v2007 = vpop.permute.xlu0 %2006
      %2012 = vrot.lane.b32.xlu0 %v790, 104
      %v2013 = vpop.permute.xlu0 %2012
      %2014 = vrot.lane.b32.xlu0 %v795, 104
      %v2015 = vpop.permute.xlu0 %2014
      %2016 = vrot.lane.b32.xlu0 %v800, 104
      %v2017 = vpop.permute.xlu0 %2016
      %2018 = vrot.lane.b32.xlu0 %v805, 104
      %v2019 = vpop.permute.xlu0 %2018
      %v2024 = vcombine.low %v790, %v2001
      %v2025 = vcombine.high %v790, %v2001
      %v2027 = vunpack.c.l.s4 1983009808
      %v2028 = vunpack.c.0.s8 %v2027
      %v2029 = vlaneseq
      %v2030 = vshrl.u32 %v2029, 7
      %v2031 = vsub.s32 %v2028, %v2030
      %v2032 = vrot.slane %v2024, %v2031
      %v2034 = vunpack.c.l.s4 1983009808
      %v2035 = vunpack.c.0.s8 %v2034
      %v2036 = vlaneseq
      %v2037 = vshrl.u32 %v2036, 7
      %v2038 = vsub.s32 %v2035, %v2037
      %v2039 = vrot.slane %v2025, %v2038
      %v2040 = vcombine.low %v1989, %v2013
      %v2041 = vcombine.high %v1989, %v2013
      %v2043 = vunpack.c.l.s4 1983009808
      %v2044 = vunpack.c.0.s8 %v2043
      %v2045 = vlaneseq
      %v2046 = vshrl.u32 %v2045, 7
      %v2047 = vsub.s32 %v2044, %v2046
      %v2048 = vrot.slane %v2040, %v2047
      %v2050 = vunpack.c.l.s4 1983009808
      %v2051 = vunpack.c.0.s8 %v2050
      %v2052 = vlaneseq
      %v2053 = vshrl.u32 %v2052, 7
      %v2054 = vsub.s32 %v2051, %v2053
      %v2055 = vrot.slane %v2041, %v2054
      %v2056 = vcombine.low %v2032, %v2048
      %v2057 = vcombine.high %v2032, %v2048
      %v2059 = vunpack.c.l.s4 1934713408
      %v2060 = vunpack.c.0.s8 %v2059
      %v2061 = vlaneseq
      %v2062 = vshrl.u32 %v2061, 7
      %v2063 = vsub.s32 %v2060, %v2062
      %v2064 = vrot.slane %v2056, %v2063
      %v2066 = vunpack.c.l.s4 1934713408
      %v2067 = vunpack.c.0.s8 %v2066
      %v2068 = vlaneseq
      %v2069 = vshrl.u32 %v2068, 7
      %v2070 = vsub.s32 %v2067, %v2069
      %v2071 = vrot.slane %v2057, %v2070
      %v2072 = vcombine.low %v2039, %v2055
      %v2073 = vcombine.high %v2039, %v2055
      %v2075 = vunpack.c.l.s4 1934713408
      %v2076 = vunpack.c.0.s8 %v2075
      %v2077 = vlaneseq
      %v2078 = vshrl.u32 %v2077, 7
      %v2079 = vsub.s32 %v2076, %v2078
      %v2080 = vrot.slane %v2072, %v2079
      %v2082 = vunpack.c.l.s4 1934713408
      %v2083 = vunpack.c.0.s8 %v2082
      %v2084 = vlaneseq
      %v2085 = vshrl.u32 %v2084, 7
      %v2086 = vsub.s32 %v2083, %v2085
      %v2087 = vrot.slane %v2073, %v2086
      %v2088 = vcombine.high %v2064, 0.0
      %v2089 = vcombine.high %v2071, 0.0
      %v2090 = vcombine.high %v2080, 0.0
      %v2091 = vcombine.high %v2087, 0.0
      %v2092 = vcombine.low %v795, %v2003
      %v2093 = vcombine.high %v795, %v2003
      %v2095 = vunpack.c.l.s4 1983009808
      %v2096 = vunpack.c.0.s8 %v2095
      %v2097 = vlaneseq
      %v2098 = vshrl.u32 %v2097, 7
      %v2099 = vsub.s32 %v2096, %v2098
      %v2100 = vrot.slane %v2092, %v2099
      %v2102 = vunpack.c.l.s4 1983009808
      %v2103 = vunpack.c.0.s8 %v2102
      %v2104 = vlaneseq
      %v2105 = vshrl.u32 %v2104, 7
      %v2106 = vsub.s32 %v2103, %v2105
      %v2107 = vrot.slane %v2093, %v2106
      %v2108 = vcombine.low %v1991, %v2015
      %v2109 = vcombine.high %v1991, %v2015
      %v2111 = vunpack.c.l.s4 1983009808
      %v2112 = vunpack.c.0.s8 %v2111
      %v2113 = vlaneseq
      %v2114 = vshrl.u32 %v2113, 7
      %v2115 = vsub.s32 %v2112, %v2114
      %v2116 = vrot.slane %v2108, %v2115
      %v2118 = vunpack.c.l.s4 1983009808
      %v2119 = vunpack.c.0.s8 %v2118
      %v2120 = vlaneseq
      %v2121 = vshrl.u32 %v2120, 7
      %v2122 = vsub.s32 %v2119, %v2121
      %v2123 = vrot.slane %v2109, %v2122
      %v2124 = vcombine.low %v2100, %v2116
      %v2125 = vcombine.high %v2100, %v2116
      %v2127 = vunpack.c.l.s4 1934713408
      %v2128 = vunpack.c.0.s8 %v2127
      %v2129 = vlaneseq
      %v2130 = vshrl.u32 %v2129, 7
      %v2131 = vsub.s32 %v2128, %v2130
      %v2132 = vrot.slane %v2124, %v2131
      %v2134 = vunpack.c.l.s4 1934713408
      %v2135 = vunpack.c.0.s8 %v2134
      %v2136 = vlaneseq
      %v2137 = vshrl.u32 %v2136, 7
      %v2138 = vsub.s32 %v2135, %v2137
      %v2139 = vrot.slane %v2125, %v2138
      %v2140 = vcombine.low %v2107, %v2123
      %v2141 = vcombine.high %v2107, %v2123
      %v2143 = vunpack.c.l.s4 1934713408
      %v2144 = vunpack.c.0.s8 %v2143
      %v2145 = vlaneseq
      %v2146 = vshrl.u32 %v2145, 7
      %v2147 = vsub.s32 %v2144, %v2146
      %v2148 = vrot.slane %v2140, %v2147
      %v2150 = vunpack.c.l.s4 1934713408
      %v2151 = vunpack.c.0.s8 %v2150
      %v2152 = vlaneseq
      %v2153 = vshrl.u32 %v2152, 7
      %v2154 = vsub.s32 %v2151, %v2153
      %v2155 = vrot.slane %v2141, %v2154
      %v2156 = vcombine.high %v2132, 0.0
      %v2157 = vcombine.high %v2139, 0.0
      %v2158 = vcombine.high %v2148, 0.0
      %v2159 = vcombine.high %v2155, 0.0
      %v2160 = vcombine.low %v800, %v2005
      %v2161 = vcombine.high %v800, %v2005
      %v2163 = vunpack.c.l.s4 1983009808
      %v2164 = vunpack.c.0.s8 %v2163
      %v2165 = vlaneseq
      %v2166 = vshrl.u32 %v2165, 7
      %v2167 = vsub.s32 %v2164, %v2166
      %v2168 = vrot.slane %v2160, %v2167
      %v2170 = vunpack.c.l.s4 1983009808
      %v2171 = vunpack.c.0.s8 %v2170
      %v2172 = vlaneseq
      %v2173 = vshrl.u32 %v2172, 7
      %v2174 = vsub.s32 %v2171, %v2173
      %v2175 = vrot.slane %v2161, %v2174
      %v2176 = vcombine.low %v1993, %v2017
      %v2177 = vcombine.high %v1993, %v2017
      %v2179 = vunpack.c.l.s4 1983009808
      %v2180 = vunpack.c.0.s8 %v2179
      %v2181 = vlaneseq
      %v2182 = vshrl.u32 %v2181, 7
      %v2183 = vsub.s32 %v2180, %v2182
      %v2184 = vrot.slane %v2176, %v2183
      %v2186 = vunpack.c.l.s4 1983009808
      %v2187 = vunpack.c.0.s8 %v2186
      %v2188 = vlaneseq
      %v2189 = vshrl.u32 %v2188, 7
      %v2190 = vsub.s32 %v2187, %v2189
      %v2191 = vrot.slane %v2177, %v2190
      %v2192 = vcombine.low %v2168, %v2184
      %v2193 = vcombine.high %v2168, %v2184
      %v2195 = vunpack.c.l.s4 1934713408
      %v2196 = vunpack.c.0.s8 %v2195
      %v2197 = vlaneseq
      %v2198 = vshrl.u32 %v2197, 7
      %v2199 = vsub.s32 %v2196, %v2198
      %v2200 = vrot.slane %v2192, %v2199
      %v2202 = vunpack.c.l.s4 1934713408
      %v2203 = vunpack.c.0.s8 %v2202
      %v2204 = vlaneseq
      %v2205 = vshrl.u32 %v2204, 7
      %v2206 = vsub.s32 %v2203, %v2205
      %v2207 = vrot.slane %v2193, %v2206
      %v2208 = vcombine.low %v2175, %v2191
      %v2209 = vcombine.high %v2175, %v2191
      %v2211 = vunpack.c.l.s4 1934713408
      %v2212 = vunpack.c.0.s8 %v2211
      %v2213 = vlaneseq
      %v2214 = vshrl.u32 %v2213, 7
      %v2215 = vsub.s32 %v2212, %v2214
      %v2216 = vrot.slane %v2208, %v2215
      %v2218 = vunpack.c.l.s4 1934713408
      %v2219 = vunpack.c.0.s8 %v2218
      %v2220 = vlaneseq
      %v2221 = vshrl.u32 %v2220, 7
      %v2222 = vsub.s32 %v2219, %v2221
      %v2223 = vrot.slane %v2209, %v2222
      %v2224 = vcombine.high %v2200, 0.0
      %v2225 = vcombine.high %v2207, 0.0
      %v2226 = vcombine.high %v2216, 0.0
      %v2227 = vcombine.high %v2223, 0.0
      %v2228 = vcombine.low %v805, %v2007
      %v2229 = vcombine.high %v805, %v2007
      %v2231 = vunpack.c.l.s4 1983009808
      %v2232 = vunpack.c.0.s8 %v2231
      %v2233 = vlaneseq
      %v2234 = vshrl.u32 %v2233, 7
      %v2235 = vsub.s32 %v2232, %v2234
      %v2236 = vrot.slane %v2228, %v2235
      %v2238 = vunpack.c.l.s4 1983009808
      %v2239 = vunpack.c.0.s8 %v2238
      %v2240 = vlaneseq
      %v2241 = vshrl.u32 %v2240, 7
      %v2242 = vsub.s32 %v2239, %v2241
      %v2243 = vrot.slane %v2229, %v2242
      %v2244 = vcombine.low %v1995, %v2019
      %v2245 = vcombine.high %v1995, %v2019
      %v2247 = vunpack.c.l.s4 1983009808
      %v2248 = vunpack.c.0.s8 %v2247
      %v2249 = vlaneseq
      %v2250 = vshrl.u32 %v2249, 7
      %v2251 = vsub.s32 %v2248, %v2250
      %v2252 = vrot.slane %v2244, %v2251
      %v2254 = vunpack.c.l.s4 1983009808
      %v2255 = vunpack.c.0.s8 %v2254
      %v2256 = vlaneseq
      %v2257 = vshrl.u32 %v2256, 7
      %v2258 = vsub.s32 %v2255, %v2257
      %v2259 = vrot.slane %v2245, %v2258
      %v2260 = vcombine.low %v2236, %v2252
      %v2261 = vcombine.high %v2236, %v2252
      %v2263 = vunpack.c.l.s4 1934713408
      %v2264 = vunpack.c.0.s8 %v2263
      %v2265 = vlaneseq
      %v2266 = vshrl.u32 %v2265, 7
      %v2267 = vsub.s32 %v2264, %v2266
      %v2268 = vrot.slane %v2260, %v2267
      %v2270 = vunpack.c.l.s4 1934713408
      %v2271 = vunpack.c.0.s8 %v2270
      %v2272 = vlaneseq
      %v2273 = vshrl.u32 %v2272, 7
      %v2274 = vsub.s32 %v2271, %v2273
      %v2275 = vrot.slane %v2261, %v2274
      %v2276 = vcombine.low %v2243, %v2259
      %v2277 = vcombine.high %v2243, %v2259
      %v2279 = vunpack.c.l.s4 1934713408
      %v2280 = vunpack.c.0.s8 %v2279
      %v2281 = vlaneseq
      %v2282 = vshrl.u32 %v2281, 7
      %v2283 = vsub.s32 %v2280, %v2282
      %v2284 = vrot.slane %v2276, %v2283
      %v2286 = vunpack.c.l.s4 1934713408
      %v2287 = vunpack.c.0.s8 %v2286
      %v2288 = vlaneseq
      %v2289 = vshrl.u32 %v2288, 7
      %v2290 = vsub.s32 %v2287, %v2289
      %v2291 = vrot.slane %v2277, %v2290
      %v2292 = vcombine.high %v2268, 0.0
      %v2293 = vcombine.high %v2275, 0.0
      %v2294 = vcombine.high %v2284, 0.0
      %v2295 = vcombine.high %v2291, 0.0
      %v2296 = vcombine.low %v2064, %v2071
      %v2298 = vunpack.c.l.s4 1983009808
      %v2299 = vunpack.c.0.s8 %v2298
      %v2300 = vlaneseq
      %v2301 = vshrl.u32 %v2300, 7
      %v2302 = vsub.s32 %v2299, %v2301
      %v2303 = vrot.slane %v2296, %v2302
      %v2304 = vcombine.low %v2088, %v2089
      %v2306 = vunpack.c.l.s4 1983009808
      %v2307 = vunpack.c.0.s8 %v2306
      %v2308 = vlaneseq
      %v2309 = vshrl.u32 %v2308, 7
      %v2310 = vsub.s32 %v2307, %v2309
      %v2311 = vrot.slane %v2304, %v2310
      %v2312 = vcombine.low %v2080, %v2087
      %v2314 = vunpack.c.l.s4 1983009808
      %v2315 = vunpack.c.0.s8 %v2314
      %v2316 = vlaneseq
      %v2317 = vshrl.u32 %v2316, 7
      %v2318 = vsub.s32 %v2315, %v2317
      %v2319 = vrot.slane %v2312, %v2318
      %v2320 = vcombine.low %v2090, %v2091
      %v2322 = vunpack.c.l.s4 1983009808
      %v2323 = vunpack.c.0.s8 %v2322
      %v2324 = vlaneseq
      %v2325 = vshrl.u32 %v2324, 7
      %v2326 = vsub.s32 %v2323, %v2325
      %v2327 = vrot.slane %v2320, %v2326
      %v2328 = vcombine.low %v2303, %v2311
      %v2329 = vcombine.high %v2303, %v2311
      %v2331 = vunpack.c.l.s4 1934713408
      %v2332 = vunpack.c.0.s8 %v2331
      %v2333 = vlaneseq
      %v2334 = vshrl.u32 %v2333, 7
      %v2335 = vsub.s32 %v2332, %v2334
      %v2336 = vrot.slane %v2328, %v2335
      %v2338 = vunpack.c.l.s4 1934713408
      %v2339 = vunpack.c.0.s8 %v2338
      %v2340 = vlaneseq
      %v2341 = vshrl.u32 %v2340, 7
      %v2342 = vsub.s32 %v2339, %v2341
      %v2343 = vrot.slane %v2329, %v2342
      %v2344 = vcombine.low %v2319, %v2327
      %v2345 = vcombine.high %v2319, %v2327
      %v2347 = vunpack.c.l.s4 1934713408
      %v2348 = vunpack.c.0.s8 %v2347
      %v2349 = vlaneseq
      %v2350 = vshrl.u32 %v2349, 7
      %v2351 = vsub.s32 %v2348, %v2350
      %v2352 = vrot.slane %v2344, %v2351
      %v2354 = vunpack.c.l.s4 1934713408
      %v2355 = vunpack.c.0.s8 %v2354
      %v2356 = vlaneseq
      %v2357 = vshrl.u32 %v2356, 7
      %v2358 = vsub.s32 %v2355, %v2357
      %v2359 = vrot.slane %v2345, %v2358
      %v2360 = vcombine.low %v2336, %v2352
      %v2361 = vcombine.high %v2336, %v2352
      %v2362 = vcombine.low %v2343, %v2359
      %v2363 = vcombine.high %v2343, %v2359
      %v2364 = vcombine.low %v2132, %v2139
      %v2366 = vunpack.c.l.s4 1983009808
      %v2367 = vunpack.c.0.s8 %v2366
      %v2368 = vlaneseq
      %v2369 = vshrl.u32 %v2368, 7
      %v2370 = vsub.s32 %v2367, %v2369
      %v2371 = vrot.slane %v2364, %v2370
      %v2372 = vcombine.low %v2156, %v2157
      %v2374 = vunpack.c.l.s4 1983009808
      %v2375 = vunpack.c.0.s8 %v2374
      %v2376 = vlaneseq
      %v2377 = vshrl.u32 %v2376, 7
      %v2378 = vsub.s32 %v2375, %v2377
      %v2379 = vrot.slane %v2372, %v2378
      %v2380 = vcombine.low %v2148, %v2155
      %v2382 = vunpack.c.l.s4 1983009808
      %v2383 = vunpack.c.0.s8 %v2382
      %v2384 = vlaneseq
      %v2385 = vshrl.u32 %v2384, 7
      %v2386 = vsub.s32 %v2383, %v2385
      %v2387 = vrot.slane %v2380, %v2386
      %v2388 = vcombine.low %v2158, %v2159
      %v2390 = vunpack.c.l.s4 1983009808
      %v2391 = vunpack.c.0.s8 %v2390
      %v2392 = vlaneseq
      %v2393 = vshrl.u32 %v2392, 7
      %v2394 = vsub.s32 %v2391, %v2393
      %v2395 = vrot.slane %v2388, %v2394
      %v2396 = vcombine.low %v2371, %v2379
      %v2397 = vcombine.high %v2371, %v2379
      %v2399 = vunpack.c.l.s4 1934713408
      %v2400 = vunpack.c.0.s8 %v2399
      %v2401 = vlaneseq
      %v2402 = vshrl.u32 %v2401, 7
      %v2403 = vsub.s32 %v2400, %v2402
      %v2404 = vrot.slane %v2396, %v2403
      %v2406 = vunpack.c.l.s4 1934713408
      %v2407 = vunpack.c.0.s8 %v2406
      %v2408 = vlaneseq
      %v2409 = vshrl.u32 %v2408, 7
      %v2410 = vsub.s32 %v2407, %v2409
      %v2411 = vrot.slane %v2397, %v2410
      %v2412 = vcombine.low %v2387, %v2395
      %v2413 = vcombine.high %v2387, %v2395
      %v2415 = vunpack.c.l.s4 1934713408
      %v2416 = vunpack.c.0.s8 %v2415
      %v2417 = vlaneseq
      %v2418 = vshrl.u32 %v2417, 7
      %v2419 = vsub.s32 %v2416, %v2418
      %v2420 = vrot.slane %v2412, %v2419
      %v2422 = vunpack.c.l.s4 1934713408
      %v2423 = vunpack.c.0.s8 %v2422
      %v2424 = vlaneseq
      %v2425 = vshrl.u32 %v2424, 7
      %v2426 = vsub.s32 %v2423, %v2425
      %v2427 = vrot.slane %v2413, %v2426
      %v2428 = vcombine.low %v2404, %v2420
      %v2429 = vcombine.high %v2404, %v2420
      %v2430 = vcombine.low %v2411, %v2427
      %v2431 = vcombine.high %v2411, %v2427
      %v2432 = vcombine.low %v2200, %v2207
      %v2434 = vunpack.c.l.s4 1983009808
      %v2435 = vunpack.c.0.s8 %v2434
      %v2436 = vlaneseq
      %v2437 = vshrl.u32 %v2436, 7
      %v2438 = vsub.s32 %v2435, %v2437
      %v2439 = vrot.slane %v2432, %v2438
      %v2440 = vcombine.low %v2224, %v2225
      %v2442 = vunpack.c.l.s4 1983009808
      %v2443 = vunpack.c.0.s8 %v2442
      %v2444 = vlaneseq
      %v2445 = vshrl.u32 %v2444, 7
      %v2446 = vsub.s32 %v2443, %v2445
      %v2447 = vrot.slane %v2440, %v2446
      %v2448 = vcombine.low %v2216, %v2223
      %v2450 = vunpack.c.l.s4 1983009808
      %v2451 = vunpack.c.0.s8 %v2450
      %v2452 = vlaneseq
      %v2453 = vshrl.u32 %v2452, 7
      %v2454 = vsub.s32 %v2451, %v2453
      %v2455 = vrot.slane %v2448, %v2454
      %v2456 = vcombine.low %v2226, %v2227
      %v2458 = vunpack.c.l.s4 1983009808
      %v2459 = vunpack.c.0.s8 %v2458
      %v2460 = vlaneseq
      %v2461 = vshrl.u32 %v2460, 7
      %v2462 = vsub.s32 %v2459, %v2461
      %v2463 = vrot.slane %v2456, %v2462
      %v2464 = vcombine.low %v2439, %v2447
      %v2465 = vcombine.high %v2439, %v2447
      %v2467 = vunpack.c.l.s4 1934713408
      %v2468 = vunpack.c.0.s8 %v2467
      %v2469 = vlaneseq
      %v2470 = vshrl.u32 %v2469, 7
      %v2471 = vsub.s32 %v2468, %v2470
      %v2472 = vrot.slane %v2464, %v2471
      %v2474 = vunpack.c.l.s4 1934713408
      %v2475 = vunpack.c.0.s8 %v2474
      %v2476 = vlaneseq
      %v2477 = vshrl.u32 %v2476, 7
      %v2478 = vsub.s32 %v2475, %v2477
      %v2479 = vrot.slane %v2465, %v2478
      %v2480 = vcombine.low %v2455, %v2463
      %v2481 = vcombine.high %v2455, %v2463
      %v2483 = vunpack.c.l.s4 1934713408
      %v2484 = vunpack.c.0.s8 %v2483
      %v2485 = vlaneseq
      %v2486 = vshrl.u32 %v2485, 7
      %v2487 = vsub.s32 %v2484, %v2486
      %v2488 = vrot.slane %v2480, %v2487
      %v2490 = vunpack.c.l.s4 1934713408
      %v2491 = vunpack.c.0.s8 %v2490
      %v2492 = vlaneseq
      %v2493 = vshrl.u32 %v2492, 7
      %v2494 = vsub.s32 %v2491, %v2493
      %v2495 = vrot.slane %v2481, %v2494
      %v2496 = vcombine.low %v2472, %v2488
      %v2497 = vcombine.high %v2472, %v2488
      %v2498 = vcombine.low %v2479, %v2495
      %v2499 = vcombine.high %v2479, %v2495
      %v2500 = vcombine.low %v2268, %v2275
      %v2502 = vunpack.c.l.s4 1983009808
      %v2503 = vunpack.c.0.s8 %v2502
      %v2504 = vlaneseq
      %v2505 = vshrl.u32 %v2504, 7
      %v2506 = vsub.s32 %v2503, %v2505
      %v2507 = vrot.slane %v2500, %v2506
      %v2508 = vcombine.low %v2292, %v2293
      %v2510 = vunpack.c.l.s4 1983009808
      %v2511 = vunpack.c.0.s8 %v2510
      %v2512 = vlaneseq
      %v2513 = vshrl.u32 %v2512, 7
      %v2514 = vsub.s32 %v2511, %v2513
      %v2515 = vrot.slane %v2508, %v2514
      %v2516 = vcombine.low %v2284, %v2291
      %v2518 = vunpack.c.l.s4 1983009808
      %v2519 = vunpack.c.0.s8 %v2518
      %v2520 = vlaneseq
      %v2521 = vshrl.u32 %v2520, 7
      %v2522 = vsub.s32 %v2519, %v2521
      %v2523 = vrot.slane %v2516, %v2522
      %v2524 = vcombine.low %v2294, %v2295
      %v2526 = vunpack.c.l.s4 1983009808
      %v2527 = vunpack.c.0.s8 %v2526
      %v2528 = vlaneseq
      %v2529 = vshrl.u32 %v2528, 7
      %v2530 = vsub.s32 %v2527, %v2529
      %v2531 = vrot.slane %v2524, %v2530
      %v2532 = vcombine.low %v2507, %v2515
      %v2533 = vcombine.high %v2507, %v2515
      %v2535 = vunpack.c.l.s4 1934713408
      %v2536 = vunpack.c.0.s8 %v2535
      %v2537 = vlaneseq
      %v2538 = vshrl.u32 %v2537, 7
      %v2539 = vsub.s32 %v2536, %v2538
      %v2540 = vrot.slane %v2532, %v2539
      %v2542 = vunpack.c.l.s4 1934713408
      %v2543 = vunpack.c.0.s8 %v2542
      %v2544 = vlaneseq
      %v2545 = vshrl.u32 %v2544, 7
      %v2546 = vsub.s32 %v2543, %v2545
      %v2547 = vrot.slane %v2533, %v2546
      %v2548 = vcombine.low %v2523, %v2531
      %v2549 = vcombine.high %v2523, %v2531
      %v2551 = vunpack.c.l.s4 1934713408
      %v2552 = vunpack.c.0.s8 %v2551
      %v2553 = vlaneseq
      %v2554 = vshrl.u32 %v2553, 7
      %v2555 = vsub.s32 %v2552, %v2554
      %v2556 = vrot.slane %v2548, %v2555
      %v2558 = vunpack.c.l.s4 1934713408
      %v2559 = vunpack.c.0.s8 %v2558
      %v2560 = vlaneseq
      %v2561 = vshrl.u32 %v2560, 7
      %v2562 = vsub.s32 %v2559, %v2561
      %v2563 = vrot.slane %v2549, %v2562
      %v2564 = vcombine.low %v2540, %v2556
      %v2565 = vcombine.high %v2540, %v2556
      %v2566 = vcombine.low %v2547, %v2563
      %v2567 = vcombine.high %v2547, %v2563
      %vm2568 = vcmask 64512
      %v2570 = vsel %vm2568, %v1568, 0
      %v2573 = vsel %vm2568, %v1704, 0
      %v2576 = vsel %vm2568, %v1572, 0
      %v2579 = vsel %vm2568, %v1708, 0
      %2581 = vmatprep.subr.mxu0 0.0
      %2582 = vmatpush1.xpose.msra.mxu0 %v2576
      %2583 = vmatprep.subr.mxu0 0.0
      %2584 = vmatpush1.xpose.msra.mxu0 %v2579
      %2585 = vmatprep.subr.mxu0 0.0
      %2586 = vmatpush1.xpose.msra.mxu0 0.0
      %2587 = vmatprep.subr.mxu0 0.0
      %2588 = vmatpush1.xpose.msra.mxu0 0.0
      %2589 = vmatprep.subr.mxu0 0.0
      %2590 = vmatpush1.xpose.msra.mxu0 0.0
      %2591 = vmatprep.subr.mxu0 0.0
      %2592 = vmatpush1.xpose.msra.mxu0 0.0
      %2593 = vmatprep.subr.mxu0 0.0
      %2594 = vmatpush1.xpose.msra.mxu0 0.0
      %2595 = vmatprep.subr.mxu0 0.0
      %2596 = vmatpush1.xpose.msra.mxu0 0.0
      %2597 = vmatprep.subr.mxu0 0.0
      %2598 = vmatpush1.xpose.msra.mxu0 0.0
      %2599 = vmatprep.subr.mxu0 0.0
      %2600 = vmatpush1.xpose.msra.mxu0 0.0
      %2601 = vmatprep.subr.mxu0 0.0
      %2602 = vmatpush1.xpose.msra.mxu0 0.0
      %2603 = vmatprep.subr.mxu0 0.0
      %2604 = vmatpush1.xpose.msra.mxu0 0.0
      %2605 = vmatprep.subr.mxu0 0.0
      %2606 = vmatpush1.xpose.msra.mxu0 0.0
      %2607 = vmatprep.subr.mxu0 0.0
      %2608 = vmatpush1.xpose.msra.mxu0 0.0
      %2609 = vmatprep.subr.mxu0 0.0
      %2610 = vmatpush1.xpose.msra.mxu0 0.0
      %2611 = vmatprep.subr.mxu0 0.0
      %2612 = vmatpush1.xpose.msra.mxu0 0.0
      %2613 = vmatprep.subr.mxu0 0.0
      %2614 = vmatpush1.xpose.msra.mxu0 0.0
      %2615 = vmatprep.subr.mxu0 0.0
      %2616 = vmatpush1.xpose.msra.mxu0 0.0
      %2617 = vmatprep.subr.mxu0 0.0
      %2618 = vmatpush1.xpose.msra.mxu0 0.0
      %2619 = vmatprep.subr.mxu0 0.0
      %2620 = vmatpush1.xpose.msra.mxu0 0.0
      %2621 = vmatprep.subr.mxu0 0.0
      %2622 = vmatpush1.xpose.msra.mxu0 0.0
      %2623 = vmatprep.subr.mxu0 0.0
      %2624 = vmatpush1.xpose.msra.mxu0 0.0
      %2625 = vmatprep.subr.mxu0 0.0
      %2626 = vmatpush1.xpose.msra.mxu0 0.0
      %2627 = vmatprep.subr.mxu0 0.0
      %2628 = vmatpush1.xpose.msra.mxu0 0.0
      %2629 = vmatprep.subr.mxu0 0.0
      %2630 = vmatpush1.xpose.msra.mxu0 0.0
      %2631 = vmatprep.subr.mxu0 0.0
      %2632 = vmatpush1.xpose.msra.mxu0 0.0
      %2633 = vmatprep.subr.mxu0 0.0
      %2634 = vmatpush1.xpose.msra.mxu0 0.0
      %2635 = vmatprep.subr.mxu0 0.0
      %2636 = vmatpush1.xpose.msra.mxu0 0.0
      %2637 = vmatprep.subr.mxu0 0.0
      %2638 = vmatpush1.xpose.msra.mxu0 0.0
      %2639 = vmatprep.subr.mxu0 0.0
      %2640 = vmatpush1.xpose.msra.mxu0 0.0
      %2641 = vmatprep.subr.mxu0 0.0
      %2642 = vmatpush1.xpose.msra.mxu0 0.0
      %2643 = vmatprep.subr.mxu0 0.0
      %2644 = vmatpush1.xpose.msra.mxu0 0.0
      %2645 = vmatprep.mubr.f32.mxu0 0.0
      %2646 = vmatmul.mubr.f32.gmra.mrb[0].mxu0 %v2570
      %v2647 = vpop.f32.mrb[0].mxu0
      %v2648 = vadd.f32 0.0, %v2647
      %v2649 = vpop.f32.mrb[0].mxu0
      %2650 = vmatprep.mubr.f32.mxu0 0.0
      %2651 = vmatmul.mubr.f32.gmra.mrb[0].mxu0 %v2573
      %v2652 = vpop.f32.mrb[0].mxu0
      %v2653 = vadd.f32 0.0, %v2652
      %v2654 = vpop.f32.mrb[0].mxu0
      %2655 = vdwg.mxu0
      %v2657 = vsel %vm2568, %v1840, 0
      %v2660 = vsel %vm2568, %v1976, 0
      %v2663 = vsel %vm2568, %v1844, 0
      %v2666 = vsel %vm2568, %v1980, 0
      %2668 = vmatprep.subr.mxu0 0.0
      %2669 = vmatpush1.xpose.msra.mxu0 %v2663
      %2670 = vmatprep.subr.mxu0 0.0
      %2671 = vmatpush1.xpose.msra.mxu0 %v2666
      %2672 = vmatprep.subr.mxu0 0.0
      %2673 = vmatpush1.xpose.msra.mxu0 0.0
      %2674 = vmatprep.subr.mxu0 0.0
      %2675 = vmatpush1.xpose.msra.mxu0 0.0
      %2676 = vmatprep.subr.mxu0 0.0
      %2677 = vmatpush1.xpose.msra.mxu0 0.0
      %2678 = vmatprep.subr.mxu0 0.0
      %2679 = vmatpush1.xpose.msra.mxu0 0.0
      %2680 = vmatprep.subr.mxu0 0.0
      %2681 = vmatpush1.xpose.msra.mxu0 0.0
      %2682 = vmatprep.subr.mxu0 0.0
      %2683 = vmatpush1.xpose.msra.mxu0 0.0
      %2684 = vmatprep.subr.mxu0 0.0
      %2685 = vmatpush1.xpose.msra.mxu0 0.0
      %2686 = vmatprep.subr.mxu0 0.0
      %2687 = vmatpush1.xpose.msra.mxu0 0.0
      %2688 = vmatprep.subr.mxu0 0.0
      %2689 = vmatpush1.xpose.msra.mxu0 0.0
      %2690 = vmatprep.subr.mxu0 0.0
      %2691 = vmatpush1.xpose.msra.mxu0 0.0
      %2692 = vmatprep.subr.mxu0 0.0
      %2693 = vmatpush1.xpose.msra.mxu0 0.0
      %2694 = vmatprep.subr.mxu0 0.0
      %2695 = vmatpush1.xpose.msra.mxu0 0.0
      %2696 = vmatprep.subr.mxu0 0.0
      %2697 = vmatpush1.xpose.msra.mxu0 0.0
      %2698 = vmatprep.subr.mxu0 0.0
      %2699 = vmatpush1.xpose.msra.mxu0 0.0
      %2700 = vmatprep.subr.mxu0 0.0
      %2701 = vmatpush1.xpose.msra.mxu0 0.0
      %2702 = vmatprep.subr.mxu0 0.0
      %2703 = vmatpush1.xpose.msra.mxu0 0.0
      %2704 = vmatprep.subr.mxu0 0.0
      %2705 = vmatpush1.xpose.msra.mxu0 0.0
      %2706 = vmatprep.subr.mxu0 0.0
      %2707 = vmatpush1.xpose.msra.mxu0 0.0
      %2708 = vmatprep.subr.mxu0 0.0
      %2709 = vmatpush1.xpose.msra.mxu0 0.0
      %2710 = vmatprep.subr.mxu0 0.0
      %2711 = vmatpush1.xpose.msra.mxu0 0.0
      %2712 = vmatprep.subr.mxu0 0.0
      %2713 = vmatpush1.xpose.msra.mxu0 0.0
      %2714 = vmatprep.subr.mxu0 0.0
      %2715 = vmatpush1.xpose.msra.mxu0 0.0
      %2716 = vmatprep.subr.mxu0 0.0
      %2717 = vmatpush1.xpose.msra.mxu0 0.0
      %2718 = vmatprep.subr.mxu0 0.0
      %2719 = vmatpush1.xpose.msra.mxu0 0.0
      %2720 = vmatprep.subr.mxu0 0.0
      %2721 = vmatpush1.xpose.msra.mxu0 0.0
      %2722 = vmatprep.subr.mxu0 0.0
      %2723 = vmatpush1.xpose.msra.mxu0 0.0
      %2724 = vmatprep.subr.mxu0 0.0
      %2725 = vmatpush1.xpose.msra.mxu0 0.0
      %2726 = vmatprep.subr.mxu0 0.0
      %2727 = vmatpush1.xpose.msra.mxu0 0.0
      %2728 = vmatprep.subr.mxu0 0.0
      %2729 = vmatpush1.xpose.msra.mxu0 0.0
      %2730 = vmatprep.subr.mxu0 0.0
      %2731 = vmatpush1.xpose.msra.mxu0 0.0
      %2732 = vmatprep.mubr.f32.mxu0 0.0
      %2733 = vmatmul.mubr.f32.gmra.mrb[0].mxu0 %v2657
      %v2734 = vpop.f32.mrb[0].mxu0
      %v2735 = vadd.f32 0.0, %v2734
      %v2736 = vpop.f32.mrb[0].mxu0
      %2737 = vmatprep.mubr.f32.mxu0 0.0
      %2738 = vmatmul.mubr.f32.gmra.mrb[0].mxu0 %v2660
      %v2739 = vpop.f32.mrb[0].mxu0
      %v2740 = vadd.f32 0.0, %v2739
      %v2741 = vpop.f32.mrb[0].mxu0
      %2742 = vdwg.mxu0
      %v2744 = vsel %vm2568, %v1569, 0
      %v2747 = vsel %vm2568, %v1705, 0
      %v2750 = vsel %vm2568, %v1573, 0
      %v2753 = vsel %vm2568, %v1709, 0
      %2755 = vmatprep.subr.mxu0 0.0
      %2756 = vmatpush1.xpose.msra.mxu0 %v2750
      %2757 = vmatprep.subr.mxu0 0.0
      %2758 = vmatpush1.xpose.msra.mxu0 %v2753
      %2759 = vmatprep.subr.mxu0 0.0
      %2760 = vmatpush1.xpose.msra.mxu0 0.0
      %2761 = vmatprep.subr.mxu0 0.0
      %2762 = vmatpush1.xpose.msra.mxu0 0.0
      %2763 = vmatprep.subr.mxu0 0.0
      %2764 = vmatpush1.xpose.msra.mxu0 0.0
      %2765 = vmatprep.subr.mxu0 0.0
      %2766 = vmatpush1.xpose.msra.mxu0 0.0
      %2767 = vmatprep.subr.mxu0 0.0
      %2768 = vmatpush1.xpose.msra.mxu0 0.0
      %2769 = vmatprep.subr.mxu0 0.0
      %2770 = vmatpush1.xpose.msra.mxu0 0.0
      %2771 = vmatprep.subr.mxu0 0.0
      %2772 = vmatpush1.xpose.msra.mxu0 0.0
      %2773 = vmatprep.subr.mxu0 0.0
      %2774 = vmatpush1.xpose.msra.mxu0 0.0
      %2775 = vmatprep.subr.mxu0 0.0
      %2776 = vmatpush1.xpose.msra.mxu0 0.0
      %2777 = vmatprep.subr.mxu0 0.0
      %2778 = vmatpush1.xpose.msra.mxu0 0.0
      %2779 = vmatprep.subr.mxu0 0.0
      %2780 = vmatpush1.xpose.msra.mxu0 0.0
      %2781 = vmatprep.subr.mxu0 0.0
      %2782 = vmatpush1.xpose.msra.mxu0 0.0
      %2783 = vmatprep.subr.mxu0 0.0
      %2784 = vmatpush1.xpose.msra.mxu0 0.0
      %2785 = vmatprep.subr.mxu0 0.0
      %2786 = vmatpush1.xpose.msra.mxu0 0.0
      %2787 = vmatprep.subr.mxu0 0.0
      %2788 = vmatpush1.xpose.msra.mxu0 0.0
      %2789 = vmatprep.subr.mxu0 0.0
      %2790 = vmatpush1.xpose.msra.mxu0 0.0
      %2791 = vmatprep.subr.mxu0 0.0
      %2792 = vmatpush1.xpose.msra.mxu0 0.0
      %2793 = vmatprep.subr.mxu0 0.0
      %2794 = vmatpush1.xpose.msra.mxu0 0.0
      %2795 = vmatprep.subr.mxu0 0.0
      %2796 = vmatpush1.xpose.msra.mxu0 0.0
      %2797 = vmatprep.subr.mxu0 0.0
      %2798 = vmatpush1.xpose.msra.mxu0 0.0
      %2799 = vmatprep.subr.mxu0 0.0
      %2800 = vmatpush1.xpose.msra.mxu0 0.0
      %2801 = vmatprep.subr.mxu0 0.0
      %2802 = vmatpush1.xpose.msra.mxu0 0.0
      %2803 = vmatprep.subr.mxu0 0.0
      %2804 = vmatpush1.xpose.msra.mxu0 0.0
      %2805 = vmatprep.subr.mxu0 0.0
      %2806 = vmatpush1.xpose.msra.mxu0 0.0
      %2807 = vmatprep.subr.mxu0 0.0
      %2808 = vmatpush1.xpose.msra.mxu0 0.0
      %2809 = vmatprep.subr.mxu0 0.0
      %2810 = vmatpush1.xpose.msra.mxu0 0.0
      %2811 = vmatprep.subr.mxu0 0.0
      %2812 = vmatpush1.xpose.msra.mxu0 0.0
      %2813 = vmatprep.subr.mxu0 0.0
      %2814 = vmatpush1.xpose.msra.mxu0 0.0
      %2815 = vmatprep.subr.mxu0 0.0
      %2816 = vmatpush1.xpose.msra.mxu0 0.0
      %2817 = vmatprep.subr.mxu0 0.0
      %2818 = vmatpush1.xpose.msra.mxu0 0.0
      %2819 = vmatprep.mubr.f32.mxu0 0.0
      %2820 = vmatmul.mubr.f32.gmra.mrb[0].mxu0 %v2744
      %v2821 = vpop.f32.mrb[0].mxu0
      %v2822 = vadd.f32 0.0, %v2821
      %v2823 = vpop.f32.mrb[0].mxu0
      %2824 = vmatprep.mubr.f32.mxu0 0.0
      %2825 = vmatmul.mubr.f32.gmra.mrb[0].mxu0 %v2747
      %v2826 = vpop.f32.mrb[0].mxu0
      %v2827 = vadd.f32 0.0, %v2826
      %v2828 = vpop.f32.mrb[0].mxu0
      %2829 = vdwg.mxu0
      %v2831 = vsel %vm2568, %v1841, 0
      %v2834 = vsel %vm2568, %v1977, 0
      %v2837 = vsel %vm2568, %v1845, 0
      %v2840 = vsel %vm2568, %v1981, 0
      %2842 = vmatprep.subr.mxu0 0.0
      %2843 = vmatpush1.xpose.msra.mxu0 %v2837
      %2844 = vmatprep.subr.mxu0 0.0
      %2845 = vmatpush1.xpose.msra.mxu0 %v2840
      %2846 = vmatprep.subr.mxu0 0.0
      %2847 = vmatpush1.xpose.msra.mxu0 0.0
      %2848 = vmatprep.subr.mxu0 0.0
      %2849 = vmatpush1.xpose.msra.mxu0 0.0
      %2850 = vmatprep.subr.mxu0 0.0
      %2851 = vmatpush1.xpose.msra.mxu0 0.0
      %2852 = vmatprep.subr.mxu0 0.0
      %2853 = vmatpush1.xpose.msra.mxu0 0.0
      %2854 = vmatprep.subr.mxu0 0.0
      %2855 = vmatpush1.xpose.msra.mxu0 0.0
      %2856 = vmatprep.subr.mxu0 0.0
      %2857 = vmatpush1.xpose.msra.mxu0 0.0
      %2858 = vmatprep.subr.mxu0 0.0
      %2859 = vmatpush1.xpose.msra.mxu0 0.0
      %2860 = vmatprep.subr.mxu0 0.0
      %2861 = vmatpush1.xpose.msra.mxu0 0.0
      %2862 = vmatprep.subr.mxu0 0.0
      %2863 = vmatpush1.xpose.msra.mxu0 0.0
      %2864 = vmatprep.subr.mxu0 0.0
      %2865 = vmatpush1.xpose.msra.mxu0 0.0
      %2866 = vmatprep.subr.mxu0 0.0
      %2867 = vmatpush1.xpose.msra.mxu0 0.0
      %2868 = vmatprep.subr.mxu0 0.0
      %2869 = vmatpush1.xpose.msra.mxu0 0.0
      %2870 = vmatprep.subr.mxu0 0.0
      %2871 = vmatpush1.xpose.msra.mxu0 0.0
      %2872 = vmatprep.subr.mxu0 0.0
      %2873 = vmatpush1.xpose.msra.mxu0 0.0
      %2874 = vmatprep.subr.mxu0 0.0
      %2875 = vmatpush1.xpose.msra.mxu0 0.0
      %2876 = vmatprep.subr.mxu0 0.0
      %2877 = vmatpush1.xpose.msra.mxu0 0.0
      %2878 = vmatprep.subr.mxu0 0.0
      %2879 = vmatpush1.xpose.msra.mxu0 0.0
      %2880 = vmatprep.subr.mxu0 0.0
      %2881 = vmatpush1.xpose.msra.mxu0 0.0
      %2882 = vmatprep.subr.mxu0 0.0
      %2883 = vmatpush1.xpose.msra.mxu0 0.0
      %2884 = vmatprep.subr.mxu0 0.0
      %2885 = vmatpush1.xpose.msra.mxu0 0.0
      %2886 = vmatprep.subr.mxu0 0.0
      %2887 = vmatpush1.xpose.msra.mxu0 0.0
      %2888 = vmatprep.subr.mxu0 0.0
      %2889 = vmatpush1.xpose.msra.mxu0 0.0
      %2890 = vmatprep.subr.mxu0 0.0
      %2891 = vmatpush1.xpose.msra.mxu0 0.0
      %2892 = vmatprep.subr.mxu0 0.0
      %2893 = vmatpush1.xpose.msra.mxu0 0.0
      %2894 = vmatprep.subr.mxu0 0.0
      %2895 = vmatpush1.xpose.msra.mxu0 0.0
      %2896 = vmatprep.subr.mxu0 0.0
      %2897 = vmatpush1.xpose.msra.mxu0 0.0
      %2898 = vmatprep.subr.mxu0 0.0
      %2899 = vmatpush1.xpose.msra.mxu0 0.0
      %2900 = vmatprep.subr.mxu0 0.0
      %2901 = vmatpush1.xpose.msra.mxu0 0.0
      %2902 = vmatprep.subr.mxu0 0.0
      %2903 = vmatpush1.xpose.msra.mxu0 0.0
      %2904 = vmatprep.subr.mxu0 0.0
      %2905 = vmatpush1.xpose.msra.mxu0 0.0
      %2906 = vmatprep.mubr.f32.mxu0 0.0
      %2907 = vmatmul.mubr.f32.gmra.mrb[0].mxu0 %v2831
      %v2908 = vpop.f32.mrb[0].mxu0
      %v2909 = vadd.f32 0.0, %v2908
      %v2910 = vpop.f32.mrb[0].mxu0
      %2911 = vmatprep.mubr.f32.mxu0 0.0
      %2912 = vmatmul.mubr.f32.gmra.mrb[0].mxu0 %v2834
      %v2913 = vpop.f32.mrb[0].mxu0
      %v2914 = vadd.f32 0.0, %v2913
      %v2915 = vpop.f32.mrb[0].mxu0
      %2916 = vdwg.mxu0
      %v2918 = vsel %vm2568, %v1570, 0
      %v2921 = vsel %vm2568, %v1706, 0
      %v2924 = vsel %vm2568, %v1574, 0
      %v2927 = vsel %vm2568, %v1710, 0
      %2929 = vmatprep.subr.mxu0 0.0
      %2930 = vmatpush1.xpose.msra.mxu0 %v2924
      %2931 = vmatprep.subr.mxu0 0.0
      %2932 = vmatpush1.xpose.msra.mxu0 %v2927
      %2933 = vmatprep.subr.mxu0 0.0
      %2934 = vmatpush1.xpose.msra.mxu0 0.0
      %2935 = vmatprep.subr.mxu0 0.0
      %2936 = vmatpush1.xpose.msra.mxu0 0.0
      %2937 = vmatprep.subr.mxu0 0.0
      %2938 = vmatpush1.xpose.msra.mxu0 0.0
      %2939 = vmatprep.subr.mxu0 0.0
      %2940 = vmatpush1.xpose.msra.mxu0 0.0
      %2941 = vmatprep.subr.mxu0 0.0
      %2942 = vmatpush1.xpose.msra.mxu0 0.0
      %2943 = vmatprep.subr.mxu0 0.0
      %2944 = vmatpush1.xpose.msra.mxu0 0.0
      %2945 = vmatprep.subr.mxu0 0.0
      %2946 = vmatpush1.xpose.msra.mxu0 0.0
      %2947 = vmatprep.subr.mxu0 0.0
      %2948 = vmatpush1.xpose.msra.mxu0 0.0
      %2949 = vmatprep.subr.mxu0 0.0
      %2950 = vmatpush1.xpose.msra.mxu0 0.0
      %2951 = vmatprep.subr.mxu0 0.0
      %2952 = vmatpush1.xpose.msra.mxu0 0.0
      %2953 = vmatprep.subr.mxu0 0.0
      %2954 = vmatpush1.xpose.msra.mxu0 0.0
      %2955 = vmatprep.subr.mxu0 0.0
      %2956 = vmatpush1.xpose.msra.mxu0 0.0
      %2957 = vmatprep.subr.mxu0 0.0
      %2958 = vmatpush1.xpose.msra.mxu0 0.0
      %2959 = vmatprep.subr.mxu0 0.0
      %2960 = vmatpush1.xpose.msra.mxu0 0.0
      %2961 = vmatprep.subr.mxu0 0.0
      %2962 = vmatpush1.xpose.msra.mxu0 0.0
      %2963 = vmatprep.subr.mxu0 0.0
      %2964 = vmatpush1.xpose.msra.mxu0 0.0
      %2965 = vmatprep.subr.mxu0 0.0
      %2966 = vmatpush1.xpose.msra.mxu0 0.0
      %2967 = vmatprep.subr.mxu0 0.0
      %2968 = vmatpush1.xpose.msra.mxu0 0.0
      %2969 = vmatprep.subr.mxu0 0.0
      %2970 = vmatpush1.xpose.msra.mxu0 0.0
      %2971 = vmatprep.subr.mxu0 0.0
      %2972 = vmatpush1.xpose.msra.mxu0 0.0
      %2973 = vmatprep.subr.mxu0 0.0
      %2974 = vmatpush1.xpose.msra.mxu0 0.0
      %2975 = vmatprep.subr.mxu0 0.0
      %2976 = vmatpush1.xpose.msra.mxu0 0.0
      %2977 = vmatprep.subr.mxu0 0.0
      %2978 = vmatpush1.xpose.msra.mxu0 0.0
      %2979 = vmatprep.subr.mxu0 0.0
      %2980 = vmatpush1.xpose.msra.mxu0 0.0
      %2981 = vmatprep.subr.mxu0 0.0
      %2982 = vmatpush1.xpose.msra.mxu0 0.0
      %2983 = vmatprep.subr.mxu0 0.0
      %2984 = vmatpush1.xpose.msra.mxu0 0.0
      %2985 = vmatprep.subr.mxu0 0.0
      %2986 = vmatpush1.xpose.msra.mxu0 0.0
      %2987 = vmatprep.subr.mxu0 0.0
      %2988 = vmatpush1.xpose.msra.mxu0 0.0
      %2989 = vmatprep.subr.mxu0 0.0
      %2990 = vmatpush1.xpose.msra.mxu0 0.0
      %2991 = vmatprep.subr.mxu0 0.0
      %2992 = vmatpush1.xpose.msra.mxu0 0.0
      %2993 = vmatprep.mubr.f32.mxu0 0.0
      %2994 = vmatmul.mubr.f32.gmra.mrb[0].mxu0 %v2918
      %v2995 = vpop.f32.mrb[0].mxu0
      %v2996 = vadd.f32 0.0, %v2995
      %v2997 = vpop.f32.mrb[0].mxu0
      %2998 = vmatprep.mubr.f32.mxu0 0.0
      %2999 = vmatmul.mubr.f32.gmra.mrb[0].mxu0 %v2921
      %v3000 = vpop.f32.mrb[0].mxu0
      %v3001 = vadd.f32 0.0, %v3000
      %v3002 = vpop.f32.mrb[0].mxu0
      %3003 = vdwg.mxu0
      %v3005 = vsel %vm2568, %v1842, 0
      %v3008 = vsel %vm2568, %v1978, 0
      %v3011 = vsel %vm2568, %v1846, 0
      %v3014 = vsel %vm2568, %v1982, 0
      %3016 = vmatprep.subr.mxu0 0.0
      %3017 = vmatpush1.xpose.msra.mxu0 %v3011
      %3018 = vmatprep.subr.mxu0 0.0
      %3019 = vmatpush1.xpose.msra.mxu0 %v3014
      %3020 = vmatprep.subr.mxu0 0.0
      %3021 = vmatpush1.xpose.msra.mxu0 0.0
      %3022 = vmatprep.subr.mxu0 0.0
      %3023 = vmatpush1.xpose.msra.mxu0 0.0
      %3024 = vmatprep.subr.mxu0 0.0
      %3025 = vmatpush1.xpose.msra.mxu0 0.0
      %3026 = vmatprep.subr.mxu0 0.0
      %3027 = vmatpush1.xpose.msra.mxu0 0.0
      %3028 = vmatprep.subr.mxu0 0.0
      %3029 = vmatpush1.xpose.msra.mxu0 0.0
      %3030 = vmatprep.subr.mxu0 0.0
      %3031 = vmatpush1.xpose.msra.mxu0 0.0
      %3032 = vmatprep.subr.mxu0 0.0
      %3033 = vmatpush1.xpose.msra.mxu0 0.0
      %3034 = vmatprep.subr.mxu0 0.0
      %3035 = vmatpush1.xpose.msra.mxu0 0.0
      %3036 = vmatprep.subr.mxu0 0.0
      %3037 = vmatpush1.xpose.msra.mxu0 0.0
      %3038 = vmatprep.subr.mxu0 0.0
      %3039 = vmatpush1.xpose.msra.mxu0 0.0
      %3040 = vmatprep.subr.mxu0 0.0
      %3041 = vmatpush1.xpose.msra.mxu0 0.0
      %3042 = vmatprep.subr.mxu0 0.0
      %3043 = vmatpush1.xpose.msra.mxu0 0.0
      %3044 = vmatprep.subr.mxu0 0.0
      %3045 = vmatpush1.xpose.msra.mxu0 0.0
      %3046 = vmatprep.subr.mxu0 0.0
      %3047 = vmatpush1.xpose.msra.mxu0 0.0
      %3048 = vmatprep.subr.mxu0 0.0
      %3049 = vmatpush1.xpose.msra.mxu0 0.0
      %3050 = vmatprep.subr.mxu0 0.0
      %3051 = vmatpush1.xpose.msra.mxu0 0.0
      %3052 = vmatprep.subr.mxu0 0.0
      %3053 = vmatpush1.xpose.msra.mxu0 0.0
      %3054 = vmatprep.subr.mxu0 0.0
      %3055 = vmatpush1.xpose.msra.mxu0 0.0
      %3056 = vmatprep.subr.mxu0 0.0
      %3057 = vmatpush1.xpose.msra.mxu0 0.0
      %3058 = vmatprep.subr.mxu0 0.0
      %3059 = vmatpush1.xpose.msra.mxu0 0.0
      %3060 = vmatprep.subr.mxu0 0.0
      %3061 = vmatpush1.xpose.msra.mxu0 0.0
      %3062 = vmatprep.subr.mxu0 0.0
      %3063 = vmatpush1.xpose.msra.mxu0 0.0
      %3064 = vmatprep.subr.mxu0 0.0
      %3065 = vmatpush1.xpose.msra.mxu0 0.0
      %3066 = vmatprep.subr.mxu0 0.0
      %3067 = vmatpush1.xpose.msra.mxu0 0.0
      %3068 = vmatprep.subr.mxu0 0.0
      %3069 = vmatpush1.xpose.msra.mxu0 0.0
      %3070 = vmatprep.subr.mxu0 0.0
      %3071 = vmatpush1.xpose.msra.mxu0 0.0
      %3072 = vmatprep.subr.mxu0 0.0
      %3073 = vmatpush1.xpose.msra.mxu0 0.0
      %3074 = vmatprep.subr.mxu0 0.0
      %3075 = vmatpush1.xpose.msra.mxu0 0.0
      %3076 = vmatprep.subr.mxu0 0.0
      %3077 = vmatpush1.xpose.msra.mxu0 0.0
      %3078 = vmatprep.subr.mxu0 0.0
      %3079 = vmatpush1.xpose.msra.mxu0 0.0
      %3080 = vmatprep.mubr.f32.mxu0 0.0
      %3081 = vmatmul.mubr.f32.gmra.mrb[0].mxu0 %v3005
      %v3082 = vpop.f32.mrb[0].mxu0
      %v3083 = vadd.f32 0.0, %v3082
      %v3084 = vpop.f32.mrb[0].mxu0
      %3085 = vmatprep.mubr.f32.mxu0 0.0
      %3086 = vmatmul.mubr.f32.gmra.mrb[0].mxu0 %v3008
      %v3087 = vpop.f32.mrb[0].mxu0
      %v3088 = vadd.f32 0.0, %v3087
      %v3089 = vpop.f32.mrb[0].mxu0
      %3090 = vdwg.mxu0
      %v3092 = vsel %vm2568, %v1571, 0
      %v3095 = vsel %vm2568, %v1707, 0
      %v3098 = vsel %vm2568, %v1575, 0
      %v3101 = vsel %vm2568, %v1711, 0
      %3103 = vmatprep.subr.mxu0 0.0
      %3104 = vmatpush1.xpose.msra.mxu0 %v3098
      %3105 = vmatprep.subr.mxu0 0.0
      %3106 = vmatpush1.xpose.msra.mxu0 %v3101
      %3107 = vmatprep.subr.mxu0 0.0
      %3108 = vmatpush1.xpose.msra.mxu0 0.0
      %3109 = vmatprep.subr.mxu0 0.0
      %3110 = vmatpush1.xpose.msra.mxu0 0.0
      %3111 = vmatprep.subr.mxu0 0.0
      %3112 = vmatpush1.xpose.msra.mxu0 0.0
      %3113 = vmatprep.subr.mxu0 0.0
      %3114 = vmatpush1.xpose.msra.mxu0 0.0
      %3115 = vmatprep.subr.mxu0 0.0
      %3116 = vmatpush1.xpose.msra.mxu0 0.0
      %3117 = vmatprep.subr.mxu0 0.0
      %3118 = vmatpush1.xpose.msra.mxu0 0.0
      %3119 = vmatprep.subr.mxu0 0.0
      %3120 = vmatpush1.xpose.msra.mxu0 0.0
      %3121 = vmatprep.subr.mxu0 0.0
      %3122 = vmatpush1.xpose.msra.mxu0 0.0
      %3123 = vmatprep.subr.mxu0 0.0
      %3124 = vmatpush1.xpose.msra.mxu0 0.0
      %3125 = vmatprep.subr.mxu0 0.0
      %3126 = vmatpush1.xpose.msra.mxu0 0.0
      %3127 = vmatprep.subr.mxu0 0.0
      %3128 = vmatpush1.xpose.msra.mxu0 0.0
      %3129 = vmatprep.subr.mxu0 0.0
      %3130 = vmatpush1.xpose.msra.mxu0 0.0
      %3131 = vmatprep.subr.mxu0 0.0
      %3132 = vmatpush1.xpose.msra.mxu0 0.0
      %3133 = vmatprep.subr.mxu0 0.0
      %3134 = vmatpush1.xpose.msra.mxu0 0.0
      %3135 = vmatprep.subr.mxu0 0.0
      %3136 = vmatpush1.xpose.msra.mxu0 0.0
      %3137 = vmatprep.subr.mxu0 0.0
      %3138 = vmatpush1.xpose.msra.mxu0 0.0
      %3139 = vmatprep.subr.mxu0 0.0
      %3140 = vmatpush1.xpose.msra.mxu0 0.0
      %3141 = vmatprep.subr.mxu0 0.0
      %3142 = vmatpush1.xpose.msra.mxu0 0.0
      %3143 = vmatprep.subr.mxu0 0.0
      %3144 = vmatpush1.xpose.msra.mxu0 0.0
      %3145 = vmatprep.subr.mxu0 0.0
      %3146 = vmatpush1.xpose.msra.mxu0 0.0
      %3147 = vmatprep.subr.mxu0 0.0
      %3148 = vmatpush1.xpose.msra.mxu0 0.0
      %3149 = vmatprep.subr.mxu0 0.0
      %3150 = vmatpush1.xpose.msra.mxu0 0.0
      %3151 = vmatprep.subr.mxu0 0.0
      %3152 = vmatpush1.xpose.msra.mxu0 0.0
      %3153 = vmatprep.subr.mxu0 0.0
      %3154 = vmatpush1.xpose.msra.mxu0 0.0
      %3155 = vmatprep.subr.mxu0 0.0
      %3156 = vmatpush1.xpose.msra.mxu0 0.0
      %3157 = vmatprep.subr.mxu0 0.0
      %3158 = vmatpush1.xpose.msra.mxu0 0.0
      %3159 = vmatprep.subr.mxu0 0.0
      %3160 = vmatpush1.xpose.msra.mxu0 0.0
      %3161 = vmatprep.subr.mxu0 0.0
      %3162 = vmatpush1.xpose.msra.mxu0 0.0
      %3163 = vmatprep.subr.mxu0 0.0
      %3164 = vmatpush1.xpose.msra.mxu0 0.0
      %3165 = vmatprep.subr.mxu0 0.0
      %3166 = vmatpush1.xpose.msra.mxu0 0.0
      %3167 = vmatprep.mubr.f32.mxu0 0.0
      %3168 = vmatmul.mubr.f32.gmra.mrb[0].mxu0 %v3092
      %v3169 = vpop.f32.mrb[0].mxu0
      %v3170 = vadd.f32 0.0, %v3169
      %v3171 = vpop.f32.mrb[0].mxu0
      %3172 = vmatprep.mubr.f32.mxu0 0.0
      %3173 = vmatmul.mubr.f32.gmra.mrb[0].mxu0 %v3095
      %v3174 = vpop.f32.mrb[0].mxu0
      %v3175 = vadd.f32 0.0, %v3174
      %v3176 = vpop.f32.mrb[0].mxu0
      %3177 = vdwg.mxu0
      %v3179 = vsel %vm2568, %v1843, 0
      %v3182 = vsel %vm2568, %v1979, 0
      %v3185 = vsel %vm2568, %v1847, 0
      %v3188 = vsel %vm2568, %v1983, 0
      %3190 = vmatprep.subr.mxu0 0.0
      %3191 = vmatpush1.xpose.msra.mxu0 %v3185
      %3192 = vmatprep.subr.mxu0 0.0
      %3193 = vmatpush1.xpose.msra.mxu0 %v3188
      %3194 = vmatprep.subr.mxu0 0.0
      %3195 = vmatpush1.xpose.msra.mxu0 0.0
      %3196 = vmatprep.subr.mxu0 0.0
      %3197 = vmatpush1.xpose.msra.mxu0 0.0
      %3198 = vmatprep.subr.mxu0 0.0
      %3199 = vmatpush1.xpose.msra.mxu0 0.0
      %3200 = vmatprep.subr.mxu0 0.0
      %3201 = vmatpush1.xpose.msra.mxu0 0.0
      %3202 = vmatprep.subr.mxu0 0.0
      %3203 = vmatpush1.xpose.msra.mxu0 0.0
      %3204 = vmatprep.subr.mxu0 0.0
      %3205 = vmatpush1.xpose.msra.mxu0 0.0
      %3206 = vmatprep.subr.mxu0 0.0
      %3207 = vmatpush1.xpose.msra.mxu0 0.0
      %3208 = vmatprep.subr.mxu0 0.0
      %3209 = vmatpush1.xpose.msra.mxu0 0.0
      %3210 = vmatprep.subr.mxu0 0.0
      %3211 = vmatpush1.xpose.msra.mxu0 0.0
      %3212 = vmatprep.subr.mxu0 0.0
      %3213 = vmatpush1.xpose.msra.mxu0 0.0
      %3214 = vmatprep.subr.mxu0 0.0
      %3215 = vmatpush1.xpose.msra.mxu0 0.0
      %3216 = vmatprep.subr.mxu0 0.0
      %3217 = vmatpush1.xpose.msra.mxu0 0.0
      %3218 = vmatprep.subr.mxu0 0.0
      %3219 = vmatpush1.xpose.msra.mxu0 0.0
      %3220 = vmatprep.subr.mxu0 0.0
      %3221 = vmatpush1.xpose.msra.mxu0 0.0
      %3222 = vmatprep.subr.mxu0 0.0
      %3223 = vmatpush1.xpose.msra.mxu0 0.0
      %3224 = vmatprep.subr.mxu0 0.0
      %3225 = vmatpush1.xpose.msra.mxu0 0.0
      %3226 = vmatprep.subr.mxu0 0.0
      %3227 = vmatpush1.xpose.msra.mxu0 0.0
      %3228 = vmatprep.subr.mxu0 0.0
      %3229 = vmatpush1.xpose.msra.mxu0 0.0
      %3230 = vmatprep.subr.mxu0 0.0
      %3231 = vmatpush1.xpose.msra.mxu0 0.0
      %3232 = vmatprep.subr.mxu0 0.0
      %3233 = vmatpush1.xpose.msra.mxu0 0.0
      %3234 = vmatprep.subr.mxu0 0.0
      %3235 = vmatpush1.xpose.msra.mxu0 0.0
      %3236 = vmatprep.subr.mxu0 0.0
      %3237 = vmatpush1.xpose.msra.mxu0 0.0
      %3238 = vmatprep.subr.mxu0 0.0
      %3239 = vmatpush1.xpose.msra.mxu0 0.0
      %3240 = vmatprep.subr.mxu0 0.0
      %3241 = vmatpush1.xpose.msra.mxu0 0.0
      %3242 = vmatprep.subr.mxu0 0.0
      %3243 = vmatpush1.xpose.msra.mxu0 0.0
      %3244 = vmatprep.subr.mxu0 0.0
      %3245 = vmatpush1.xpose.msra.mxu0 0.0
      %3246 = vmatprep.subr.mxu0 0.0
      %3247 = vmatpush1.xpose.msra.mxu0 0.0
      %3248 = vmatprep.subr.mxu0 0.0
      %3249 = vmatpush1.xpose.msra.mxu0 0.0
      %3250 = vmatprep.subr.mxu0 0.0
      %3251 = vmatpush1.xpose.msra.mxu0 0.0
      %3252 = vmatprep.subr.mxu0 0.0
      %3253 = vmatpush1.xpose.msra.mxu0 0.0
      %3254 = vmatprep.mubr.f32.mxu0 0.0
      %3255 = vmatmul.mubr.f32.gmra.mrb[0].mxu0 %v3179
      %v3256 = vpop.f32.mrb[0].mxu0
      %v3257 = vadd.f32 0.0, %v3256
      %v3258 = vpop.f32.mrb[0].mxu0
      %3259 = vmatprep.mubr.f32.mxu0 0.0
      %3260 = vmatmul.mubr.f32.gmra.mrb[0].mxu0 %v3182
      %v3261 = vpop.f32.mrb[0].mxu0
      %v3262 = vadd.f32 0.0, %v3261
      %v3263 = vpop.f32.mrb[0].mxu0
      %3264 = vdwg.mxu0
      %v3265 = vld [vmem:[%s547] sm:$0xff]
      %v3266 = vld [vmem:[%s547 + $0x8] sm:$0xff]
      %v3267 = vld [vmem:[%s547 + $0x10] sm:$0xff]
      %v3268 = vld [vmem:[%s547 + $0x18] sm:$0xff]
      %v3269 = vadd.f32 %v2648, %v3265
      %v3270 = vadd.f32 %v2653, %v3266
      %v3271 = vadd.f32 %v2735, %v3267
      %v3272 = vadd.f32 %v2740, %v3268
      %v3273 = vadd.f32 %v2822, %v3265
      %v3274 = vadd.f32 %v2827, %v3266
      %v3275 = vadd.f32 %v2909, %v3267
      %v3276 = vadd.f32 %v2914, %v3268
      %v3277 = vadd.f32 %v2996, %v3265
      %v3278 = vadd.f32 %v3001, %v3266
      %v3279 = vadd.f32 %v3083, %v3267
      %v3280 = vadd.f32 %v3088, %v3268
      %v3281 = vadd.f32 %v3170, %v3265
      %v3282 = vadd.f32 %v3175, %v3266
      %v3283 = vadd.f32 %v3257, %v3267
      %v3284 = vadd.f32 %v3262, %v3268
      %vm3285 = vcmask 130048
      %v3286 = vsel %vm3285, %v3269, -inf
      %3287 = vmax.xlane.f32.xlu0 %v3286
      %v3288 = vpop.xlane.xlu0 %3287
      %v3289 = vsel %vm3285, %v3270, -inf
      %3290 = vmax.xlane.f32.xlu0 %v3289
      %v3291 = vpop.xlane.xlu0 %3290
      %v3292 = vsel %vm3285, %v3271, -inf
      %3293 = vmax.xlane.f32.xlu0 %v3292
      %v3294 = vpop.xlane.xlu0 %3293
      %v3295 = vsel %vm3285, %v3272, -inf
      %3296 = vmax.xlane.f32.xlu0 %v3295
      %v3297 = vpop.xlane.xlu0 %3296
      %v3298 = vsel %vm3285, %v3273, -inf
      %3299 = vmax.xlane.f32.xlu0 %v3298
      %v3300 = vpop.xlane.xlu0 %3299
      %v3301 = vsel %vm3285, %v3274, -inf
      %3302 = vmax.xlane.f32.xlu0 %v3301
      %v3303 = vpop.xlane.xlu0 %3302
      %v3304 = vsel %vm3285, %v3275, -inf
      %3305 = vmax.xlane.f32.xlu0 %v3304
      %v3306 = vpop.xlane.xlu0 %3305
      %v3307 = vsel %vm3285, %v3276, -inf
      %3308 = vmax.xlane.f32.xlu0 %v3307
      %v3309 = vpop.xlane.xlu0 %3308
      %v3310 = vsel %vm3285, %v3277, -inf
      %3311 = vmax.xlane.f32.xlu0 %v3310
      %v3312 = vpop.xlane.xlu0 %3311
      %v3313 = vsel %vm3285, %v3278, -inf
      %3314 = vmax.xlane.f32.xlu0 %v3313
      %v3315 = vpop.xlane.xlu0 %3314
      %v3316 = vsel %vm3285, %v3279, -inf
      %3317 = vmax.xlane.f32.xlu0 %v3316
      %v3318 = vpop.xlane.xlu0 %3317
      %v3319 = vsel %vm3285, %v3280, -inf
      %3320 = vmax.xlane.f32.xlu0 %v3319
      %v3321 = vpop.xlane.xlu0 %3320
      %v3322 = vsel %vm3285, %v3281, -inf
      %3323 = vmax.xlane.f32.xlu0 %v3322
      %v3324 = vpop.xlane.xlu0 %3323
      %v3325 = vsel %vm3285, %v3282, -inf
      %3326 = vmax.xlane.f32.xlu0 %v3325
      %v3327 = vpop.xlane.xlu0 %3326
      %v3328 = vsel %vm3285, %v3283, -inf
      %3329 = vmax.xlane.f32.xlu0 %v3328
      %v3330 = vpop.xlane.xlu0 %3329
      %v3331 = vsel %vm3285, %v3284, -inf
      %3332 = vmax.xlane.f32.xlu0 %v3331
      %v3333 = vpop.xlane.xlu0 %3332
      %v3334 = vsub.f32 %v3269, %v3288
      %v3335 = vsub.f32 %v3270, %v3291
      %v3336 = vsub.f32 %v3271, %v3294
      %v3337 = vsub.f32 %v3272, %v3297
      %v3338 = vsub.f32 %v3273, %v3300
      %v3339 = vsub.f32 %v3274, %v3303
      %v3340 = vsub.f32 %v3275, %v3306
      %v3341 = vsub.f32 %v3276, %v3309
      %v3342 = vsub.f32 %v3277, %v3312
      %v3343 = vsub.f32 %v3278, %v3315
      %v3344 = vsub.f32 %v3279, %v3318
      %v3345 = vsub.f32 %v3280, %v3321
      %v3346 = vsub.f32 %v3281, %v3324
      %v3347 = vsub.f32 %v3282, %v3327
      %v3348 = vsub.f32 %v3283, %v3330
      %v3349 = vsub.f32 %v3284, %v3333
      %v3350 = vmul.f32 %v3334, 1.442695
      %v3351 = vpow.pop %v3350
      %v3352 = vmul.f32 %v3335, 1.442695
      %v3353 = vpow.pop %v3352
      %v3354 = vmul.f32 %v3336, 1.442695
      %v3355 = vpow.pop %v3354
      %v3356 = vmul.f32 %v3337, 1.442695
      %v3357 = vpow.pop %v3356
      %v3358 = vmul.f32 %v3338, 1.442695
      %v3359 = vpow.pop %v3358
      %v3360 = vmul.f32 %v3339, 1.442695
      %v3361 = vpow.pop %v3360
      %v3362 = vmul.f32 %v3340, 1.442695
      %v3363 = vpow.pop %v3362
      %v3364 = vmul.f32 %v3341, 1.442695
      %v3365 = vpow.pop %v3364
      %v3366 = vmul.f32 %v3342, 1.442695
      %v3367 = vpow.pop %v3366
      %v3368 = vmul.f32 %v3343, 1.442695
      %v3369 = vpow.pop %v3368
      %v3370 = vmul.f32 %v3344, 1.442695
      %v3371 = vpow.pop %v3370
      %v3372 = vmul.f32 %v3345, 1.442695
      %v3373 = vpow.pop %v3372
      %v3374 = vmul.f32 %v3346, 1.442695
      %v3375 = vpow.pop %v3374
      %v3376 = vmul.f32 %v3347, 1.442695
      %v3377 = vpow.pop %v3376
      %v3378 = vmul.f32 %v3348, 1.442695
      %v3379 = vpow.pop %v3378
      %v3380 = vmul.f32 %v3349, 1.442695
      %v3381 = vpow.pop %v3380
      %v3382 = vsel %vm3285, %v3351, 0.0
      %3383 = vadd.xlane.f32.xlu0 %v3382
      %v3384 = vpop.xlane.xlu0 %3383
      %v3385 = vsel %vm3285, %v3353, 0.0
      %3386 = vadd.xlane.f32.xlu0 %v3385
      %v3387 = vpop.xlane.xlu0 %3386
      %v3388 = vsel %vm3285, %v3355, 0.0
      %3389 = vadd.xlane.f32.xlu0 %v3388
      %v3390 = vpop.xlane.xlu0 %3389
      %v3391 = vsel %vm3285, %v3357, 0.0
      %3392 = vadd.xlane.f32.xlu0 %v3391
      %v3393 = vpop.xlane.xlu0 %3392
      %v3394 = vsel %vm3285, %v3359, 0.0
      %3395 = vadd.xlane.f32.xlu0 %v3394
      %v3396 = vpop.xlane.xlu0 %3395
      %v3397 = vsel %vm3285, %v3361, 0.0
      %3398 = vadd.xlane.f32.xlu0 %v3397
      %v3399 = vpop.xlane.xlu0 %3398
      %v3400 = vsel %vm3285, %v3363, 0.0
      %3401 = vadd.xlane.f32.xlu0 %v3400
      %v3402 = vpop.xlane.xlu0 %3401
      %v3403 = vsel %vm3285, %v3365, 0.0
      %3404 = vadd.xlane.f32.xlu0 %v3403
      %v3405 = vpop.xlane.xlu0 %3404
      %v3406 = vsel %vm3285, %v3367, 0.0
      %3407 = vadd.xlane.f32.xlu0 %v3406
      %v3408 = vpop.xlane.xlu0 %3407
      %v3409 = vsel %vm3285, %v3369, 0.0
      %3410 = vadd.xlane.f32.xlu0 %v3409
      %v3411 = vpop.xlane.xlu0 %3410
      %v3412 = vsel %vm3285, %v3371, 0.0
      %3413 = vadd.xlane.f32.xlu0 %v3412
      %v3414 = vpop.xlane.xlu0 %3413
      %v3415 = vsel %vm3285, %v3373, 0.0
      %3416 = vadd.xlane.f32.xlu0 %v3415
      %v3417 = vpop.xlane.xlu0 %3416
      %v3418 = vsel %vm3285, %v3375, 0.0
      %3419 = vadd.xlane.f32.xlu0 %v3418
      %v3420 = vpop.xlane.xlu0 %3419
      %v3421 = vsel %vm3285, %v3377, 0.0
      %3422 = vadd.xlane.f32.xlu0 %v3421
      %v3423 = vpop.xlane.xlu0 %3422
      %v3424 = vsel %vm3285, %v3379, 0.0
      %3425 = vadd.xlane.f32.xlu0 %v3424
      %v3426 = vpop.xlane.xlu0 %3425
      %v3427 = vsel %vm3285, %v3381, 0.0
      %3428 = vadd.xlane.f32.xlu0 %v3427
      %v3429 = vpop.xlane.xlu0 %3428
      %v3430 = vrcp.pop %v3384
      %v3431 = vrcp.pop %v3387
      %v3432 = vrcp.pop %v3390
      %v3433 = vrcp.pop %v3393
      %v3434 = vrcp.pop %v3396
      %v3435 = vrcp.pop %v3399
      %v3436 = vrcp.pop %v3402
      %v3437 = vrcp.pop %v3405
      %v3438 = vrcp.pop %v3408
      %v3439 = vrcp.pop %v3411
      %v3440 = vrcp.pop %v3414
      %v3441 = vrcp.pop %v3417
      %v3442 = vrcp.pop %v3420
      %v3443 = vrcp.pop %v3423
      %v3444 = vrcp.pop %v3426
      %v3445 = vrcp.pop %v3429
      %v3446 = vmul.f32 %v3351, %v3430
      %v3447 = vmul.f32 %v3353, %v3431
      %v3448 = vmul.f32 %v3355, %v3432
      %v3449 = vmul.f32 %v3357, %v3433
      %v3450 = vmul.f32 %v3359, %v3434
      %v3451 = vmul.f32 %v3361, %v3435
      %v3452 = vmul.f32 %v3363, %v3436
      %v3453 = vmul.f32 %v3365, %v3437
      %v3454 = vmul.f32 %v3367, %v3438
      %v3455 = vmul.f32 %v3369, %v3439
      %v3456 = vmul.f32 %v3371, %v3440
      %v3457 = vmul.f32 %v3373, %v3441
      %v3458 = vmul.f32 %v3375, %v3442
      %v3459 = vmul.f32 %v3377, %v3443
      %v3460 = vmul.f32 %v3379, %v3444
      %v3461 = vmul.f32 %v3381, %v3445
      %v3463 = vsel %vm3285, %v3446, 0
      %v3466 = vsel %vm3285, %v3447, 0
      %3468 = vmatprep.subr.mxu0 0.0
      %3469 = vmatpush1.msra.mxu0 %v2360
      %3470 = vmatprep.subr.mxu0 0.0
      %3471 = vmatpush1.msra.mxu0 %v2428
      %3472 = vmatprep.subr.mxu0 0.0
      %3473 = vmatpush1.msra.mxu0 0.0
      %3474 = vmatprep.subr.mxu0 0.0
      %3475 = vmatpush1.msra.mxu0 0.0
      %3476 = vmatprep.subr.mxu0 0.0
      %3477 = vmatpush1.msra.mxu0 0.0
      %3478 = vmatprep.subr.mxu0 0.0
      %3479 = vmatpush1.msra.mxu0 0.0
      %3480 = vmatprep.subr.mxu0 0.0
      %3481 = vmatpush1.msra.mxu0 0.0
      %3482 = vmatprep.subr.mxu0 0.0
      %3483 = vmatpush1.msra.mxu0 0.0
      %3484 = vmatprep.subr.mxu0 0.0
      %3485 = vmatpush1.msra.mxu0 0.0
      %3486 = vmatprep.subr.mxu0 0.0
      %3487 = vmatpush1.msra.mxu0 0.0
      %3488 = vmatprep.subr.mxu0 0.0
      %3489 = vmatpush1.msra.mxu0 0.0
      %3490 = vmatprep.subr.mxu0 0.0
      %3491 = vmatpush1.msra.mxu0 0.0
      %3492 = vmatprep.subr.mxu0 0.0
      %3493 = vmatpush1.msra.mxu0 0.0
      %3494 = vmatprep.subr.mxu0 0.0
      %3495 = vmatpush1.msra.mxu0 0.0
      %3496 = vmatprep.subr.mxu0 0.0
      %3497 = vmatpush1.msra.mxu0 0.0
      %3498 = vmatprep.subr.mxu0 0.0
      %3499 = vmatpush1.msra.mxu0 0.0
      %3500 = vmatprep.subr.mxu0 0.0
      %3501 = vmatpush1.msra.mxu0 0.0
      %3502 = vmatprep.subr.mxu0 0.0
      %3503 = vmatpush1.msra.mxu0 0.0
      %3504 = vmatprep.subr.mxu0 0.0
      %3505 = vmatpush1.msra.mxu0 0.0
      %3506 = vmatprep.subr.mxu0 0.0
      %3507 = vmatpush1.msra.mxu0 0.0
      %3508 = vmatprep.subr.mxu0 0.0
      %3509 = vmatpush1.msra.mxu0 0.0
      %3510 = vmatprep.subr.mxu0 0.0
      %3511 = vmatpush1.msra.mxu0 0.0
      %3512 = vmatprep.subr.mxu0 0.0
      %3513 = vmatpush1.msra.mxu0 0.0
      %3514 = vmatprep.subr.mxu0 0.0
      %3515 = vmatpush1.msra.mxu0 0.0
      %3516 = vmatprep.subr.mxu0 0.0
      %3517 = vmatpush1.msra.mxu0 0.0
      %3518 = vmatprep.subr.mxu0 0.0
      %3519 = vmatpush1.msra.mxu0 0.0
      %3520 = vmatprep.subr.mxu0 0.0
      %3521 = vmatpush1.msra.mxu0 0.0
      %3522 = vmatprep.subr.mxu0 0.0
      %3523 = vmatpush1.msra.mxu0 0.0
      %3524 = vmatprep.subr.mxu0 0.0
      %3525 = vmatpush1.msra.mxu0 0.0
      %3526 = vmatprep.subr.mxu0 0.0
      %3527 = vmatpush1.msra.mxu0 0.0
      %3528 = vmatprep.subr.mxu0 0.0
      %3529 = vmatpush1.msra.mxu0 0.0
      %3530 = vmatprep.subr.mxu0 0.0
      %3531 = vmatpush1.msra.mxu0 0.0
      %3532 = vmatprep.mubr.f32.mxu0 0.0
      %3533 = vmatmul.mubr.f32.gmra.mrb[0].mxu0 %v3463
      %v3534 = vpop.f32.mrb[0].mxu0
      %v3535 = vadd.f32 0.0, %v3534
      %v3536 = vpop.f32.mrb[0].mxu0
      %3537 = vmatprep.mubr.f32.mxu0 0.0
      %3538 = vmatmul.mubr.f32.gmra.mrb[0].mxu0 %v3466
      %v3539 = vpop.f32.mrb[0].mxu0
      %v3540 = vadd.f32 0.0, %v3539
      %v3541 = vpop.f32.mrb[0].mxu0
      %3542 = vdwg.mxu0
      %v3544 = vsel %vm3285, %v3448, 0
      %v3547 = vsel %vm3285, %v3449, 0
      %3549 = vmatprep.subr.mxu0 0.0
      %3550 = vmatpush1.msra.mxu0 %v2496
      %3551 = vmatprep.subr.mxu0 0.0
      %3552 = vmatpush1.msra.mxu0 %v2564
      %3553 = vmatprep.subr.mxu0 0.0
      %3554 = vmatpush1.msra.mxu0 0.0
      %3555 = vmatprep.subr.mxu0 0.0
      %3556 = vmatpush1.msra.mxu0 0.0
      %3557 = vmatprep.subr.mxu0 0.0
      %3558 = vmatpush1.msra.mxu0 0.0
      %3559 = vmatprep.subr.mxu0 0.0
      %3560 = vmatpush1.msra.mxu0 0.0
      %3561 = vmatprep.subr.mxu0 0.0
      %3562 = vmatpush1.msra.mxu0 0.0
      %3563 = vmatprep.subr.mxu0 0.0
      %3564 = vmatpush1.msra.mxu0 0.0
      %3565 = vmatprep.subr.mxu0 0.0
      %3566 = vmatpush1.msra.mxu0 0.0
      %3567 = vmatprep.subr.mxu0 0.0
      %3568 = vmatpush1.msra.mxu0 0.0
      %3569 = vmatprep.subr.mxu0 0.0
      %3570 = vmatpush1.msra.mxu0 0.0
      %3571 = vmatprep.subr.mxu0 0.0
      %3572 = vmatpush1.msra.mxu0 0.0
      %3573 = vmatprep.subr.mxu0 0.0
      %3574 = vmatpush1.msra.mxu0 0.0
      %3575 = vmatprep.subr.mxu0 0.0
      %3576 = vmatpush1.msra.mxu0 0.0
      %3577 = vmatprep.subr.mxu0 0.0
      %3578 = vmatpush1.msra.mxu0 0.0
      %3579 = vmatprep.subr.mxu0 0.0
      %3580 = vmatpush1.msra.mxu0 0.0
      %3581 = vmatprep.subr.mxu0 0.0
      %3582 = vmatpush1.msra.mxu0 0.0
      %3583 = vmatprep.subr.mxu0 0.0
      %3584 = vmatpush1.msra.mxu0 0.0
      %3585 = vmatprep.subr.mxu0 0.0
      %3586 = vmatpush1.msra.mxu0 0.0
      %3587 = vmatprep.subr.mxu0 0.0
      %3588 = vmatpush1.msra.mxu0 0.0
      %3589 = vmatprep.subr.mxu0 0.0
      %3590 = vmatpush1.msra.mxu0 0.0
      %3591 = vmatprep.subr.mxu0 0.0
      %3592 = vmatpush1.msra.mxu0 0.0
      %3593 = vmatprep.subr.mxu0 0.0
      %3594 = vmatpush1.msra.mxu0 0.0
      %3595 = vmatprep.subr.mxu0 0.0
      %3596 = vmatpush1.msra.mxu0 0.0
      %3597 = vmatprep.subr.mxu0 0.0
      %3598 = vmatpush1.msra.mxu0 0.0
      %3599 = vmatprep.subr.mxu0 0.0
      %3600 = vmatpush1.msra.mxu0 0.0
      %3601 = vmatprep.subr.mxu0 0.0
      %3602 = vmatpush1.msra.mxu0 0.0
      %3603 = vmatprep.subr.mxu0 0.0
      %3604 = vmatpush1.msra.mxu0 0.0
      %3605 = vmatprep.subr.mxu0 0.0
      %3606 = vmatpush1.msra.mxu0 0.0
      %3607 = vmatprep.subr.mxu0 0.0
      %3608 = vmatpush1.msra.mxu0 0.0
      %3609 = vmatprep.subr.mxu0 0.0
      %3610 = vmatpush1.msra.mxu0 0.0
      %3611 = vmatprep.subr.mxu0 0.0
      %3612 = vmatpush1.msra.mxu0 0.0
      %3613 = vmatprep.mubr.f32.mxu0 0.0
      %3614 = vmatmul.mubr.f32.gmra.mrb[0].mxu0 %v3544
      %v3615 = vpop.f32.mrb[0].mxu0
      %v3616 = vadd.f32 0.0, %v3615
      %v3617 = vpop.f32.mrb[0].mxu0
      %3618 = vmatprep.mubr.f32.mxu0 0.0
      %3619 = vmatmul.mubr.f32.gmra.mrb[0].mxu0 %v3547
      %v3620 = vpop.f32.mrb[0].mxu0
      %v3621 = vadd.f32 0.0, %v3620
      %v3622 = vpop.f32.mrb[0].mxu0
      %3623 = vdwg.mxu0
      %v3625 = vsel %vm3285, %v3450, 0
      %v3628 = vsel %vm3285, %v3451, 0
      %3630 = vmatprep.subr.mxu0 0.0
      %3631 = vmatpush1.msra.mxu0 %v2361
      %3632 = vmatprep.subr.mxu0 0.0
      %3633 = vmatpush1.msra.mxu0 %v2429
      %3634 = vmatprep.subr.mxu0 0.0
      %3635 = vmatpush1.msra.mxu0 0.0
      %3636 = vmatprep.subr.mxu0 0.0
      %3637 = vmatpush1.msra.mxu0 0.0
      %3638 = vmatprep.subr.mxu0 0.0
      %3639 = vmatpush1.msra.mxu0 0.0
      %3640 = vmatprep.subr.mxu0 0.0
      %3641 = vmatpush1.msra.mxu0 0.0
      %3642 = vmatprep.subr.mxu0 0.0
      %3643 = vmatpush1.msra.mxu0 0.0
      %3644 = vmatprep.subr.mxu0 0.0
      %3645 = vmatpush1.msra.mxu0 0.0
      %3646 = vmatprep.subr.mxu0 0.0
      %3647 = vmatpush1.msra.mxu0 0.0
      %3648 = vmatprep.subr.mxu0 0.0
      %3649 = vmatpush1.msra.mxu0 0.0
      %3650 = vmatprep.subr.mxu0 0.0
      %3651 = vmatpush1.msra.mxu0 0.0
      %3652 = vmatprep.subr.mxu0 0.0
      %3653 = vmatpush1.msra.mxu0 0.0
      %3654 = vmatprep.subr.mxu0 0.0
      %3655 = vmatpush1.msra.mxu0 0.0
      %3656 = vmatprep.subr.mxu0 0.0
      %3657 = vmatpush1.msra.mxu0 0.0
      %3658 = vmatprep.subr.mxu0 0.0
      %3659 = vmatpush1.msra.mxu0 0.0
      %3660 = vmatprep.subr.mxu0 0.0
      %3661 = vmatpush1.msra.mxu0 0.0
      %3662 = vmatprep.subr.mxu0 0.0
      %3663 = vmatpush1.msra.mxu0 0.0
      %3664 = vmatprep.subr.mxu0 0.0
      %3665 = vmatpush1.msra.mxu0 0.0
      %3666 = vmatprep.subr.mxu0 0.0
      %3667 = vmatpush1.msra.mxu0 0.0
      %3668 = vmatprep.subr.mxu0 0.0
      %3669 = vmatpush1.msra.mxu0 0.0
      %3670 = vmatprep.subr.mxu0 0.0
      %3671 = vmatpush1.msra.mxu0 0.0
      %3672 = vmatprep.subr.mxu0 0.0
      %3673 = vmatpush1.msra.mxu0 0.0
      %3674 = vmatprep.subr.mxu0 0.0
      %3675 = vmatpush1.msra.mxu0 0.0
      %3676 = vmatprep.subr.mxu0 0.0
      %3677 = vmatpush1.msra.mxu0 0.0
      %3678 = vmatprep.subr.mxu0 0.0
      %3679 = vmatpush1.msra.mxu0 0.0
      %3680 = vmatprep.subr.mxu0 0.0
      %3681 = vmatpush1.msra.mxu0 0.0
      %3682 = vmatprep.subr.mxu0 0.0
      %3683 = vmatpush1.msra.mxu0 0.0
      %3684 = vmatprep.subr.mxu0 0.0
      %3685 = vmatpush1.msra.mxu0 0.0
      %3686 = vmatprep.subr.mxu0 0.0
      %3687 = vmatpush1.msra.mxu0 0.0
      %3688 = vmatprep.subr.mxu0 0.0
      %3689 = vmatpush1.msra.mxu0 0.0
      %3690 = vmatprep.subr.mxu0 0.0
      %3691 = vmatpush1.msra.mxu0 0.0
      %3692 = vmatprep.subr.mxu0 0.0
      %3693 = vmatpush1.msra.mxu0 0.0
      %3694 = vmatprep.mubr.f32.mxu0 0.0
      %3695 = vmatmul.mubr.f32.gmra.mrb[0].mxu0 %v3625
      %v3696 = vpop.f32.mrb[0].mxu0
      %v3697 = vadd.f32 0.0, %v3696
      %v3698 = vpop.f32.mrb[0].mxu0
      %3699 = vmatprep.mubr.f32.mxu0 0.0
      %3700 = vmatmul.mubr.f32.gmra.mrb[0].mxu0 %v3628
      %v3701 = vpop.f32.mrb[0].mxu0
      %v3702 = vadd.f32 0.0, %v3701
      %v3703 = vpop.f32.mrb[0].mxu0
      %3704 = vdwg.mxu0
      %v3706 = vsel %vm3285, %v3452, 0
      %v3709 = vsel %vm3285, %v3453, 0
      %3711 = vmatprep.subr.mxu0 0.0
      %3712 = vmatpush1.msra.mxu0 %v2497
      %3713 = vmatprep.subr.mxu0 0.0
      %3714 = vmatpush1.msra.mxu0 %v2565
      %3715 = vmatprep.subr.mxu0 0.0
      %3716 = vmatpush1.msra.mxu0 0.0
      %3717 = vmatprep.subr.mxu0 0.0
      %3718 = vmatpush1.msra.mxu0 0.0
      %3719 = vmatprep.subr.mxu0 0.0
      %3720 = vmatpush1.msra.mxu0 0.0
      %3721 = vmatprep.subr.mxu0 0.0
      %3722 = vmatpush1.msra.mxu0 0.0
      %3723 = vmatprep.subr.mxu0 0.0
      %3724 = vmatpush1.msra.mxu0 0.0
      %3725 = vmatprep.subr.mxu0 0.0
      %3726 = vmatpush1.msra.mxu0 0.0
      %3727 = vmatprep.subr.mxu0 0.0
      %3728 = vmatpush1.msra.mxu0 0.0
      %3729 = vmatprep.subr.mxu0 0.0
      %3730 = vmatpush1.msra.mxu0 0.0
      %3731 = vmatprep.subr.mxu0 0.0
      %3732 = vmatpush1.msra.mxu0 0.0
      %3733 = vmatprep.subr.mxu0 0.0
      %3734 = vmatpush1.msra.mxu0 0.0
      %3735 = vmatprep.subr.mxu0 0.0
      %3736 = vmatpush1.msra.mxu0 0.0
      %3737 = vmatprep.subr.mxu0 0.0
      %3738 = vmatpush1.msra.mxu0 0.0
      %3739 = vmatprep.subr.mxu0 0.0
      %3740 = vmatpush1.msra.mxu0 0.0
      %3741 = vmatprep.subr.mxu0 0.0
      %3742 = vmatpush1.msra.mxu0 0.0
      %3743 = vmatprep.subr.mxu0 0.0
      %3744 = vmatpush1.msra.mxu0 0.0
      %3745 = vmatprep.subr.mxu0 0.0
      %3746 = vmatpush1.msra.mxu0 0.0
      %3747 = vmatprep.subr.mxu0 0.0
      %3748 = vmatpush1.msra.mxu0 0.0
      %3749 = vmatprep.subr.mxu0 0.0
      %3750 = vmatpush1.msra.mxu0 0.0
      %3751 = vmatprep.subr.mxu0 0.0
      %3752 = vmatpush1.msra.mxu0 0.0
      %3753 = vmatprep.subr.mxu0 0.0
      %3754 = vmatpush1.msra.mxu0 0.0
      %3755 = vmatprep.subr.mxu0 0.0
      %3756 = vmatpush1.msra.mxu0 0.0
      %3757 = vmatprep.subr.mxu0 0.0
      %3758 = vmatpush1.msra.mxu0 0.0
      %3759 = vmatprep.subr.mxu0 0.0
      %3760 = vmatpush1.msra.mxu0 0.0
      %3761 = vmatprep.subr.mxu0 0.0
      %3762 = vmatpush1.msra.mxu0 0.0
      %3763 = vmatprep.subr.mxu0 0.0
      %3764 = vmatpush1.msra.mxu0 0.0
      %3765 = vmatprep.subr.mxu0 0.0
      %3766 = vmatpush1.msra.mxu0 0.0
      %3767 = vmatprep.subr.mxu0 0.0
      %3768 = vmatpush1.msra.mxu0 0.0
      %3769 = vmatprep.subr.mxu0 0.0
      %3770 = vmatpush1.msra.mxu0 0.0
      %3771 = vmatprep.subr.mxu0 0.0
      %3772 = vmatpush1.msra.mxu0 0.0
      %3773 = vmatprep.subr.mxu0 0.0
      %3774 = vmatpush1.msra.mxu0 0.0
      %3775 = vmatprep.mubr.f32.mxu0 0.0
      %3776 = vmatmul.mubr.f32.gmra.mrb[0].mxu0 %v3706
      %v3777 = vpop.f32.mrb[0].mxu0
      %v3778 = vadd.f32 0.0, %v3777
      %v3779 = vpop.f32.mrb[0].mxu0
      %3780 = vmatprep.mubr.f32.mxu0 0.0
      %3781 = vmatmul.mubr.f32.gmra.mrb[0].mxu0 %v3709
      %v3782 = vpop.f32.mrb[0].mxu0
      %v3783 = vadd.f32 0.0, %v3782
      %v3784 = vpop.f32.mrb[0].mxu0
      %3785 = vdwg.mxu0
      %v3787 = vsel %vm3285, %v3454, 0
      %v3790 = vsel %vm3285, %v3455, 0
      %3792 = vmatprep.subr.mxu0 0.0
      %3793 = vmatpush1.msra.mxu0 %v2362
      %3794 = vmatprep.subr.mxu0 0.0
      %3795 = vmatpush1.msra.mxu0 %v2430
      %3796 = vmatprep.subr.mxu0 0.0
      %3797 = vmatpush1.msra.mxu0 0.0
      %3798 = vmatprep.subr.mxu0 0.0
      %3799 = vmatpush1.msra.mxu0 0.0
      %3800 = vmatprep.subr.mxu0 0.0
      %3801 = vmatpush1.msra.mxu0 0.0
      %3802 = vmatprep.subr.mxu0 0.0
      %3803 = vmatpush1.msra.mxu0 0.0
      %3804 = vmatprep.subr.mxu0 0.0
      %3805 = vmatpush1.msra.mxu0 0.0
      %3806 = vmatprep.subr.mxu0 0.0
      %3807 = vmatpush1.msra.mxu0 0.0
      %3808 = vmatprep.subr.mxu0 0.0
      %3809 = vmatpush1.msra.mxu0 0.0
      %3810 = vmatprep.subr.mxu0 0.0
      %3811 = vmatpush1.msra.mxu0 0.0
      %3812 = vmatprep.subr.mxu0 0.0
      %3813 = vmatpush1.msra.mxu0 0.0
      %3814 = vmatprep.subr.mxu0 0.0
      %3815 = vmatpush1.msra.mxu0 0.0
      %3816 = vmatprep.subr.mxu0 0.0
      %3817 = vmatpush1.msra.mxu0 0.0
      %3818 = vmatprep.subr.mxu0 0.0
      %3819 = vmatpush1.msra.mxu0 0.0
      %3820 = vmatprep.subr.mxu0 0.0
      %3821 = vmatpush1.msra.mxu0 0.0
      %3822 = vmatprep.subr.mxu0 0.0
      %3823 = vmatpush1.msra.mxu0 0.0
      %3824 = vmatprep.subr.mxu0 0.0
      %3825 = vmatpush1.msra.mxu0 0.0
      %3826 = vmatprep.subr.mxu0 0.0
      %3827 = vmatpush1.msra.mxu0 0.0
      %3828 = vmatprep.subr.mxu0 0.0
      %3829 = vmatpush1.msra.mxu0 0.0
      %3830 = vmatprep.subr.mxu0 0.0
      %3831 = vmatpush1.msra.mxu0 0.0
      %3832 = vmatprep.subr.mxu0 0.0
      %3833 = vmatpush1.msra.mxu0 0.0
      %3834 = vmatprep.subr.mxu0 0.0
      %3835 = vmatpush1.msra.mxu0 0.0
      %3836 = vmatprep.subr.mxu0 0.0
      %3837 = vmatpush1.msra.mxu0 0.0
      %3838 = vmatprep.subr.mxu0 0.0
      %3839 = vmatpush1.msra.mxu0 0.0
      %3840 = vmatprep.subr.mxu0 0.0
      %3841 = vmatpush1.msra.mxu0 0.0
      %3842 = vmatprep.subr.mxu0 0.0
      %3843 = vmatpush1.msra.mxu0 0.0
      %3844 = vmatprep.subr.mxu0 0.0
      %3845 = vmatpush1.msra.mxu0 0.0
      %3846 = vmatprep.subr.mxu0 0.0
      %3847 = vmatpush1.msra.mxu0 0.0
      %3848 = vmatprep.subr.mxu0 0.0
      %3849 = vmatpush1.msra.mxu0 0.0
      %3850 = vmatprep.subr.mxu0 0.0
      %3851 = vmatpush1.msra.mxu0 0.0
      %3852 = vmatprep.subr.mxu0 0.0
      %3853 = vmatpush1.msra.mxu0 0.0
      %3854 = vmatprep.subr.mxu0 0.0
      %3855 = vmatpush1.msra.mxu0 0.0
      %3856 = vmatprep.mubr.f32.mxu0 0.0
      %3857 = vmatmul.mubr.f32.gmra.mrb[0].mxu0 %v3787
      %v3858 = vpop.f32.mrb[0].mxu0
      %v3859 = vadd.f32 0.0, %v3858
      %v3860 = vpop.f32.mrb[0].mxu0
      %3861 = vmatprep.mubr.f32.mxu0 0.0
      %3862 = vmatmul.mubr.f32.gmra.mrb[0].mxu0 %v3790
      %v3863 = vpop.f32.mrb[0].mxu0
      %v3864 = vadd.f32 0.0, %v3863
      %v3865 = vpop.f32.mrb[0].mxu0
      %3866 = vdwg.mxu0
      %v3868 = vsel %vm3285, %v3456, 0
      %v3871 = vsel %vm3285, %v3457, 0
      %3873 = vmatprep.subr.mxu0 0.0
      %3874 = vmatpush1.msra.mxu0 %v2498
      %3875 = vmatprep.subr.mxu0 0.0
      %3876 = vmatpush1.msra.mxu0 %v2566
      %3877 = vmatprep.subr.mxu0 0.0
      %3878 = vmatpush1.msra.mxu0 0.0
      %3879 = vmatprep.subr.mxu0 0.0
      %3880 = vmatpush1.msra.mxu0 0.0
      %3881 = vmatprep.subr.mxu0 0.0
      %3882 = vmatpush1.msra.mxu0 0.0
      %3883 = vmatprep.subr.mxu0 0.0
      %3884 = vmatpush1.msra.mxu0 0.0
      %3885 = vmatprep.subr.mxu0 0.0
      %3886 = vmatpush1.msra.mxu0 0.0
      %3887 = vmatprep.subr.mxu0 0.0
      %3888 = vmatpush1.msra.mxu0 0.0
      %3889 = vmatprep.subr.mxu0 0.0
      %3890 = vmatpush1.msra.mxu0 0.0
      %3891 = vmatprep.subr.mxu0 0.0
      %3892 = vmatpush1.msra.mxu0 0.0
      %3893 = vmatprep.subr.mxu0 0.0
      %3894 = vmatpush1.msra.mxu0 0.0
      %3895 = vmatprep.subr.mxu0 0.0
      %3896 = vmatpush1.msra.mxu0 0.0
      %3897 = vmatprep.subr.mxu0 0.0
      %3898 = vmatpush1.msra.mxu0 0.0
      %3899 = vmatprep.subr.mxu0 0.0
      %3900 = vmatpush1.msra.mxu0 0.0
      %3901 = vmatprep.subr.mxu0 0.0
      %3902 = vmatpush1.msra.mxu0 0.0
      %3903 = vmatprep.subr.mxu0 0.0
      %3904 = vmatpush1.msra.mxu0 0.0
      %3905 = vmatprep.subr.mxu0 0.0
      %3906 = vmatpush1.msra.mxu0 0.0
      %3907 = vmatprep.subr.mxu0 0.0
      %3908 = vmatpush1.msra.mxu0 0.0
      %3909 = vmatprep.subr.mxu0 0.0
      %3910 = vmatpush1.msra.mxu0 0.0
      %3911 = vmatprep.subr.mxu0 0.0
      %3912 = vmatpush1.msra.mxu0 0.0
      %3913 = vmatprep.subr.mxu0 0.0
      %3914 = vmatpush1.msra.mxu0 0.0
      %3915 = vmatprep.subr.mxu0 0.0
      %3916 = vmatpush1.msra.mxu0 0.0
      %3917 = vmatprep.subr.mxu0 0.0
      %3918 = vmatpush1.msra.mxu0 0.0
      %3919 = vmatprep.subr.mxu0 0.0
      %3920 = vmatpush1.msra.mxu0 0.0
      %3921 = vmatprep.subr.mxu0 0.0
      %3922 = vmatpush1.msra.mxu0 0.0
      %3923 = vmatprep.subr.mxu0 0.0
      %3924 = vmatpush1.msra.mxu0 0.0
      %3925 = vmatprep.subr.mxu0 0.0
      %3926 = vmatpush1.msra.mxu0 0.0
      %3927 = vmatprep.subr.mxu0 0.0
      %3928 = vmatpush1.msra.mxu0 0.0
      %3929 = vmatprep.subr.mxu0 0.0
      %3930 = vmatpush1.msra.mxu0 0.0
      %3931 = vmatprep.subr.mxu0 0.0
      %3932 = vmatpush1.msra.mxu0 0.0
      %3933 = vmatprep.subr.mxu0 0.0
      %3934 = vmatpush1.msra.mxu0 0.0
      %3935 = vmatprep.subr.mxu0 0.0
      %3936 = vmatpush1.msra.mxu0 0.0
      %3937 = vmatprep.mubr.f32.mxu0 0.0
      %3938 = vmatmul.mubr.f32.gmra.mrb[0].mxu0 %v3868
      %v3939 = vpop.f32.mrb[0].mxu0
      %v3940 = vadd.f32 0.0, %v3939
      %v3941 = vpop.f32.mrb[0].mxu0
      %3942 = vmatprep.mubr.f32.mxu0 0.0
      %3943 = vmatmul.mubr.f32.gmra.mrb[0].mxu0 %v3871
      %v3944 = vpop.f32.mrb[0].mxu0
      %v3945 = vadd.f32 0.0, %v3944
      %v3946 = vpop.f32.mrb[0].mxu0
      %3947 = vdwg.mxu0
      %v3949 = vsel %vm3285, %v3458, 0
      %v3952 = vsel %vm3285, %v3459, 0
      %3954 = vmatprep.subr.mxu0 0.0
      %3955 = vmatpush1.msra.mxu0 %v2363
      %3956 = vmatprep.subr.mxu0 0.0
      %3957 = vmatpush1.msra.mxu0 %v2431
      %3958 = vmatprep.subr.mxu0 0.0
      %3959 = vmatpush1.msra.mxu0 0.0
      %3960 = vmatprep.subr.mxu0 0.0
      %3961 = vmatpush1.msra.mxu0 0.0
      %3962 = vmatprep.subr.mxu0 0.0
      %3963 = vmatpush1.msra.mxu0 0.0
      %3964 = vmatprep.subr.mxu0 0.0
      %3965 = vmatpush1.msra.mxu0 0.0
      %3966 = vmatprep.subr.mxu0 0.0
      %3967 = vmatpush1.msra.mxu0 0.0
      %3968 = vmatprep.subr.mxu0 0.0
      %3969 = vmatpush1.msra.mxu0 0.0
      %3970 = vmatprep.subr.mxu0 0.0
      %3971 = vmatpush1.msra.mxu0 0.0
      %3972 = vmatprep.subr.mxu0 0.0
      %3973 = vmatpush1.msra.mxu0 0.0
      %3974 = vmatprep.subr.mxu0 0.0
      %3975 = vmatpush1.msra.mxu0 0.0
      %3976 = vmatprep.subr.mxu0 0.0
      %3977 = vmatpush1.msra.mxu0 0.0
      %3978 = vmatprep.subr.mxu0 0.0
      %3979 = vmatpush1.msra.mxu0 0.0
      %3980 = vmatprep.subr.mxu0 0.0
      %3981 = vmatpush1.msra.mxu0 0.0
      %3982 = vmatprep.subr.mxu0 0.0
      %3983 = vmatpush1.msra.mxu0 0.0
      %3984 = vmatprep.subr.mxu0 0.0
      %3985 = vmatpush1.msra.mxu0 0.0
      %3986 = vmatprep.subr.mxu0 0.0
      %3987 = vmatpush1.msra.mxu0 0.0
      %3988 = vmatprep.subr.mxu0 0.0
      %3989 = vmatpush1.msra.mxu0 0.0
      %3990 = vmatprep.subr.mxu0 0.0
      %3991 = vmatpush1.msra.mxu0 0.0
      %3992 = vmatprep.subr.mxu0 0.0
      %3993 = vmatpush1.msra.mxu0 0.0
      %3994 = vmatprep.subr.mxu0 0.0
      %3995 = vmatpush1.msra.mxu0 0.0
      %3996 = vmatprep.subr.mxu0 0.0
      %3997 = vmatpush1.msra.mxu0 0.0
      %3998 = vmatprep.subr.mxu0 0.0
      %3999 = vmatpush1.msra.mxu0 0.0
      %4000 = vmatprep.subr.mxu0 0.0
      %4001 = vmatpush1.msra.mxu0 0.0
      %4002 = vmatprep.subr.mxu0 0.0
      %4003 = vmatpush1.msra.mxu0 0.0
      %4004 = vmatprep.subr.mxu0 0.0
      %4005 = vmatpush1.msra.mxu0 0.0
      %4006 = vmatprep.subr.mxu0 0.0
      %4007 = vmatpush1.msra.mxu0 0.0
      %4008 = vmatprep.subr.mxu0 0.0
      %4009 = vmatpush1.msra.mxu0 0.0
      %4010 = vmatprep.subr.mxu0 0.0
      %4011 = vmatpush1.msra.mxu0 0.0
      %4012 = vmatprep.subr.mxu0 0.0
      %4013 = vmatpush1.msra.mxu0 0.0
      %4014 = vmatprep.subr.mxu0 0.0
      %4015 = vmatpush1.msra.mxu0 0.0
      %4016 = vmatprep.subr.mxu0 0.0
      %4017 = vmatpush1.msra.mxu0 0.0
      %4018 = vmatprep.mubr.f32.mxu0 0.0
      %4019 = vmatmul.mubr.f32.gmra.mrb[0].mxu0 %v3949
      %v4020 = vpop.f32.mrb[0].mxu0
      %v4021 = vadd.f32 0.0, %v4020
      %v4022 = vpop.f32.mrb[0].mxu0
      %4023 = vmatprep.mubr.f32.mxu0 0.0
      %4024 = vmatmul.mubr.f32.gmra.mrb[0].mxu0 %v3952
      %v4025 = vpop.f32.mrb[0].mxu0
      %v4026 = vadd.f32 0.0, %v4025
      %v4027 = vpop.f32.mrb[0].mxu0
      %4028 = vdwg.mxu0
      %v4030 = vsel %vm3285, %v3460, 0
      %v4033 = vsel %vm3285, %v3461, 0
      %4035 = vmatprep.subr.mxu0 0.0
      %4036 = vmatpush1.msra.mxu0 %v2499
      %4037 = vmatprep.subr.mxu0 0.0
      %4038 = vmatpush1.msra.mxu0 %v2567
      %4039 = vmatprep.subr.mxu0 0.0
      %4040 = vmatpush1.msra.mxu0 0.0
      %4041 = vmatprep.subr.mxu0 0.0
      %4042 = vmatpush1.msra.mxu0 0.0
      %4043 = vmatprep.subr.mxu0 0.0
      %4044 = vmatpush1.msra.mxu0 0.0
      %4045 = vmatprep.subr.mxu0 0.0
      %4046 = vmatpush1.msra.mxu0 0.0
      %4047 = vmatprep.subr.mxu0 0.0
      %4048 = vmatpush1.msra.mxu0 0.0
      %4049 = vmatprep.subr.mxu0 0.0
      %4050 = vmatpush1.msra.mxu0 0.0
      %4051 = vmatprep.subr.mxu0 0.0
      %4052 = vmatpush1.msra.mxu0 0.0
      %4053 = vmatprep.subr.mxu0 0.0
      %4054 = vmatpush1.msra.mxu0 0.0
      %4055 = vmatprep.subr.mxu0 0.0
      %4056 = vmatpush1.msra.mxu0 0.0
      %4057 = vmatprep.subr.mxu0 0.0
      %4058 = vmatpush1.msra.mxu0 0.0
      %4059 = vmatprep.subr.mxu0 0.0
      %4060 = vmatpush1.msra.mxu0 0.0
      %4061 = vmatprep.subr.mxu0 0.0
      %4062 = vmatpush1.msra.mxu0 0.0
      %4063 = vmatprep.subr.mxu0 0.0
      %4064 = vmatpush1.msra.mxu0 0.0
      %4065 = vmatprep.subr.mxu0 0.0
      %4066 = vmatpush1.msra.mxu0 0.0
      %4067 = vmatprep.subr.mxu0 0.0
      %4068 = vmatpush1.msra.mxu0 0.0
      %4069 = vmatprep.subr.mxu0 0.0
      %4070 = vmatpush1.msra.mxu0 0.0
      %4071 = vmatprep.subr.mxu0 0.0
      %4072 = vmatpush1.msra.mxu0 0.0
      %4073 = vmatprep.subr.mxu0 0.0
      %4074 = vmatpush1.msra.mxu0 0.0
      %4075 = vmatprep.subr.mxu0 0.0
      %4076 = vmatpush1.msra.mxu0 0.0
      %4077 = vmatprep.subr.mxu0 0.0
      %4078 = vmatpush1.msra.mxu0 0.0
      %4079 = vmatprep.subr.mxu0 0.0
      %4080 = vmatpush1.msra.mxu0 0.0
      %4081 = vmatprep.subr.mxu0 0.0
      %4082 = vmatpush1.msra.mxu0 0.0
      %4083 = vmatprep.subr.mxu0 0.0
      %4084 = vmatpush1.msra.mxu0 0.0
      %4085 = vmatprep.subr.mxu0 0.0
      %4086 = vmatpush1.msra.mxu0 0.0
      %4087 = vmatprep.subr.mxu0 0.0
      %4088 = vmatpush1.msra.mxu0 0.0
      %4089 = vmatprep.subr.mxu0 0.0
      %4090 = vmatpush1.msra.mxu0 0.0
      %4091 = vmatprep.subr.mxu0 0.0
      %4092 = vmatpush1.msra.mxu0 0.0
      %4093 = vmatprep.subr.mxu0 0.0
      %4094 = vmatpush1.msra.mxu0 0.0
      %4095 = vmatprep.subr.mxu0 0.0
      %4096 = vmatpush1.msra.mxu0 0.0
      %4097 = vmatprep.subr.mxu0 0.0
      %4098 = vmatpush1.msra.mxu0 0.0
      %4099 = vmatprep.mubr.f32.mxu0 0.0
      %4100 = vmatmul.mubr.f32.gmra.mrb[0].mxu0 %v4030
      %v4101 = vpop.f32.mrb[0].mxu0
      %v4102 = vadd.f32 0.0, %v4101
      %v4103 = vpop.f32.mrb[0].mxu0
      %4104 = vmatprep.mubr.f32.mxu0 0.0
      %4105 = vmatmul.mubr.f32.gmra.mrb[0].mxu0 %v4033
      %v4106 = vpop.f32.mrb[0].mxu0
      %v4107 = vadd.f32 0.0, %v4106
      %v4108 = vpop.f32.mrb[0].mxu0
      %4109 = vdwg.mxu0
      %v4110 = vcombine.low %v3535, %v3859
      %v4111 = vcombine.high %v3535, %v3859
      %v4113 = vunpack.c.l.s4 1983009808
      %v4114 = vunpack.c.0.s8 %v4113
      %v4115 = vlaneseq
      %v4116 = vshrl.u32 %v4115, 7
      %v4117 = vsub.s32 %v4114, %v4116
      %v4118 = vrot.slane %v4110, %v4117
      %v4120 = vunpack.c.l.s4 1983009808
      %v4121 = vunpack.c.0.s8 %v4120
      %v4122 = vlaneseq
      %v4123 = vshrl.u32 %v4122, 7
      %v4124 = vsub.s32 %v4121, %v4123
      %v4125 = vrot.slane %v4111, %v4124
      %v4126 = vcombine.low %v3697, %v4021
      %v4127 = vcombine.high %v3697, %v4021
      %v4129 = vunpack.c.l.s4 1983009808
      %v4130 = vunpack.c.0.s8 %v4129
      %v4131 = vlaneseq
      %v4132 = vshrl.u32 %v4131, 7
      %v4133 = vsub.s32 %v4130, %v4132
      %v4134 = vrot.slane %v4126, %v4133
      %v4136 = vunpack.c.l.s4 1983009808
      %v4137 = vunpack.c.0.s8 %v4136
      %v4138 = vlaneseq
      %v4139 = vshrl.u32 %v4138, 7
      %v4140 = vsub.s32 %v4137, %v4139
      %v4141 = vrot.slane %v4127, %v4140
      %v4142 = vcombine.low %v4118, %v4134
      %v4143 = vcombine.high %v4118, %v4134
      %v4145 = vunpack.c.l.s4 1934713408
      %v4146 = vunpack.c.0.s8 %v4145
      %v4147 = vlaneseq
      %v4148 = vshrl.u32 %v4147, 7
      %v4149 = vsub.s32 %v4146, %v4148
      %v4150 = vrot.slane %v4142, %v4149
      %v4152 = vunpack.c.l.s4 1934713408
      %v4153 = vunpack.c.0.s8 %v4152
      %v4154 = vlaneseq
      %v4155 = vshrl.u32 %v4154, 7
      %v4156 = vsub.s32 %v4153, %v4155
      %v4157 = vrot.slane %v4143, %v4156
      %v4158 = vcombine.low %v4125, %v4141
      %v4159 = vcombine.high %v4125, %v4141
      %v4161 = vunpack.c.l.s4 1934713408
      %v4162 = vunpack.c.0.s8 %v4161
      %v4163 = vlaneseq
      %v4164 = vshrl.u32 %v4163, 7
      %v4165 = vsub.s32 %v4162, %v4164
      %v4166 = vrot.slane %v4158, %v4165
      %v4168 = vunpack.c.l.s4 1934713408
      %v4169 = vunpack.c.0.s8 %v4168
      %v4170 = vlaneseq
      %v4171 = vshrl.u32 %v4170, 7
      %v4172 = vsub.s32 %v4169, %v4171
      %v4173 = vrot.slane %v4159, %v4172
      %v4174 = vcombine.high %v4150, 0.0
      %v4175 = vcombine.high %v4157, 0.0
      %v4176 = vcombine.high %v4166, 0.0
      %v4177 = vcombine.high %v4173, 0.0
      %v4178 = vcombine.low %v3540, %v3864
      %v4179 = vcombine.high %v3540, %v3864
      %v4181 = vunpack.c.l.s4 1983009808
      %v4182 = vunpack.c.0.s8 %v4181
      %v4183 = vlaneseq
      %v4184 = vshrl.u32 %v4183, 7
      %v4185 = vsub.s32 %v4182, %v4184
      %v4186 = vrot.slane %v4178, %v4185
      %v4188 = vunpack.c.l.s4 1983009808
      %v4189 = vunpack.c.0.s8 %v4188
      %v4190 = vlaneseq
      %v4191 = vshrl.u32 %v4190, 7
      %v4192 = vsub.s32 %v4189, %v4191
      %v4193 = vrot.slane %v4179, %v4192
      %v4194 = vcombine.low %v3702, %v4026
      %v4195 = vcombine.high %v3702, %v4026
      %v4197 = vunpack.c.l.s4 1983009808
      %v4198 = vunpack.c.0.s8 %v4197
      %v4199 = vlaneseq
      %v4200 = vshrl.u32 %v4199, 7
      %v4201 = vsub.s32 %v4198, %v4200
      %v4202 = vrot.slane %v4194, %v4201
      %v4204 = vunpack.c.l.s4 1983009808
      %v4205 = vunpack.c.0.s8 %v4204
      %v4206 = vlaneseq
      %v4207 = vshrl.u32 %v4206, 7
      %v4208 = vsub.s32 %v4205, %v4207
      %v4209 = vrot.slane %v4195, %v4208
      %v4210 = vcombine.low %v4186, %v4202
      %v4211 = vcombine.high %v4186, %v4202
      %v4213 = vunpack.c.l.s4 1934713408
      %v4214 = vunpack.c.0.s8 %v4213
      %v4215 = vlaneseq
      %v4216 = vshrl.u32 %v4215, 7
      %v4217 = vsub.s32 %v4214, %v4216
      %v4218 = vrot.slane %v4210, %v4217
      %v4220 = vunpack.c.l.s4 1934713408
      %v4221 = vunpack.c.0.s8 %v4220
      %v4222 = vlaneseq
      %v4223 = vshrl.u32 %v4222, 7
      %v4224 = vsub.s32 %v4221, %v4223
      %v4225 = vrot.slane %v4211, %v4224
      %v4226 = vcombine.low %v4193, %v4209
      %v4227 = vcombine.high %v4193, %v4209
      %v4229 = vunpack.c.l.s4 1934713408
      %v4230 = vunpack.c.0.s8 %v4229
      %v4231 = vlaneseq
      %v4232 = vshrl.u32 %v4231, 7
      %v4233 = vsub.s32 %v4230, %v4232
      %v4234 = vrot.slane %v4226, %v4233
      %v4236 = vunpack.c.l.s4 1934713408
      %v4237 = vunpack.c.0.s8 %v4236
      %v4238 = vlaneseq
      %v4239 = vshrl.u32 %v4238, 7
      %v4240 = vsub.s32 %v4237, %v4239
      %v4241 = vrot.slane %v4227, %v4240
      %v4242 = vcombine.high %v4218, 0.0
      %v4243 = vcombine.high %v4225, 0.0
      %v4244 = vcombine.high %v4234, 0.0
      %v4245 = vcombine.high %v4241, 0.0
      %v4246 = vcombine.low %v3616, %v3940
      %v4247 = vcombine.high %v3616, %v3940
      %v4249 = vunpack.c.l.s4 1983009808
      %v4250 = vunpack.c.0.s8 %v4249
      %v4251 = vlaneseq
      %v4252 = vshrl.u32 %v4251, 7
      %v4253 = vsub.s32 %v4250, %v4252
      %v4254 = vrot.slane %v4246, %v4253
      %v4256 = vunpack.c.l.s4 1983009808
      %v4257 = vunpack.c.0.s8 %v4256
      %v4258 = vlaneseq
      %v4259 = vshrl.u32 %v4258, 7
      %v4260 = vsub.s32 %v4257, %v4259
      %v4261 = vrot.slane %v4247, %v4260
      %v4262 = vcombine.low %v3778, %v4102
      %v4263 = vcombine.high %v3778, %v4102
      %v4265 = vunpack.c.l.s4 1983009808
      %v4266 = vunpack.c.0.s8 %v4265
      %v4267 = vlaneseq
      %v4268 = vshrl.u32 %v4267, 7
      %v4269 = vsub.s32 %v4266, %v4268
      %v4270 = vrot.slane %v4262, %v4269
      %v4272 = vunpack.c.l.s4 1983009808
      %v4273 = vunpack.c.0.s8 %v4272
      %v4274 = vlaneseq
      %v4275 = vshrl.u32 %v4274, 7
      %v4276 = vsub.s32 %v4273, %v4275
      %v4277 = vrot.slane %v4263, %v4276
      %v4278 = vcombine.low %v4254, %v4270
      %v4279 = vcombine.high %v4254, %v4270
      %v4281 = vunpack.c.l.s4 1934713408
      %v4282 = vunpack.c.0.s8 %v4281
      %v4283 = vlaneseq
      %v4284 = vshrl.u32 %v4283, 7
      %v4285 = vsub.s32 %v4282, %v4284
      %v4286 = vrot.slane %v4278, %v4285
      %v4288 = vunpack.c.l.s4 1934713408
      %v4289 = vunpack.c.0.s8 %v4288
      %v4290 = vlaneseq
      %v4291 = vshrl.u32 %v4290, 7
      %v4292 = vsub.s32 %v4289, %v4291
      %v4293 = vrot.slane %v4279, %v4292
      %v4294 = vcombine.low %v4261, %v4277
      %v4295 = vcombine.high %v4261, %v4277
      %v4297 = vunpack.c.l.s4 1934713408
      %v4298 = vunpack.c.0.s8 %v4297
      %v4299 = vlaneseq
      %v4300 = vshrl.u32 %v4299, 7
      %v4301 = vsub.s32 %v4298, %v4300
      %v4302 = vrot.slane %v4294, %v4301
      %v4304 = vunpack.c.l.s4 1934713408
      %v4305 = vunpack.c.0.s8 %v4304
      %v4306 = vlaneseq
      %v4307 = vshrl.u32 %v4306, 7
      %v4308 = vsub.s32 %v4305, %v4307
      %v4309 = vrot.slane %v4295, %v4308
      %v4310 = vcombine.high %v4286, 0.0
      %v4311 = vcombine.high %v4293, 0.0
      %v4312 = vcombine.high %v4302, 0.0
      %v4313 = vcombine.high %v4309, 0.0
      %v4314 = vcombine.low %v3621, %v3945
      %v4315 = vcombine.high %v3621, %v3945
      %v4317 = vunpack.c.l.s4 1983009808
      %v4318 = vunpack.c.0.s8 %v4317
      %v4319 = vlaneseq
      %v4320 = vshrl.u32 %v4319, 7
      %v4321 = vsub.s32 %v4318, %v4320
      %v4322 = vrot.slane %v4314, %v4321
      %v4324 = vunpack.c.l.s4 1983009808
      %v4325 = vunpack.c.0.s8 %v4324
      %v4326 = vlaneseq
      %v4327 = vshrl.u32 %v4326, 7
      %v4328 = vsub.s32 %v4325, %v4327
      %v4329 = vrot.slane %v4315, %v4328
      %v4330 = vcombine.low %v3783, %v4107
      %v4331 = vcombine.high %v3783, %v4107
      %v4333 = vunpack.c.l.s4 1983009808
      %v4334 = vunpack.c.0.s8 %v4333
      %v4335 = vlaneseq
      %v4336 = vshrl.u32 %v4335, 7
      %v4337 = vsub.s32 %v4334, %v4336
      %v4338 = vrot.slane %v4330, %v4337
      %v4340 = vunpack.c.l.s4 1983009808
      %v4341 = vunpack.c.0.s8 %v4340
      %v4342 = vlaneseq
      %v4343 = vshrl.u32 %v4342, 7
      %v4344 = vsub.s32 %v4341, %v4343
      %v4345 = vrot.slane %v4331, %v4344
      %v4346 = vcombine.low %v4322, %v4338
      %v4347 = vcombine.high %v4322, %v4338
      %v4349 = vunpack.c.l.s4 1934713408
      %v4350 = vunpack.c.0.s8 %v4349
      %v4351 = vlaneseq
      %v4352 = vshrl.u32 %v4351, 7
      %v4353 = vsub.s32 %v4350, %v4352
      %v4354 = vrot.slane %v4346, %v4353
      %v4356 = vunpack.c.l.s4 1934713408
      %v4357 = vunpack.c.0.s8 %v4356
      %v4358 = vlaneseq
      %v4359 = vshrl.u32 %v4358, 7
      %v4360 = vsub.s32 %v4357, %v4359
      %v4361 = vrot.slane %v4347, %v4360
      %v4362 = vcombine.low %v4329, %v4345
      %v4363 = vcombine.high %v4329, %v4345
      %v4365 = vunpack.c.l.s4 1934713408
      %v4366 = vunpack.c.0.s8 %v4365
      %v4367 = vlaneseq
      %v4368 = vshrl.u32 %v4367, 7
      %v4369 = vsub.s32 %v4366, %v4368
      %v4370 = vrot.slane %v4362, %v4369
      %v4372 = vunpack.c.l.s4 1934713408
      %v4373 = vunpack.c.0.s8 %v4372
      %v4374 = vlaneseq
      %v4375 = vshrl.u32 %v4374, 7
      %v4376 = vsub.s32 %v4373, %v4375
      %v4377 = vrot.slane %v4363, %v4376
      %v4378 = vcombine.high %v4354, 0.0
      %v4379 = vcombine.high %v4361, 0.0
      %v4380 = vcombine.high %v4370, 0.0
      %v4381 = vcombine.high %v4377, 0.0
      %v4382 = vcombine.low %v4150, %v4157
      %v4384 = vunpack.c.l.s4 1983009808
      %v4385 = vunpack.c.0.s8 %v4384
      %v4386 = vlaneseq
      %v4387 = vshrl.u32 %v4386, 7
      %v4388 = vsub.s32 %v4385, %v4387
      %v4389 = vrot.slane %v4382, %v4388
      %v4390 = vcombine.low %v4174, %v4175
      %v4392 = vunpack.c.l.s4 1983009808
      %v4393 = vunpack.c.0.s8 %v4392
      %v4394 = vlaneseq
      %v4395 = vshrl.u32 %v4394, 7
      %v4396 = vsub.s32 %v4393, %v4395
      %v4397 = vrot.slane %v4390, %v4396
      %v4398 = vcombine.low %v4166, %v4173
      %v4400 = vunpack.c.l.s4 1983009808
      %v4401 = vunpack.c.0.s8 %v4400
      %v4402 = vlaneseq
      %v4403 = vshrl.u32 %v4402, 7
      %v4404 = vsub.s32 %v4401, %v4403
      %v4405 = vrot.slane %v4398, %v4404
      %v4406 = vcombine.low %v4176, %v4177
      %v4408 = vunpack.c.l.s4 1983009808
      %v4409 = vunpack.c.0.s8 %v4408
      %v4410 = vlaneseq
      %v4411 = vshrl.u32 %v4410, 7
      %v4412 = vsub.s32 %v4409, %v4411
      %v4413 = vrot.slane %v4406, %v4412
      %v4414 = vcombine.low %v4389, %v4397
      %v4415 = vcombine.high %v4389, %v4397
      %v4417 = vunpack.c.l.s4 1934713408
      %v4418 = vunpack.c.0.s8 %v4417
      %v4419 = vlaneseq
      %v4420 = vshrl.u32 %v4419, 7
      %v4421 = vsub.s32 %v4418, %v4420
      %v4422 = vrot.slane %v4414, %v4421
      %v4424 = vunpack.c.l.s4 1934713408
      %v4425 = vunpack.c.0.s8 %v4424
      %v4426 = vlaneseq
      %v4427 = vshrl.u32 %v4426, 7
      %v4428 = vsub.s32 %v4425, %v4427
      %v4429 = vrot.slane %v4415, %v4428
      %v4430 = vcombine.low %v4405, %v4413
      %v4431 = vcombine.high %v4405, %v4413
      %v4433 = vunpack.c.l.s4 1934713408
      %v4434 = vunpack.c.0.s8 %v4433
      %v4435 = vlaneseq
      %v4436 = vshrl.u32 %v4435, 7
      %v4437 = vsub.s32 %v4434, %v4436
      %v4438 = vrot.slane %v4430, %v4437
      %v4440 = vunpack.c.l.s4 1934713408
      %v4441 = vunpack.c.0.s8 %v4440
      %v4442 = vlaneseq
      %v4443 = vshrl.u32 %v4442, 7
      %v4444 = vsub.s32 %v4441, %v4443
      %v4445 = vrot.slane %v4431, %v4444
      %v4446 = vcombine.low %v4422, %v4438
      %v4447 = vcombine.high %v4422, %v4438
      %v4448 = vcombine.low %v4429, %v4445
      %v4449 = vcombine.high %v4429, %v4445
      %v4450 = vcombine.low %v4218, %v4225
      %v4452 = vunpack.c.l.s4 1983009808
      %v4453 = vunpack.c.0.s8 %v4452
      %v4454 = vlaneseq
      %v4455 = vshrl.u32 %v4454, 7
      %v4456 = vsub.s32 %v4453, %v4455
      %v4457 = vrot.slane %v4450, %v4456
      %v4458 = vcombine.low %v4242, %v4243
      %v4460 = vunpack.c.l.s4 1983009808
      %v4461 = vunpack.c.0.s8 %v4460
      %v4462 = vlaneseq
      %v4463 = vshrl.u32 %v4462, 7
      %v4464 = vsub.s32 %v4461, %v4463
      %v4465 = vrot.slane %v4458, %v4464
      %v4466 = vcombine.low %v4234, %v4241
      %v4468 = vunpack.c.l.s4 1983009808
      %v4469 = vunpack.c.0.s8 %v4468
      %v4470 = vlaneseq
      %v4471 = vshrl.u32 %v4470, 7
      %v4472 = vsub.s32 %v4469, %v4471
      %v4473 = vrot.slane %v4466, %v4472
      %v4474 = vcombine.low %v4244, %v4245
      %v4476 = vunpack.c.l.s4 1983009808
      %v4477 = vunpack.c.0.s8 %v4476
      %v4478 = vlaneseq
      %v4479 = vshrl.u32 %v4478, 7
      %v4480 = vsub.s32 %v4477, %v4479
      %v4481 = vrot.slane %v4474, %v4480
      %v4482 = vcombine.low %v4457, %v4465
      %v4483 = vcombine.high %v4457, %v4465
      %v4485 = vunpack.c.l.s4 1934713408
      %v4486 = vunpack.c.0.s8 %v4485
      %v4487 = vlaneseq
      %v4488 = vshrl.u32 %v4487, 7
      %v4489 = vsub.s32 %v4486, %v4488
      %v4490 = vrot.slane %v4482, %v4489
      %v4492 = vunpack.c.l.s4 1934713408
      %v4493 = vunpack.c.0.s8 %v4492
      %v4494 = vlaneseq
      %v4495 = vshrl.u32 %v4494, 7
      %v4496 = vsub.s32 %v4493, %v4495
      %v4497 = vrot.slane %v4483, %v4496
      %v4498 = vcombine.low %v4473, %v4481
      %v4499 = vcombine.high %v4473, %v4481
      %v4501 = vunpack.c.l.s4 1934713408
      %v4502 = vunpack.c.0.s8 %v4501
      %v4503 = vlaneseq
      %v4504 = vshrl.u32 %v4503, 7
      %v4505 = vsub.s32 %v4502, %v4504
      %v4506 = vrot.slane %v4498, %v4505
      %v4508 = vunpack.c.l.s4 1934713408
      %v4509 = vunpack.c.0.s8 %v4508
      %v4510 = vlaneseq
      %v4511 = vshrl.u32 %v4510, 7
      %v4512 = vsub.s32 %v4509, %v4511
      %v4513 = vrot.slane %v4499, %v4512
      %v4514 = vcombine.low %v4490, %v4506
      %v4515 = vcombine.high %v4490, %v4506
      %v4516 = vcombine.low %v4497, %v4513
      %v4517 = vcombine.high %v4497, %v4513
      %v4518 = vcombine.low %v4286, %v4293
      %v4520 = vunpack.c.l.s4 1983009808
      %v4521 = vunpack.c.0.s8 %v4520
      %v4522 = vlaneseq
      %v4523 = vshrl.u32 %v4522, 7
      %v4524 = vsub.s32 %v4521, %v4523
      %v4525 = vrot.slane %v4518, %v4524
      %v4526 = vcombine.low %v4310, %v4311
      %v4528 = vunpack.c.l.s4 1983009808
      %v4529 = vunpack.c.0.s8 %v4528
      %v4530 = vlaneseq
      %v4531 = vshrl.u32 %v4530, 7
      %v4532 = vsub.s32 %v4529, %v4531
      %v4533 = vrot.slane %v4526, %v4532
      %v4534 = vcombine.low %v4302, %v4309
      %v4536 = vunpack.c.l.s4 1983009808
      %v4537 = vunpack.c.0.s8 %v4536
      %v4538 = vlaneseq
      %v4539 = vshrl.u32 %v4538, 7
      %v4540 = vsub.s32 %v4537, %v4539
      %v4541 = vrot.slane %v4534, %v4540
      %v4542 = vcombine.low %v4312, %v4313
      %v4544 = vunpack.c.l.s4 1983009808
      %v4545 = vunpack.c.0.s8 %v4544
      %v4546 = vlaneseq
      %v4547 = vshrl.u32 %v4546, 7
      %v4548 = vsub.s32 %v4545, %v4547
      %v4549 = vrot.slane %v4542, %v4548
      %v4550 = vcombine.low %v4525, %v4533
      %v4551 = vcombine.high %v4525, %v4533
      %v4553 = vunpack.c.l.s4 1934713408
      %v4554 = vunpack.c.0.s8 %v4553
      %v4555 = vlaneseq
      %v4556 = vshrl.u32 %v4555, 7
      %v4557 = vsub.s32 %v4554, %v4556
      %v4558 = vrot.slane %v4550, %v4557
      %v4560 = vunpack.c.l.s4 1934713408
      %v4561 = vunpack.c.0.s8 %v4560
      %v4562 = vlaneseq
      %v4563 = vshrl.u32 %v4562, 7
      %v4564 = vsub.s32 %v4561, %v4563
      %v4565 = vrot.slane %v4551, %v4564
      %v4566 = vcombine.low %v4541, %v4549
      %v4567 = vcombine.high %v4541, %v4549
      %v4569 = vunpack.c.l.s4 1934713408
      %v4570 = vunpack.c.0.s8 %v4569
      %v4571 = vlaneseq
      %v4572 = vshrl.u32 %v4571, 7
      %v4573 = vsub.s32 %v4570, %v4572
      %v4574 = vrot.slane %v4566, %v4573
      %v4576 = vunpack.c.l.s4 1934713408
      %v4577 = vunpack.c.0.s8 %v4576
      %v4578 = vlaneseq
      %v4579 = vshrl.u32 %v4578, 7
      %v4580 = vsub.s32 %v4577, %v4579
      %v4581 = vrot.slane %v4567, %v4580
      %v4582 = vcombine.low %v4558, %v4574
      %v4583 = vcombine.high %v4558, %v4574
      %v4584 = vcombine.low %v4565, %v4581
      %v4585 = vcombine.high %v4565, %v4581
      %v4586 = vcombine.low %v4354, %v4361
      %v4588 = vunpack.c.l.s4 1983009808
      %v4589 = vunpack.c.0.s8 %v4588
      %v4590 = vlaneseq
      %v4591 = vshrl.u32 %v4590, 7
      %v4592 = vsub.s32 %v4589, %v4591
      %v4593 = vrot.slane %v4586, %v4592
      %v4594 = vcombine.low %v4378, %v4379
      %v4596 = vunpack.c.l.s4 1983009808
      %v4597 = vunpack.c.0.s8 %v4596
      %v4598 = vlaneseq
      %v4599 = vshrl.u32 %v4598, 7
      %v4600 = vsub.s32 %v4597, %v4599
      %v4601 = vrot.slane %v4594, %v4600
      %v4602 = vcombine.low %v4370, %v4377
      %v4604 = vunpack.c.l.s4 1983009808
      %v4605 = vunpack.c.0.s8 %v4604
      %v4606 = vlaneseq
      %v4607 = vshrl.u32 %v4606, 7
      %v4608 = vsub.s32 %v4605, %v4607
      %v4609 = vrot.slane %v4602, %v4608
      %v4610 = vcombine.low %v4380, %v4381
      %v4612 = vunpack.c.l.s4 1983009808
      %v4613 = vunpack.c.0.s8 %v4612
      %v4614 = vlaneseq
      %v4615 = vshrl.u32 %v4614, 7
      %v4616 = vsub.s32 %v4613, %v4615
      %v4617 = vrot.slane %v4610, %v4616
      %v4618 = vcombine.low %v4593, %v4601
      %v4619 = vcombine.high %v4593, %v4601
      %v4621 = vunpack.c.l.s4 1934713408
      %v4622 = vunpack.c.0.s8 %v4621
      %v4623 = vlaneseq
      %v4624 = vshrl.u32 %v4623, 7
      %v4625 = vsub.s32 %v4622, %v4624
      %v4626 = vrot.slane %v4618, %v4625
      %v4628 = vunpack.c.l.s4 1934713408
      %v4629 = vunpack.c.0.s8 %v4628
      %v4630 = vlaneseq
      %v4631 = vshrl.u32 %v4630, 7
      %v4632 = vsub.s32 %v4629, %v4631
      %v4633 = vrot.slane %v4619, %v4632
      %v4634 = vcombine.low %v4609, %v4617
      %v4635 = vcombine.high %v4609, %v4617
      %v4637 = vunpack.c.l.s4 1934713408
      %v4638 = vunpack.c.0.s8 %v4637
      %v4639 = vlaneseq
      %v4640 = vshrl.u32 %v4639, 7
      %v4641 = vsub.s32 %v4638, %v4640
      %v4642 = vrot.slane %v4634, %v4641
      %v4644 = vunpack.c.l.s4 1934713408
      %v4645 = vunpack.c.0.s8 %v4644
      %v4646 = vlaneseq
      %v4647 = vshrl.u32 %v4646, 7
      %v4648 = vsub.s32 %v4645, %v4647
      %v4649 = vrot.slane %v4635, %v4648
      %v4650 = vcombine.low %v4626, %v4642
      %v4651 = vcombine.high %v4626, %v4642
      %v4652 = vcombine.low %v4633, %v4649
      %v4653 = vcombine.high %v4633, %v4649
      %4658 = vrot.lane.b32.xlu0 %v4447, 8
      %v4659 = vpop.permute.xlu0 %4658
      %4660 = vrot.lane.b32.xlu0 %v4515, 8
      %v4661 = vpop.permute.xlu0 %4660
      %4662 = vrot.lane.b32.xlu0 %v4583, 8
      %v4663 = vpop.permute.xlu0 %4662
      %4664 = vrot.lane.b32.xlu0 %v4651, 8
      %v4665 = vpop.permute.xlu0 %4664
      %4674 = vrot.lane.b32.xlu0 %v4448, 16
      %v4675 = vpop.permute.xlu0 %4674
      %4676 = vrot.lane.b32.xlu0 %v4516, 16
      %v4677 = vpop.permute.xlu0 %4676
      %4678 = vrot.lane.b32.xlu0 %v4584, 16
      %v4679 = vpop.permute.xlu0 %4678
      %4680 = vrot.lane.b32.xlu0 %v4652, 16
      %v4681 = vpop.permute.xlu0 %4680
      %4690 = vrot.lane.b32.xlu0 %v4449, 24
      %v4691 = vpop.permute.xlu0 %4690
      %4692 = vrot.lane.b32.xlu0 %v4517, 24
      %v4693 = vpop.permute.xlu0 %4692
      %4694 = vrot.lane.b32.xlu0 %v4585, 24
      %v4695 = vpop.permute.xlu0 %4694
      %4696 = vrot.lane.b32.xlu0 %v4653, 24
      %v4697 = vpop.permute.xlu0 %4696
      %v4702 = vsel %vm2568, %v4446, %v4659
      %v4703 = vsel %vm2568, %v4514, %v4661
      %v4704 = vsel %vm2568, %v4582, %v4663
      %v4705 = vsel %vm2568, %v4650, %v4665
      %v4706 = vsel %vm3285, %v4702, %v4675
      %v4707 = vsel %vm3285, %v4703, %v4677
      %v4708 = vsel %vm3285, %v4704, %v4679
      %v4709 = vsel %vm3285, %v4705, %v4681
      %vm4710 = vcmask 195584
      %v4711 = vsel %vm4710, %v4706, %v4691
      %v4712 = vsel %vm4710, %v4707, %v4693
      %v4713 = vsel %vm4710, %v4708, %v4695
      %v4714 = vsel %vm4710, %v4709, %v4697
      %v4715 = vld [vmem:[%s6] sm:$0xff]
      %v4716 = vld [vmem:[%s6 + $0x8] sm:$0xff]
      %v4717 = vld [vmem:[%s6 + $0x10] sm:$0xff]
      %v4718 = vld [vmem:[%s6 + $0x18] sm:$0xff]
      %v4719 = vld [vmem:[%s7] sm:$0x1]
      %v4721 = vlaneseq
      %v4722 = vshrl.u32 %v4721, 7
      %v4723 = vsub.s32 0, %v4722
      %v4724 = vrot.slane %v4719, %v4723
      %v4727 = vsel %vm567, %v4711, 0
      %v4730 = vsel %vm567, %v4712, 0
      %v4733 = vsel %vm567, %v4713, 0
      %v4736 = vsel %vm567, %v4714, 0
      %4738 = vmatprep.subr.mxu0 0.0
      %4739 = vmatpush1.msra.mxu0 %v4715
      %4740 = vmatprep.subr.mxu0 0.0
      %4741 = vmatpush1.msra.mxu0 %v4716
      %4742 = vmatprep.subr.mxu0 0.0
      %4743 = vmatpush1.msra.mxu0 %v4717
      %4744 = vmatprep.subr.mxu0 0.0
      %4745 = vmatpush1.msra.mxu0 %v4718
      %4746 = vmatprep.subr.mxu0 0.0
      %4747 = vmatpush1.msra.mxu0 0.0
      %4748 = vmatprep.subr.mxu0 0.0
      %4749 = vmatpush1.msra.mxu0 0.0
      %4750 = vmatprep.subr.mxu0 0.0
      %4751 = vmatpush1.msra.mxu0 0.0
      %4752 = vmatprep.subr.mxu0 0.0
      %4753 = vmatpush1.msra.mxu0 0.0
      %4754 = vmatprep.subr.mxu0 0.0
      %4755 = vmatpush1.msra.mxu0 0.0
      %4756 = vmatprep.subr.mxu0 0.0
      %4757 = vmatpush1.msra.mxu0 0.0
      %4758 = vmatprep.subr.mxu0 0.0
      %4759 = vmatpush1.msra.mxu0 0.0
      %4760 = vmatprep.subr.mxu0 0.0
      %4761 = vmatpush1.msra.mxu0 0.0
      %4762 = vmatprep.subr.mxu0 0.0
      %4763 = vmatpush1.msra.mxu0 0.0
      %4764 = vmatprep.subr.mxu0 0.0
      %4765 = vmatpush1.msra.mxu0 0.0
      %4766 = vmatprep.subr.mxu0 0.0
      %4767 = vmatpush1.msra.mxu0 0.0
      %4768 = vmatprep.subr.mxu0 0.0
      %4769 = vmatpush1.msra.mxu0 0.0
      %4770 = vmatprep.subr.mxu0 0.0
      %4771 = vmatpush1.msra.mxu0 0.0
      %4772 = vmatprep.subr.mxu0 0.0
      %4773 = vmatpush1.msra.mxu0 0.0
      %4774 = vmatprep.subr.mxu0 0.0
      %4775 = vmatpush1.msra.mxu0 0.0
      %4776 = vmatprep.subr.mxu0 0.0
      %4777 = vmatpush1.msra.mxu0 0.0
      %4778 = vmatprep.subr.mxu0 0.0
      %4779 = vmatpush1.msra.mxu0 0.0
      %4780 = vmatprep.subr.mxu0 0.0
      %4781 = vmatpush1.msra.mxu0 0.0
      %4782 = vmatprep.subr.mxu0 0.0
      %4783 = vmatpush1.msra.mxu0 0.0
      %4784 = vmatprep.subr.mxu0 0.0
      %4785 = vmatpush1.msra.mxu0 0.0
      %4786 = vmatprep.subr.mxu0 0.0
      %4787 = vmatpush1.msra.mxu0 0.0
      %4788 = vmatprep.subr.mxu0 0.0
      %4789 = vmatpush1.msra.mxu0 0.0
      %4790 = vmatprep.subr.mxu0 0.0
      %4791 = vmatpush1.msra.mxu0 0.0
      %4792 = vmatprep.subr.mxu0 0.0
      %4793 = vmatpush1.msra.mxu0 0.0
      %4794 = vmatprep.subr.mxu0 0.0
      %4795 = vmatpush1.msra.mxu0 0.0
      %4796 = vmatprep.subr.mxu0 0.0
      %4797 = vmatpush1.msra.mxu0 0.0
      %4798 = vmatprep.subr.mxu0 0.0
      %4799 = vmatpush1.msra.mxu0 0.0
      %4800 = vmatprep.subr.mxu0 0.0
      %4801 = vmatpush1.msra.mxu0 0.0
      %4802 = vmatprep.mubr.f32.mxu0 0.0
      %4803 = vmatmul.mubr.f32.gmra.mrb[0].mxu0 %v4727
      %v4804 = vpop.f32.mrb[0].mxu0
      %v4805 = vadd.f32 %v4724, %v4804
      %v4806 = vpop.f32.mrb[0].mxu0
      %4807 = vmatprep.mubr.f32.mxu0 0.0
      %4808 = vmatmul.mubr.f32.gmra.mrb[0].mxu0 %v4730
      %v4809 = vpop.f32.mrb[0].mxu0
      %v4810 = vadd.f32 %v4724, %v4809
      %v4811 = vpop.f32.mrb[0].mxu0
      %4812 = vmatprep.mubr.f32.mxu0 0.0
      %4813 = vmatmul.mubr.f32.gmra.mrb[0].mxu0 %v4733
      %v4814 = vpop.f32.mrb[0].mxu0
      %v4815 = vadd.f32 %v4724, %v4814
      %v4816 = vpop.f32.mrb[0].mxu0
      %4817 = vmatprep.mubr.f32.mxu0 0.0
      %4818 = vmatmul.mubr.f32.gmra.mrb[0].mxu0 %v4736
      %v4819 = vpop.f32.mrb[0].mxu0
      %v4820 = vadd.f32 %v4724, %v4819
      %v4821 = vpop.f32.mrb[0].mxu0
      %4822 = vdwg.mxu0
      %v4823 = vld [vmem:[%s8] sm:$0xff]
      %v4824 = vld [vmem:[%s8 + $0x8] sm:$0xff]
      %v4825 = vld [vmem:[%s8 + $0x10] sm:$0xff]
      %v4826 = vld [vmem:[%s8 + $0x18] sm:$0xff]
      %v4827 = vld [vmem:[%s9] sm:$0xff]
      %v4828 = vld [vmem:[%s9 + $0x8] sm:$0xff]
      %v4829 = vld [vmem:[%s9 + $0x10] sm:$0xff]
      %v4830 = vld [vmem:[%s9 + $0x18] sm:$0xff]
      %v4832 = vsel %vm567, %v4805, 0
      %v4835 = vsel %vm567, %v4810, 0
      %v4838 = vsel %vm567, %v4815, 0
      %v4841 = vsel %vm567, %v4820, 0
      %4843 = vmatprep.subr.mxu0 0.0
      %4844 = vmatpush1.msra.mxu0 %v4827
      %4845 = vmatprep.subr.mxu0 0.0
      %4846 = vmatpush1.msra.mxu0 %v4828
      %4847 = vmatprep.subr.mxu0 0.0
      %4848 = vmatpush1.msra.mxu0 %v4829
      %4849 = vmatprep.subr.mxu0 0.0
      %4850 = vmatpush1.msra.mxu0 %v4830
      %4851 = vmatprep.subr.mxu0 0.0
      %4852 = vmatpush1.msra.mxu0 0.0
      %4853 = vmatprep.subr.mxu0 0.0
      %4854 = vmatpush1.msra.mxu0 0.0
      %4855 = vmatprep.subr.mxu0 0.0
      %4856 = vmatpush1.msra.mxu0 0.0
      %4857 = vmatprep.subr.mxu0 0.0
      %4858 = vmatpush1.msra.mxu0 0.0
      %4859 = vmatprep.subr.mxu0 0.0
      %4860 = vmatpush1.msra.mxu0 0.0
      %4861 = vmatprep.subr.mxu0 0.0
      %4862 = vmatpush1.msra.mxu0 0.0
      %4863 = vmatprep.subr.mxu0 0.0
      %4864 = vmatpush1.msra.mxu0 0.0
      %4865 = vmatprep.subr.mxu0 0.0
      %4866 = vmatpush1.msra.mxu0 0.0
      %4867 = vmatprep.subr.mxu0 0.0
      %4868 = vmatpush1.msra.mxu0 0.0
      %4869 = vmatprep.subr.mxu0 0.0
      %4870 = vmatpush1.msra.mxu0 0.0
      %4871 = vmatprep.subr.mxu0 0.0
      %4872 = vmatpush1.msra.mxu0 0.0
      %4873 = vmatprep.subr.mxu0 0.0
      %4874 = vmatpush1.msra.mxu0 0.0
      %4875 = vmatprep.subr.mxu0 0.0
      %4876 = vmatpush1.msra.mxu0 0.0
      %4877 = vmatprep.subr.mxu0 0.0
      %4878 = vmatpush1.msra.mxu0 0.0
      %4879 = vmatprep.subr.mxu0 0.0
      %4880 = vmatpush1.msra.mxu0 0.0
      %4881 = vmatprep.subr.mxu0 0.0
      %4882 = vmatpush1.msra.mxu0 0.0
      %4883 = vmatprep.subr.mxu0 0.0
      %4884 = vmatpush1.msra.mxu0 0.0
      %4885 = vmatprep.subr.mxu0 0.0
      %4886 = vmatpush1.msra.mxu0 0.0
      %4887 = vmatprep.subr.mxu0 0.0
      %4888 = vmatpush1.msra.mxu0 0.0
      %4889 = vmatprep.subr.mxu0 0.0
      %4890 = vmatpush1.msra.mxu0 0.0
      %4891 = vmatprep.subr.mxu0 0.0
      %4892 = vmatpush1.msra.mxu0 0.0
      %4893 = vmatprep.subr.mxu0 0.0
      %4894 = vmatpush1.msra.mxu0 0.0
      %4895 = vmatprep.subr.mxu0 0.0
      %4896 = vmatpush1.msra.mxu0 0.0
      %4897 = vmatprep.subr.mxu0 0.0
      %4898 = vmatpush1.msra.mxu0 0.0
      %4899 = vmatprep.subr.mxu0 0.0
      %4900 = vmatpush1.msra.mxu0 0.0
      %4901 = vmatprep.subr.mxu0 0.0
      %4902 = vmatpush1.msra.mxu0 0.0
      %4903 = vmatprep.subr.mxu0 0.0
      %4904 = vmatpush1.msra.mxu0 0.0
      %4905 = vmatprep.subr.mxu0 0.0
      %4906 = vmatpush1.msra.mxu0 0.0
      %4907 = vmatprep.mubr.f32.mxu0 0.0
      %4908 = vmatmul.mubr.f32.gmra.mrb[0].mxu0 %v4832
      %v4909 = vpop.f32.mrb[0].mxu0
      %v4910 = vadd.f32 0.0, %v4909
      %v4911 = vpop.f32.mrb[0].mxu0
      %4912 = vmatprep.mubr.f32.mxu0 0.0
      %4913 = vmatmul.mubr.f32.gmra.mrb[0].mxu0 %v4835
      %v4914 = vpop.f32.mrb[0].mxu0
      %v4915 = vadd.f32 0.0, %v4914
      %v4916 = vpop.f32.mrb[0].mxu0
      %4917 = vmatprep.mubr.f32.mxu0 0.0
      %4918 = vmatmul.mubr.f32.gmra.mrb[0].mxu0 %v4838
      %v4919 = vpop.f32.mrb[0].mxu0
      %v4920 = vadd.f32 0.0, %v4919
      %v4921 = vpop.f32.mrb[0].mxu0
      %4922 = vmatprep.mubr.f32.mxu0 0.0
      %4923 = vmatmul.mubr.f32.gmra.mrb[0].mxu0 %v4841
      %v4924 = vpop.f32.mrb[0].mxu0
      %v4925 = vadd.f32 0.0, %v4924
      %v4926 = vpop.f32.mrb[0].mxu0
      %4927 = vdwg.mxu0
      %4928 = vmatprep.subr.mxu0 0.0
      %4929 = vmatpush1.msra.mxu0 %v4823
      %4930 = vmatprep.subr.mxu0 0.0
      %4931 = vmatpush1.msra.mxu0 %v4824
      %4932 = vmatprep.subr.mxu0 0.0
      %4933 = vmatpush1.msra.mxu0 %v4825
      %4934 = vmatprep.subr.mxu0 0.0
      %4935 = vmatpush1.msra.mxu0 %v4826
      %4936 = vmatprep.subr.mxu0 0.0
      %4937 = vmatpush1.msra.mxu0 0.0
      %4938 = vmatprep.subr.mxu0 0.0
      %4939 = vmatpush1.msra.mxu0 0.0
      %4940 = vmatprep.subr.mxu0 0.0
      %4941 = vmatpush1.msra.mxu0 0.0
      %4942 = vmatprep.subr.mxu0 0.0
      %4943 = vmatpush1.msra.mxu0 0.0
      %4944 = vmatprep.subr.mxu0 0.0
      %4945 = vmatpush1.msra.mxu0 0.0
      %4946 = vmatprep.subr.mxu0 0.0
      %4947 = vmatpush1.msra.mxu0 0.0
      %4948 = vmatprep.subr.mxu0 0.0
      %4949 = vmatpush1.msra.mxu0 0.0
      %4950 = vmatprep.subr.mxu0 0.0
      %4951 = vmatpush1.msra.mxu0 0.0
      %4952 = vmatprep.subr.mxu0 0.0
      %4953 = vmatpush1.msra.mxu0 0.0
      %4954 = vmatprep.subr.mxu0 0.0
      %4955 = vmatpush1.msra.mxu0 0.0
      %4956 = vmatprep.subr.mxu0 0.0
      %4957 = vmatpush1.msra.mxu0 0.0
      %4958 = vmatprep.subr.mxu0 0.0
      %4959 = vmatpush1.msra.mxu0 0.0
      %4960 = vmatprep.subr.mxu0 0.0
      %4961 = vmatpush1.msra.mxu0 0.0
      %4962 = vmatprep.subr.mxu0 0.0
      %4963 = vmatpush1.msra.mxu0 0.0
      %4964 = vmatprep.subr.mxu0 0.0
      %4965 = vmatpush1.msra.mxu0 0.0
      %4966 = vmatprep.subr.mxu0 0.0
      %4967 = vmatpush1.msra.mxu0 0.0
      %4968 = vmatprep.subr.mxu0 0.0
      %4969 = vmatpush1.msra.mxu0 0.0
      %4970 = vmatprep.subr.mxu0 0.0
      %4971 = vmatpush1.msra.mxu0 0.0
      %4972 = vmatprep.subr.mxu0 0.0
      %4973 = vmatpush1.msra.mxu0 0.0
      %4974 = vmatprep.subr.mxu0 0.0
      %4975 = vmatpush1.msra.mxu0 0.0
      %4976 = vmatprep.subr.mxu0 0.0
      %4977 = vmatpush1.msra.mxu0 0.0
      %4978 = vmatprep.subr.mxu0 0.0
      %4979 = vmatpush1.msra.mxu0 0.0
      %4980 = vmatprep.subr.mxu0 0.0
      %4981 = vmatpush1.msra.mxu0 0.0
      %4982 = vmatprep.subr.mxu0 0.0
      %4983 = vmatpush1.msra.mxu0 0.0
      %4984 = vmatprep.subr.mxu0 0.0
      %4985 = vmatpush1.msra.mxu0 0.0
      %4986 = vmatprep.subr.mxu0 0.0
      %4987 = vmatpush1.msra.mxu0 0.0
      %4988 = vmatprep.subr.mxu0 0.0
      %4989 = vmatpush1.msra.mxu0 0.0
      %4990 = vmatprep.subr.mxu0 0.0
      %4991 = vmatpush1.msra.mxu0 0.0
      %4992 = vmatprep.mubr.f32.mxu0 0.0
      %4993 = vmatmul.mubr.f32.gmra.mrb[0].mxu0 %v712
      %v4994 = vpop.f32.mrb[0].mxu0
      %v4995 = vadd.f32 %v4910, %v4994
      %v4996 = vpop.f32.mrb[0].mxu0
      %4997 = vmatprep.mubr.f32.mxu0 0.0
      %4998 = vmatmul.mubr.f32.gmra.mrb[0].mxu0 %v715
      %v4999 = vpop.f32.mrb[0].mxu0
      %v5000 = vadd.f32 %v4915, %v4999
      %v5001 = vpop.f32.mrb[0].mxu0
      %5002 = vmatprep.mubr.f32.mxu0 0.0
      %5003 = vmatmul.mubr.f32.gmra.mrb[0].mxu0 %v718
      %v5004 = vpop.f32.mrb[0].mxu0
      %v5005 = vadd.f32 %v4920, %v5004
      %v5006 = vpop.f32.mrb[0].mxu0
      %5007 = vmatprep.mubr.f32.mxu0 0.0
      %5008 = vmatmul.mubr.f32.gmra.mrb[0].mxu0 %v721
      %v5009 = vpop.f32.mrb[0].mxu0
      %v5010 = vadd.f32 %v4925, %v5009
      %v5011 = vpop.f32.mrb[0].mxu0
      %5012 = vdwg.mxu0
      %v5013 = vld [vmem:[%s10] sm:$0x1]
      %v5015 = vlaneseq
      %v5016 = vshrl.u32 %v5015, 7
      %v5017 = vsub.s32 0, %v5016
      %v5018 = vrot.slane %v5013, %v5017
      %v5020 = vadd.f32 %v4995, %v5018
      %v5021 = vadd.f32 %v5000, %v5018
      %v5022 = vadd.f32 %v5005, %v5018
      %v5023 = vadd.f32 %v5010, %v5018
      %vm5024 = vcmp.ge.f32.partialorder %v5020, 0.0
      %vm5025 = vcmp.ge.f32.partialorder %v5021, 0.0
      %vm5026 = vcmp.ge.f32.partialorder %v5022, 0.0
      %vm5027 = vcmp.ge.f32.partialorder %v5023, 0.0
      %v5028 = vmul.f32 %v5020, 0.2
      %v5029 = vmul.f32 %v5021, 0.2
      %v5030 = vmul.f32 %v5022, 0.2
      %v5031 = vmul.f32 %v5023, 0.2
      %v5032 = vsel %vm5024, %v5020, %v5028
      %v5033 = vsel %vm5025, %v5021, %v5029
      %v5034 = vsel %vm5026, %v5022, %v5030
      %v5035 = vsel %vm5027, %v5023, %v5031
      %v5036 = vmul.f32 %v5032, 1.4142135
      %v5037 = vmul.f32 %v5033, 1.4142135
      %v5038 = vmul.f32 %v5034, 1.4142135
      %v5039 = vmul.f32 %v5035, 1.4142135
      %v5040 = vld [vmem:[%s11] sm:$0xff]
      %v5041 = vld [vmem:[%s11 + $0x8] sm:$0xff]
      %v5042 = vld [vmem:[%s11 + $0x10] sm:$0xff]
      %v5043 = vld [vmem:[%s11 + $0x18] sm:$0xff]
      %v5044 = vld [vmem:[%s12] sm:$0x1]
      %v5046 = vlaneseq
      %v5047 = vshrl.u32 %v5046, 7
      %v5048 = vsub.s32 0, %v5047
      %v5049 = vrot.slane %v5044, %v5048
      %v5052 = vsel %vm567, %v5036, 0
      %v5055 = vsel %vm567, %v5037, 0
      %v5058 = vsel %vm567, %v5038, 0
      %v5061 = vsel %vm567, %v5039, 0
      %5063 = vmatprep.subr.mxu0 0.0
      %5064 = vmatpush1.msra.mxu0 %v5040
      %5065 = vmatprep.subr.mxu0 0.0
      %5066 = vmatpush1.msra.mxu0 %v5041
      %5067 = vmatprep.subr.mxu0 0.0
      %5068 = vmatpush1.msra.mxu0 %v5042
      %5069 = vmatprep.subr.mxu0 0.0
      %5070 = vmatpush1.msra.mxu0 %v5043
      %5071 = vmatprep.subr.mxu0 0.0
      %5072 = vmatpush1.msra.mxu0 0.0
      %5073 = vmatprep.subr.mxu0 0.0
      %5074 = vmatpush1.msra.mxu0 0.0
      %5075 = vmatprep.subr.mxu0 0.0
      %5076 = vmatpush1.msra.mxu0 0.0
      %5077 = vmatprep.subr.mxu0 0.0
      %5078 = vmatpush1.msra.mxu0 0.0
      %5079 = vmatprep.subr.mxu0 0.0
      %5080 = vmatpush1.msra.mxu0 0.0
      %5081 = vmatprep.subr.mxu0 0.0
      %5082 = vmatpush1.msra.mxu0 0.0
      %5083 = vmatprep.subr.mxu0 0.0
      %5084 = vmatpush1.msra.mxu0 0.0
      %5085 = vmatprep.subr.mxu0 0.0
      %5086 = vmatpush1.msra.mxu0 0.0
      %5087 = vmatprep.subr.mxu0 0.0
      %5088 = vmatpush1.msra.mxu0 0.0
      %5089 = vmatprep.subr.mxu0 0.0
      %5090 = vmatpush1.msra.mxu0 0.0
      %5091 = vmatprep.subr.mxu0 0.0
      %5092 = vmatpush1.msra.mxu0 0.0
      %5093 = vmatprep.subr.mxu0 0.0
      %5094 = vmatpush1.msra.mxu0 0.0
      %5095 = vmatprep.subr.mxu0 0.0
      %5096 = vmatpush1.msra.mxu0 0.0
      %5097 = vmatprep.subr.mxu0 0.0
      %5098 = vmatpush1.msra.mxu0 0.0
      %5099 = vmatprep.subr.mxu0 0.0
      %5100 = vmatpush1.msra.mxu0 0.0
      %5101 = vmatprep.subr.mxu0 0.0
      %5102 = vmatpush1.msra.mxu0 0.0
      %5103 = vmatprep.subr.mxu0 0.0
      %5104 = vmatpush1.msra.mxu0 0.0
      %5105 = vmatprep.subr.mxu0 0.0
      %5106 = vmatpush1.msra.mxu0 0.0
      %5107 = vmatprep.subr.mxu0 0.0
      %5108 = vmatpush1.msra.mxu0 0.0
      %5109 = vmatprep.subr.mxu0 0.0
      %5110 = vmatpush1.msra.mxu0 0.0
      %5111 = vmatprep.subr.mxu0 0.0
      %5112 = vmatpush1.msra.mxu0 0.0
      %5113 = vmatprep.subr.mxu0 0.0
      %5114 = vmatpush1.msra.mxu0 0.0
      %5115 = vmatprep.subr.mxu0 0.0
      %5116 = vmatpush1.msra.mxu0 0.0
      %5117 = vmatprep.subr.mxu0 0.0
      %5118 = vmatpush1.msra.mxu0 0.0
      %5119 = vmatprep.subr.mxu0 0.0
      %5120 = vmatpush1.msra.mxu0 0.0
      %5121 = vmatprep.subr.mxu0 0.0
      %5122 = vmatpush1.msra.mxu0 0.0
      %5123 = vmatprep.subr.mxu0 0.0
      %5124 = vmatpush1.msra.mxu0 0.0
      %5125 = vmatprep.subr.mxu0 0.0
      %5126 = vmatpush1.msra.mxu0 0.0
      %5127 = vmatprep.mubr.f32.mxu0 0.0
      %5128 = vmatmul.mubr.f32.gmra.mrb[0].mxu0 %v5052
      %v5129 = vpop.f32.mrb[0].mxu0
      %v5130 = vadd.f32 %v5049, %v5129
      %v5131 = vpop.f32.mrb[0].mxu0
      %5132 = vmatprep.mubr.f32.mxu0 0.0
      %5133 = vmatmul.mubr.f32.gmra.mrb[0].mxu0 %v5055
      %v5134 = vpop.f32.mrb[0].mxu0
      %v5135 = vadd.f32 %v5049, %v5134
      %v5136 = vpop.f32.mrb[0].mxu0
      %5137 = vmatprep.mubr.f32.mxu0 0.0
      %5138 = vmatmul.mubr.f32.gmra.mrb[0].mxu0 %v5058
      %v5139 = vpop.f32.mrb[0].mxu0
      %v5140 = vadd.f32 %v5049, %v5139
      %v5141 = vpop.f32.mrb[0].mxu0
      %5142 = vmatprep.mubr.f32.mxu0 0.0
      %5143 = vmatmul.mubr.f32.gmra.mrb[0].mxu0 %v5061
      %v5144 = vpop.f32.mrb[0].mxu0
      %v5145 = vadd.f32 %v5049, %v5144
      %v5146 = vpop.f32.mrb[0].mxu0
      %5147 = vdwg.mxu0
      %vm5148 = vcmp.ge.f32.partialorder %v5130, 0.0
      %vm5149 = vcmp.ge.f32.partialorder %v5135, 0.0
      %vm5150 = vcmp.ge.f32.partialorder %v5140, 0.0
      %vm5151 = vcmp.ge.f32.partialorder %v5145, 0.0
      %v5152 = vmul.f32 %v5130, 0.2
      %v5153 = vmul.f32 %v5135, 0.2
      %v5154 = vmul.f32 %v5140, 0.2
      %v5155 = vmul.f32 %v5145, 0.2
      %v5156 = vsel %vm5148, %v5130, %v5152
      %v5157 = vsel %vm5149, %v5135, %v5153
      %v5158 = vsel %vm5150, %v5140, %v5154
      %v5159 = vsel %vm5151, %v5145, %v5155
      %v5160 = vmul.f32 %v5156, 1.4142135
      %v5161 = vmul.f32 %v5157, 1.4142135
      %v5162 = vmul.f32 %v5158, 1.4142135
      %v5163 = vmul.f32 %v5159, 1.4142135
      %v5164 = vld [vmem:[%s13] sm:$0xff]
      %v5165 = vld [vmem:[%s13 + $0x8] sm:$0xff]
      %v5166 = vld [vmem:[%s13 + $0x10] sm:$0xff]
      %v5167 = vld [vmem:[%s13 + $0x18] sm:$0xff]
      %v5168 = vld [vmem:[%s13 + $0x20] sm:$0xff]
      %v5169 = vld [vmem:[%s13 + $0x28] sm:$0xff]
      %v5170 = vld [vmem:[%s13 + $0x30] sm:$0xff]
      %v5171 = vld [vmem:[%s13 + $0x38] sm:$0xff]
      %v5172 = vld [vmem:[%s13 + $0x40] sm:$0xff]
      %v5173 = vld [vmem:[%s13 + $0x48] sm:$0xff]
      %v5174 = vld [vmem:[%s13 + $0x50] sm:$0xff]
      %v5175 = vld [vmem:[%s13 + $0x58] sm:$0xff]
      %v5176 = vld [vmem:[%s13 + $0x60] sm:$0xff]
      %v5177 = vld [vmem:[%s13 + $0x68] sm:$0xff]
      %v5178 = vld [vmem:[%s13 + $0x70] sm:$0xff]
      %v5179 = vld [vmem:[%s13 + $0x78] sm:$0xff]
      %v5180 = vld [vmem:[%s14] sm:$0x1]
      %v5182 = vlaneseq
      %v5183 = vshrl.u32 %v5182, 7
      %v5184 = vsub.s32 0, %v5183
      %v5185 = vrot.slane %v5180, %v5184
      %5187 = vmatprep.subr.mxu0 0.0
      %5188 = vmatpush1.msra.mxu0 %v5164
      %5189 = vmatprep.subr.mxu0 0.0
      %5190 = vmatpush1.msra.mxu0 %v5165
      %5191 = vmatprep.subr.mxu0 0.0
      %5192 = vmatpush1.msra.mxu0 %v5166
      %5193 = vmatprep.subr.mxu0 0.0
      %5194 = vmatpush1.msra.mxu0 %v5167
      %5195 = vmatprep.subr.mxu0 0.0
      %5196 = vmatpush1.msra.mxu0 %v5168
      %5197 = vmatprep.subr.mxu0 0.0
      %5198 = vmatpush1.msra.mxu0 %v5169
      %5199 = vmatprep.subr.mxu0 0.0
      %5200 = vmatpush1.msra.mxu0 %v5170
      %5201 = vmatprep.subr.mxu0 0.0
      %5202 = vmatpush1.msra.mxu0 %v5171
      %5203 = vmatprep.subr.mxu0 0.0
      %5204 = vmatpush1.msra.mxu0 %v5172
      %5205 = vmatprep.subr.mxu0 0.0
      %5206 = vmatpush1.msra.mxu0 %v5173
      %5207 = vmatprep.subr.mxu0 0.0
      %5208 = vmatpush1.msra.mxu0 %v5174
      %5209 = vmatprep.subr.mxu0 0.0
      %5210 = vmatpush1.msra.mxu0 %v5175
      %5211 = vmatprep.subr.mxu0 0.0
      %5212 = vmatpush1.msra.mxu0 %v5176
      %5213 = vmatprep.subr.mxu0 0.0
      %5214 = vmatpush1.msra.mxu0 %v5177
      %5215 = vmatprep.subr.mxu0 0.0
      %5216 = vmatpush1.msra.mxu0 %v5178
      %5217 = vmatprep.subr.mxu0 0.0
      %5218 = vmatpush1.msra.mxu0 %v5179
      %5219 = vmatprep.subr.mxu0 0.0
      %5220 = vmatpush1.msra.mxu0 0.0
      %5221 = vmatprep.subr.mxu0 0.0
      %5222 = vmatpush1.msra.mxu0 0.0
      %5223 = vmatprep.subr.mxu0 0.0
      %5224 = vmatpush1.msra.mxu0 0.0
      %5225 = vmatprep.subr.mxu0 0.0
      %5226 = vmatpush1.msra.mxu0 0.0
      %5227 = vmatprep.subr.mxu0 0.0
      %5228 = vmatpush1.msra.mxu0 0.0
      %5229 = vmatprep.subr.mxu0 0.0
      %5230 = vmatpush1.msra.mxu0 0.0
      %5231 = vmatprep.subr.mxu0 0.0
      %5232 = vmatpush1.msra.mxu0 0.0
      %5233 = vmatprep.subr.mxu0 0.0
      %5234 = vmatpush1.msra.mxu0 0.0
      %5235 = vmatprep.subr.mxu0 0.0
      %5236 = vmatpush1.msra.mxu0 0.0
      %5237 = vmatprep.subr.mxu0 0.0
      %5238 = vmatpush1.msra.mxu0 0.0
      %5239 = vmatprep.subr.mxu0 0.0
      %5240 = vmatpush1.msra.mxu0 0.0
      %5241 = vmatprep.subr.mxu0 0.0
      %5242 = vmatpush1.msra.mxu0 0.0
      %5243 = vmatprep.subr.mxu0 0.0
      %5244 = vmatpush1.msra.mxu0 0.0
      %5245 = vmatprep.subr.mxu0 0.0
      %5246 = vmatpush1.msra.mxu0 0.0
      %5247 = vmatprep.subr.mxu0 0.0
      %5248 = vmatpush1.msra.mxu0 0.0
      %5249 = vmatprep.subr.mxu0 0.0
      %5250 = vmatpush1.msra.mxu0 0.0
      %5251 = vmatprep.mubr.f32.mxu0 0.0
      %5252 = vmatmul.mubr.f32.gmra.mrb[0].mxu0 %v5160
      %v5253 = vpop.f32.mrb[0].mxu0
      %v5254 = vadd.f32 %v5185, %v5253
      %v5255 = vpop.f32.mrb[0].mxu0
      %5256 = vmatprep.mubr.f32.mxu0 0.0
      %5257 = vmatmul.mubr.f32.gmra.mrb[0].mxu0 %v5161
      %v5258 = vpop.f32.mrb[0].mxu0
      %v5259 = vadd.f32 %v5185, %v5258
      %v5260 = vpop.f32.mrb[0].mxu0
      %5261 = vmatprep.mubr.f32.mxu0 0.0
      %5262 = vmatmul.mubr.f32.gmra.mrb[0].mxu0 %v5162
      %v5263 = vpop.f32.mrb[0].mxu0
      %v5264 = vadd.f32 %v5185, %v5263
      %v5265 = vpop.f32.mrb[0].mxu0
      %5266 = vmatprep.mubr.f32.mxu0 0.0
      %5267 = vmatmul.mubr.f32.gmra.mrb[0].mxu0 %v5163
      %v5268 = vpop.f32.mrb[0].mxu0
      %v5269 = vadd.f32 %v5185, %v5268
      %v5270 = vpop.f32.mrb[0].mxu0
      %5271 = vdwg.mxu0
      %5272 = vst.msk [vmem:[%s557] sm:$0xff] %vm567, %v5254
      %5273 = vst.msk [vmem:[%s557 + $0x8] sm:$0xff] %vm567, %v5259
      %5274 = vst.msk [vmem:[%s557 + $0x10] sm:$0xff] %vm567, %v5264
      %5275 = vst.msk [vmem:[%s557 + $0x18] sm:$0xff] %vm567, %v5269
      %s5276 = smul.u32 4, %s31
      %p5277 = scmp.lt.s32.totalorder %s30, 1
      %s5278 = scalar_select %p5277, %s30, 1
      %p5279 = scmp.lt.s32.totalorder %s5276, 7
      %s5280 = scalar_select %p5279, %s5276, 7
      %s5281 = smul.addr %s5278, 8
      %s5282 = sadd.s32 %s5280, %s5281
      %s5283 = smul.addr %s5282, 8
      %s5284 = scalar_lea.vmem %s15, %s5283
      // Predicated region
      $region81: #{tpu_custom_call.1} parent=79 // pred_check
        %p5285 = pneg %p385
      $region82: #{tpu_custom_call.1} parent=79 // pred_check_branch
        %5287 = sbr.rel (%p5285) target = $region84
      $region83: #{tpu_custom_call.1} parent=79 // pred_region
        %s5288 = smul.u32 4, %s31
      $region84: #{tpu_custom_call.1} parent=79 // pred_fallthru
        _
    $region80: #{tpu_custom_call.1} parent=5 // pred_fallthru
      _
    %p5289 = scmp.le.s32.totalorder 2, %s21
    // Predicated region
    $region85: #{tpu_custom_call.1} parent=5 // pred_check
      %p5290 = pneg %p5289
    $region86: #{tpu_custom_call.1} parent=5 // pred_check_branch
      %5292 = sbr.rel (%p5290) target = $region88
    $region87: #{tpu_custom_call.1} parent=5 // pred_region
      %s5293 = ssub.s32 %s21, 2
      // Predicated region
      $region89: #{tpu_custom_call.1} parent=87 // pred_check
        %p5294 = pneg %p391
      $region90: #{tpu_custom_call.1} parent=87 // pred_check_branch
        %5296 = sbr.rel (%p5294) target = $region92
      $region91: #{tpu_custom_call.1} parent=87 // pred_region
        %s5297 = smul.u32 4, %s33
        %p5298 = scmp.lt.s32.totalorder %s32, 1
        %s5299 = scalar_select %p5298, %s32, 1
        %p5300 = scmp.lt.s32.totalorder %s5297, 7
        %s5301 = scalar_select %p5300, %s5297, 7
        %s5302 = smul.addr %s5299, 8
        %s5303 = sadd.s32 %s5301, %s5302
        %s5304 = smul.addr %s5303, 8
        %s5305 = scalar_lea.vmem %s15, %s5304
      $region92: #{tpu_custom_call.1} parent=87 // pred_fallthru
        _
    $region88: #{tpu_custom_call.1} parent=5 // pred_fallthru
      _
  $region6: #{tpu_custom_call.1} parent=0 // loop_footer
    %s25 = sadd.s32 1, %s21
  $region7: #{tpu_custom_call.1} parent=0 // loop_footer_branch
    %20 = sbr.rel target = $region3
  $region8: #{tpu_custom_call.1} parent=0 // loop_exit
    _

</llo_original>
